<compile_context>
chip_gen: v7x
topology: tpu7x:2x2x1
jax: 0.10.0
libtpu: 0.0.40
codegen_flags: <defaults>
</compile_context>

<pallas_src>
import jax
import jax.numpy as jnp
from jax.experimental import pallas as pl
from jax.experimental.pallas import tpu as pltpu

C_IN = 16
L_IN = 49
CONV1_K = 30
CONV2_K = 20
C1_OUT = 49
L1 = L_IN - CONV1_K + 1          # 20 (conv1 output length; conv2 reduces it to 1)
X_F = C_IN * L_IN                # 784 compact input features per sample
H_F = L1 * C1_OUT                # 980 conv1 output features per sample


def _kernel(x_ref, w1_ref, w2_ref, w3_ref, w5_ref, b5_ref, w7_ref, b7_ref,
            out_ref):
    # conv1 (Toeplitz matmul) + tanh: (980, 784) @ (784, BT) -> (980, BT).
    # Batch sits on lanes, so the tanh and all intermediates are lane-dense.
    h1 = jnp.tanh(jnp.dot(w1_ref[...], x_ref[...],
                          preferred_element_type=jnp.float32))
    # conv2 with all 20 taps fused into one matmul: (10, 980) @ (980, BT).
    v = jnp.dot(w2_ref[...], h1, preferred_element_type=jnp.float32)
    # Linear 10 -> 60 (no bias) + tanh.
    v = jnp.tanh(jnp.dot(w3_ref[...], v, preferred_element_type=jnp.float32))
    # Linear 60 -> 41 (+bias) + tanh.
    v = jnp.tanh(jnp.dot(w5_ref[...], v, preferred_element_type=jnp.float32)
                 + b5_ref[...])
    # Linear 41 -> 10 (+bias).
    v = jnp.dot(w7_ref[...], v, preferred_element_type=jnp.float32) + b7_ref[...]

    # LogSoftmax over the class axis (sublanes); lane-dense (10, BT) store.
    m = jnp.max(v, axis=0, keepdims=True)
    s = v - m
    lse = jnp.log(jnp.sum(jnp.exp(s), axis=0, keepdims=True))
    out_ref[...] = s - lse


def _round_up(n, m):
    return ((n + m - 1) // m) * m


def _toeplitz_conv1_weight(w0):
    """Zero-padded banded conv1 weight: W[c*49+p, t*49+o] = w0[o, c, p-t]."""
    w0_cko = jnp.transpose(w0, (1, 2, 0)).astype(jnp.float32)    # (16, 30, 49)
    W = jnp.zeros((C_IN, L_IN, L1, C1_OUT), jnp.float32)
    for t in range(L1):
        W = W.at[:, t:t + CONV1_K, t, :].set(w0_cko)
    return W.reshape(X_F, H_F)                                   # (784, 980)


def conv1d_then_linear(x, params, block_b=256):
    """x: any shape with 16*49 elements per batch row (e.g. (B, 1, 28, 28))."""
    w0, w2, w3, w5, b5, w7, b7 = params
    B = x.shape[0]

    # Lane-aligned batch tile; prefer >= 2 grid tiles so ("parallel",) can
    # shard across both v7x TensorCores when the batch allows it.
    BT = min(block_b, _round_up(B, 128))
    if BT > 128 and pl.cdiv(B, BT) == 1:
        BT = max(128, _round_up(pl.cdiv(B, 2), 128))
    num_tiles = pl.cdiv(B, BT)
    B_pad = num_tiles * BT

    # Compact feature-major input: column index = c*49 + p, batch on lanes.
    xf = x.reshape(B, X_F).astype(jnp.float32)
    if B_pad != B:
        xf = jnp.pad(xf, ((0, B_pad - B), (0, 0)))
    x_t = xf.T                                                   # (784, B_pad)

    # Weights (built once per call, all stay resident in VMEM across steps).
    w1 = _toeplitz_conv1_weight(w0).T                            # (980, 784)
    w2f = jnp.transpose(w2, (0, 2, 1)).reshape(10, H_F).astype(jnp.float32)
    w3f = w3.astype(jnp.float32)                                 # (60, 10)
    w5f = w5.astype(jnp.float32)                                 # (41, 60)
    w7f = w7.astype(jnp.float32)                                 # (10, 41)
    b5r = b5.reshape(41, 1).astype(jnp.float32)
    b7r = b7.reshape(10, 1).astype(jnp.float32)

    out = pl.pallas_call(
        _kernel,
        out_shape=jax.ShapeDtypeStruct((10, B_pad), jnp.float32),
        grid=(num_tiles,),
        in_specs=[
            pl.BlockSpec((X_F, BT), lambda i: (0, i)),           # x tile (784, BT)
            pl.BlockSpec((H_F, X_F), lambda i: (0, 0)),          # conv1 Toeplitz.T
            pl.BlockSpec((10, H_F), lambda i: (0, 0)),           # conv2 (fused taps)
            pl.BlockSpec((60, 10), lambda i: (0, 0)),            # f3 weight
            pl.BlockSpec((41, 60), lambda i: (0, 0)),            # f5 weight
            pl.BlockSpec((41, 1), lambda i: (0, 0)),             # f5 bias
            pl.BlockSpec((10, 41), lambda i: (0, 0)),            # f7 weight
            pl.BlockSpec((10, 1), lambda i: (0, 0)),             # f7 bias
        ],
        out_specs=pl.BlockSpec((10, BT), lambda i: (0, i)),      # lane-dense store
        compiler_params=pltpu.CompilerParams(
            dimension_semantics=("parallel",),
            vmem_limit_bytes=32 * 1024 * 1024),
    )(x_t, w1, w2f, w3f, w5f, b5r, w7f, b7r)

    return out.T[:B]                                             # (B, 10)


def reference(x, params):
    """Pure-JAX reference of the PyTorch forward pass."""
    w0, w2, w3, w5, b5, w7, b7 = params
    B = x.shape[0]
    x = x.reshape(B, C_IN, L_IN).astype(jnp.float32)
    h = jnp.stack(
        [jnp.einsum('bck,ock->bo', x[:, :, t:t + CONV1_K], w0)
         for t in range(L1)], axis=-1)            # (B, 49, 20)
    h = jnp.tanh(h)
    v = jnp.einsum('bot,jot->bj', h, w2)          # (B, 10)
    v = jnp.tanh(v @ w3.T)
    v = jnp.tanh(v @ w5.T + b5)
    v = v @ w7.T + b7
    return jax.nn.log_softmax(v, axis=1)


if __name__ == "__main__":
    key = jax.random.PRNGKey(0)
    ks = jax.random.split(key, 8)

    def uni(k, shape, fan_in):
        bound = 1.0 / (fan_in ** 0.5)
        return jax.random.uniform(k, shape, jnp.float32, -bound, bound)

    # Deterministic, PyTorch-default-style uniform init (synthetic weights).
    w0 = uni(ks[0], (49, 16, 30), 16 * 30)   # Conv1d f0 weight
    w2 = uni(ks[1], (10, 49, 20), 49 * 20)   # Conv1d f2 weight
    w3 = uni(ks[2], (60, 10), 10)            # Linear f3 weight
    w5 = uni(ks[3], (41, 60), 60)            # Linear f5 weight
    b5 = uni(ks[4], (41,), 60)               # Linear f5 bias
    w7 = uni(ks[5], (10, 41), 41)            # Linear f7 weight
    b7 = uni(ks[6], (10,), 41)               # Linear f7 bias
    params = (w0, w2, w3, w5, b5, w7, b7)

    x = jax.random.normal(ks[7], (2, 1, 28, 28), jnp.float32)

    out = conv1d_then_linear(x, params)
    out = jax.block_until_ready(out)
    ref = reference(x, params)

    assert out.shape == (2, 10)
    assert jnp.allclose(out, ref, atol=3e-4, rtol=3e-4), \
        float(jnp.max(jnp.abs(out - ref)))
    print("KERNEL_OK")
</pallas_src>

<mosaic_0001>
module attributes {stable_mosaic.version = 11 : i64} {
  func.func @_kernel(%arg0: i32, %arg1: memref<784x128xf32, #tpu.memory_space<vmem>>, %arg2: memref<980x784xf32, #tpu.memory_space<vmem>>, %arg3: memref<10x980xf32, #tpu.memory_space<vmem>>, %arg4: memref<60x10xf32, #tpu.memory_space<vmem>>, %arg5: memref<41x60xf32, #tpu.memory_space<vmem>>, %arg6: memref<41x1xf32, #tpu.memory_space<vmem>>, %arg7: memref<10x41xf32, #tpu.memory_space<vmem>>, %arg8: memref<10x1xf32, #tpu.memory_space<vmem>>, %arg9: memref<10x128xf32, #tpu.memory_space<vmem>>) attributes {dimension_semantics = [#tpu.dimension_semantics<parallel>], iteration_bounds = array<i64: 1>, scalar_prefetch = 0 : i64, scratch_operands = 0 : i64, tpu.core_type = #tpu.core_type<tc>, window_params = [{transform_indices = @transform_0, window_bounds = array<i64: 784, 128>}, {pipeline_mode = #tpu.pipeline_mode<synchronous>, transform_indices = @transform_1, window_bounds = array<i64: 980, 784>}, {pipeline_mode = #tpu.pipeline_mode<synchronous>, transform_indices = @transform_2, window_bounds = array<i64: 10, 980>}, {pipeline_mode = #tpu.pipeline_mode<synchronous>, transform_indices = @transform_3, window_bounds = array<i64: 60, 10>}, {pipeline_mode = #tpu.pipeline_mode<synchronous>, transform_indices = @transform_4, window_bounds = array<i64: 41, 60>}, {pipeline_mode = #tpu.pipeline_mode<synchronous>, transform_indices = @transform_5, window_bounds = array<i64: 41, 1>}, {pipeline_mode = #tpu.pipeline_mode<synchronous>, transform_indices = @transform_6, window_bounds = array<i64: 10, 41>}, {pipeline_mode = #tpu.pipeline_mode<synchronous>, transform_indices = @transform_7, window_bounds = array<i64: 10, 1>}, {transform_indices = @transform_8, window_bounds = array<i64: 10, 128>}]} {
    %c0 = arith.constant 0 : index
    %c0_0 = arith.constant 0 : index
    %0 = vector.load %arg2[%c0, %c0_0] : memref<980x784xf32, #tpu.memory_space<vmem>>, vector<980x784xf32>
    %c0_1 = arith.constant 0 : index
    %c0_2 = arith.constant 0 : index
    %1 = vector.load %arg1[%c0_1, %c0_2] : memref<784x128xf32, #tpu.memory_space<vmem>>, vector<784x128xf32>
    %cst = arith.constant dense<0.000000e+00> : vector<980x128xf32>
    %2 = tpu.matmul %0, %1, %cst {dimension_numbers = #tpu.dot_dimension_numbers<[1], [0], [0], [1], [0, 0, 1, 1], [], []>} : vector<980x784xf32>, vector<784x128xf32>, vector<980x128xf32> -> vector<980x128xf32>
    %3 = math.tanh %2 : vector<980x128xf32>
    %c0_3 = arith.constant 0 : index
    %c0_4 = arith.constant 0 : index
    %4 = vector.load %arg3[%c0_3, %c0_4] : memref<10x980xf32, #tpu.memory_space<vmem>>, vector<10x980xf32>
    %cst_5 = arith.constant dense<0.000000e+00> : vector<10x128xf32>
    %5 = tpu.matmul %4, %3, %cst_5 {dimension_numbers = #tpu.dot_dimension_numbers<[1], [0], [0], [1], [0, 0, 1, 1], [], []>} : vector<10x980xf32>, vector<980x128xf32>, vector<10x128xf32> -> vector<10x128xf32>
    %c0_6 = arith.constant 0 : index
    %c0_7 = arith.constant 0 : index
    %6 = vector.load %arg4[%c0_6, %c0_7] : memref<60x10xf32, #tpu.memory_space<vmem>>, vector<60x10xf32>
    %cst_8 = arith.constant dense<0.000000e+00> : vector<60x128xf32>
    %7 = tpu.matmul %6, %5, %cst_8 {dimension_numbers = #tpu.dot_dimension_numbers<[1], [0], [0], [1], [0, 0, 1, 1], [], []>} : vector<60x10xf32>, vector<10x128xf32>, vector<60x128xf32> -> vector<60x128xf32>
    %8 = math.tanh %7 : vector<60x128xf32>
    %c0_9 = arith.constant 0 : index
    %c0_10 = arith.constant 0 : index
    %9 = vector.load %arg5[%c0_9, %c0_10] : memref<41x60xf32, #tpu.memory_space<vmem>>, vector<41x60xf32>
    %cst_11 = arith.constant dense<0.000000e+00> : vector<41x128xf32>
    %10 = tpu.matmul %9, %8, %cst_11 {dimension_numbers = #tpu.dot_dimension_numbers<[1], [0], [0], [1], [0, 0, 1, 1], [], []>} : vector<41x60xf32>, vector<60x128xf32>, vector<41x128xf32> -> vector<41x128xf32>
    %c0_12 = arith.constant 0 : index
    %c0_13 = arith.constant 0 : index
    %11 = vector.load %arg6[%c0_12, %c0_13] : memref<41x1xf32, #tpu.memory_space<vmem>>, vector<41x1xf32>
    %12 = vector.broadcast %11 : vector<41x1xf32> to vector<41x128xf32>
    %13 = arith.addf %10, %12 : vector<41x128xf32>
    %14 = math.tanh %13 : vector<41x128xf32>
    %c0_14 = arith.constant 0 : index
    %c0_15 = arith.constant 0 : index
    %15 = vector.load %arg7[%c0_14, %c0_15] : memref<10x41xf32, #tpu.memory_space<vmem>>, vector<10x41xf32>
    %cst_16 = arith.constant dense<0.000000e+00> : vector<10x128xf32>
    %16 = tpu.matmul %15, %14, %cst_16 {dimension_numbers = #tpu.dot_dimension_numbers<[1], [0], [0], [1], [0, 0, 1, 1], [], []>} : vector<10x41xf32>, vector<41x128xf32>, vector<10x128xf32> -> vector<10x128xf32>
    %c0_17 = arith.constant 0 : index
    %c0_18 = arith.constant 0 : index
    %17 = vector.load %arg8[%c0_17, %c0_18] : memref<10x1xf32, #tpu.memory_space<vmem>>, vector<10x1xf32>
    %18 = vector.broadcast %17 : vector<10x1xf32> to vector<10x128xf32>
    %19 = arith.addf %16, %18 : vector<10x128xf32>
    %cst_19 = arith.constant dense<0xFF800000> : vector<128xf32>
    %20 = vector.multi_reduction <maximumf>, %19, %cst_19 [0] : vector<10x128xf32> to vector<128xf32>
    %21 = vector.shape_cast %20 : vector<128xf32> to vector<1x128xf32>
    %22 = vector.broadcast %21 : vector<1x128xf32> to vector<10x128xf32>
    %23 = arith.subf %19, %22 : vector<10x128xf32>
    %24 = math.exp %23 : vector<10x128xf32>
    %cst_20 = arith.constant dense<0.000000e+00> : vector<128xf32>
    %25 = vector.multi_reduction <add>, %24, %cst_20 [0] : vector<10x128xf32> to vector<128xf32>
    %26 = vector.shape_cast %25 : vector<128xf32> to vector<1x128xf32>
    %27 = math.log %26 : vector<1x128xf32>
    %28 = vector.broadcast %27 : vector<1x128xf32> to vector<10x128xf32>
    %29 = arith.subf %23, %28 : vector<10x128xf32>
    %c0_21 = arith.constant 0 : index
    %c0_22 = arith.constant 0 : index
    %30 = vector.load %arg9[%c0_21, %c0_22] : memref<10x128xf32, #tpu.memory_space<vmem>>, vector<10x128xf32>
    tpu.vector_store %arg9[%c0_21, %c0_22], %29 {strides = array<i32>} : memref<10x128xf32, #tpu.memory_space<vmem>>, vector<10x128xf32>,
    return
  }
  func.func @transform_0(%arg0: i32) -> (i32, i32) {
    %c0_i32 = arith.constant 0 : i32
    %c0_i32_0 = arith.constant 0 : i32
    return %c0_i32, %arg0 : i32, i32
  }
  func.func @transform_1(%arg0: i32) -> (i32, i32) {
    %c0_i32 = arith.constant 0 : i32
    %c0_i32_0 = arith.constant 0 : i32
    %c0_i32_1 = arith.constant 0 : i32
    return %c0_i32, %c0_i32_0 : i32, i32
  }
  func.func @transform_2(%arg0: i32) -> (i32, i32) {
    %c0_i32 = arith.constant 0 : i32
    %c0_i32_0 = arith.constant 0 : i32
    %c0_i32_1 = arith.constant 0 : i32
    return %c0_i32, %c0_i32_0 : i32, i32
  }
  func.func @transform_3(%arg0: i32) -> (i32, i32) {
    %c0_i32 = arith.constant 0 : i32
    %c0_i32_0 = arith.constant 0 : i32
    %c0_i32_1 = arith.constant 0 : i32
    return %c0_i32, %c0_i32_0 : i32, i32
  }
  func.func @transform_4(%arg0: i32) -> (i32, i32) {
    %c0_i32 = arith.constant 0 : i32
    %c0_i32_0 = arith.constant 0 : i32
    %c0_i32_1 = arith.constant 0 : i32
    return %c0_i32, %c0_i32_0 : i32, i32
  }
  func.func @transform_5(%arg0: i32) -> (i32, i32) {
    %c0_i32 = arith.constant 0 : i32
    %c0_i32_0 = arith.constant 0 : i32
    %c0_i32_1 = arith.constant 0 : i32
    return %c0_i32, %c0_i32_0 : i32, i32
  }
  func.func @transform_6(%arg0: i32) -> (i32, i32) {
    %c0_i32 = arith.constant 0 : i32
    %c0_i32_0 = arith.constant 0 : i32
    %c0_i32_1 = arith.constant 0 : i32
    return %c0_i32, %c0_i32_0 : i32, i32
  }
  func.func @transform_7(%arg0: i32) -> (i32, i32) {
    %c0_i32 = arith.constant 0 : i32
    %c0_i32_0 = arith.constant 0 : i32
    %c0_i32_1 = arith.constant 0 : i32
    return %c0_i32, %c0_i32_0 : i32, i32
  }
  func.func @transform_8(%arg0: i32) -> (i32, i32) {
    %c0_i32 = arith.constant 0 : i32
    %c0_i32_0 = arith.constant 0 : i32
    return %c0_i32, %arg0 : i32, i32
  }
}

</mosaic_0001>

<llo_original>
// kernel: tpu_custom_call.1
$region0: #{tpu_custom_call.1}
  #allocation0 [shape = 'u32[]', space=smem, size = 0x4, offset = 0x4, fixed_abs, tag = 'smem constant byte address 0x4 - core index']
  #allocation1 [shape = 'u32[144,128]{1,0:T(1,128)}', space=vmem, size = 0x12000, scoped, tag = 'internal scratch']
  %s0 = inlined_call_operand.vmem [shape: f32[784,128], index: 0, kind: input, shape index: {}]
  %s1 = inlined_call_operand.vmem [shape: f32[980,784], index: 1, kind: input, shape index: {}]
  %s2 = inlined_call_operand.vmem [shape: f32[10,980], index: 2, kind: input, shape index: {}]
  %s3 = inlined_call_operand.vmem [shape: f32[60,10], index: 3, kind: input, shape index: {}]
  %s4 = inlined_call_operand.vmem [shape: f32[41,60], index: 4, kind: input, shape index: {}]
  %s5 = inlined_call_operand.vmem [shape: f32[41,1], index: 5, kind: input, shape index: {}]
  %s6 = inlined_call_operand.vmem [shape: f32[10,41], index: 6, kind: input, shape index: {}]
  %s7 = inlined_call_operand.vmem [shape: f32[10,1], index: 7, kind: input, shape index: {}]
  %s8 = inlined_call_operand.hbm [shape: f32[10,128], index: 8, kind: output, shape index: {}]
  %s9 = sld [smem:[#allocation0]]
  $region42: #{tpu_custom_call.1} parent=0
    _
  %s11 = ssub.s32 1, %s9
  %s12 = scalar_select 0, %s11, %s9
  $region1: #{tpu_custom_call.1} parent=0
    #allocation2 [shape = 'u8[8192]{0}', space=vmem, size = 0x2000, scoped, tag = 'output window, operand 0, single buffered']
    #allocation3 [shape = 's32[1]{0}', space=sflag, size = 0x4, scoped, tag = 'scoped memory for tpu_custom_call.1']
    %13 = vsyncpa [#allocation3], 0
    // Predicated region
    $region2: #{tpu_custom_call.1} parent=1 // pred_check
      _
    $region3: #{tpu_custom_call.1} parent=1 // pred_check_branch
      %15 = sbr.rel (0) target = $region5
    $region4: #{tpu_custom_call.1} parent=1 // pred_region
      _
    $region5: #{tpu_custom_call.1} parent=1 // pred_fallthru
      _
    // Predicated region
    $region6: #{tpu_custom_call.1} parent=1 // pred_check
      _
    $region7: #{tpu_custom_call.1} parent=1 // pred_check_branch
      %17 = sbr.rel (0) target = $region9
    $region8: #{tpu_custom_call.1} parent=1 // pred_region
      _
    $region9: #{tpu_custom_call.1} parent=1 // pred_fallthru
      _
    // Predicated region
    $region10: #{tpu_custom_call.1} parent=1 // pred_check
      _
    $region11: #{tpu_custom_call.1} parent=1 // pred_check_branch
      %19 = sbr.rel (0) target = $region13
    $region12: #{tpu_custom_call.1} parent=1 // pred_region
      _
    $region13: #{tpu_custom_call.1} parent=1 // pred_fallthru
      _
    // Predicated region
    $region14: #{tpu_custom_call.1} parent=1 // pred_check
      _
    $region15: #{tpu_custom_call.1} parent=1 // pred_check_branch
      %21 = sbr.rel (0) target = $region17
    $region16: #{tpu_custom_call.1} parent=1 // pred_region
      _
    $region17: #{tpu_custom_call.1} parent=1 // pred_fallthru
      _
    // Predicated region
    $region18: #{tpu_custom_call.1} parent=1 // pred_check
      _
    $region19: #{tpu_custom_call.1} parent=1 // pred_check_branch
      %23 = sbr.rel (0) target = $region21
    $region20: #{tpu_custom_call.1} parent=1 // pred_region
      _
    $region21: #{tpu_custom_call.1} parent=1 // pred_fallthru
      _
    // Predicated region
    $region22: #{tpu_custom_call.1} parent=1 // pred_check
      _
    $region23: #{tpu_custom_call.1} parent=1 // pred_check_branch
      %25 = sbr.rel (0) target = $region25
    $region24: #{tpu_custom_call.1} parent=1 // pred_region
      _
    $region25: #{tpu_custom_call.1} parent=1 // pred_fallthru
      _
    // Predicated region
    $region26: #{tpu_custom_call.1} parent=1 // pred_check
      _
    $region27: #{tpu_custom_call.1} parent=1 // pred_check_branch
      %27 = sbr.rel (0) target = $region29
    $region28: #{tpu_custom_call.1} parent=1 // pred_region
      _
    $region29: #{tpu_custom_call.1} parent=1 // pred_fallthru
      _
    // Predicated region
    $region30: #{tpu_custom_call.1} parent=1 // pred_check
      _
    $region31: #{tpu_custom_call.1} parent=1 // pred_check_branch
      %29 = sbr.rel (0) target = $region33
    $region32: #{tpu_custom_call.1} parent=1 // pred_region
      _
    $region33: #{tpu_custom_call.1} parent=1 // pred_fallthru
      _
    %v30 = vld [vmem:[%s1] sm:$0xff]
    %v31 = vld [vmem:[%s1 + $0x8] sm:$0xff]
    %v32 = vld [vmem:[%s1 + $0x10] sm:$0xff]
    %v33 = vld [vmem:[%s1 + $0x18] sm:$0xff]
    %v34 = vld [vmem:[%s1 + $0x20] sm:$0xff]
    %v35 = vld [vmem:[%s1 + $0x28] sm:$0xff]
    %v36 = vld [vmem:[%s1 + $0x30] sm:$0xff]
    %v37 = vld [vmem:[%s1 + $0x38] sm:$0xff]
    %v38 = vld [vmem:[%s1 + $0x40] sm:$0xff]
    %v39 = vld [vmem:[%s1 + $0x48] sm:$0xff]
    %v40 = vld [vmem:[%s1 + $0x50] sm:$0xff]
    %v41 = vld [vmem:[%s1 + $0x58] sm:$0xff]
    %v42 = vld [vmem:[%s1 + $0x60] sm:$0xff]
    %v43 = vld [vmem:[%s1 + $0x68] sm:$0xff]
    %v44 = vld [vmem:[%s1 + $0x70] sm:$0xff]
    %v45 = vld [vmem:[%s1 + $0x78] sm:$0xff]
    %v46 = vld [vmem:[%s1 + $0x80] sm:$0xff]
    %v47 = vld [vmem:[%s1 + $0x88] sm:$0xff]
    %v48 = vld [vmem:[%s1 + $0x90] sm:$0xff]
    %v49 = vld [vmem:[%s1 + $0x98] sm:$0xff]
    %v50 = vld [vmem:[%s1 + $0xa0] sm:$0xff]
    %v51 = vld [vmem:[%s1 + $0xa8] sm:$0xff]
    %v52 = vld [vmem:[%s1 + $0xb0] sm:$0xff]
    %v53 = vld [vmem:[%s1 + $0xb8] sm:$0xff]
    %v54 = vld [vmem:[%s1 + $0xc0] sm:$0xff]
    %v55 = vld [vmem:[%s1 + $0xc8] sm:$0xff]
    %v56 = vld [vmem:[%s1 + $0xd0] sm:$0xff]
    %v57 = vld [vmem:[%s1 + $0xd8] sm:$0xff]
    %v58 = vld [vmem:[%s1 + $0xe0] sm:$0xff]
    %v59 = vld [vmem:[%s1 + $0xe8] sm:$0xff]
    %v60 = vld [vmem:[%s1 + $0xf0] sm:$0xff]
    %v61 = vld [vmem:[%s1 + $0xf8] sm:$0xff]
    %v62 = vld [vmem:[%s1 + $0x100] sm:$0xff]
    %v63 = vld [vmem:[%s1 + $0x108] sm:$0xff]
    %v64 = vld [vmem:[%s1 + $0x110] sm:$0xff]
    %v65 = vld [vmem:[%s1 + $0x118] sm:$0xff]
    %v66 = vld [vmem:[%s1 + $0x120] sm:$0xff]
    %v67 = vld [vmem:[%s1 + $0x128] sm:$0xff]
    %v68 = vld [vmem:[%s1 + $0x130] sm:$0xff]
    %v69 = vld [vmem:[%s1 + $0x138] sm:$0xff]
    %v70 = vld [vmem:[%s1 + $0x140] sm:$0xff]
    %v71 = vld [vmem:[%s1 + $0x148] sm:$0xff]
    %v72 = vld [vmem:[%s1 + $0x150] sm:$0xff]
    %v73 = vld [vmem:[%s1 + $0x158] sm:$0xff]
    %v74 = vld [vmem:[%s1 + $0x160] sm:$0xff]
    %v75 = vld [vmem:[%s1 + $0x168] sm:$0xff]
    %v76 = vld [vmem:[%s1 + $0x170] sm:$0xff]
    %v77 = vld [vmem:[%s1 + $0x178] sm:$0xff]
    %v78 = vld [vmem:[%s1 + $0x180] sm:$0xff]
    %v79 = vld [vmem:[%s1 + $0x188] sm:$0xff]
    %v80 = vld [vmem:[%s1 + $0x190] sm:$0xff]
    %v81 = vld [vmem:[%s1 + $0x198] sm:$0xff]
    %v82 = vld [vmem:[%s1 + $0x1a0] sm:$0xff]
    %v83 = vld [vmem:[%s1 + $0x1a8] sm:$0xff]
    %v84 = vld [vmem:[%s1 + $0x1b0] sm:$0xff]
    %v85 = vld [vmem:[%s1 + $0x1b8] sm:$0xff]
    %v86 = vld [vmem:[%s1 + $0x1c0] sm:$0xff]
    %v87 = vld [vmem:[%s1 + $0x1c8] sm:$0xff]
    %v88 = vld [vmem:[%s1 + $0x1d0] sm:$0xff]
    %v89 = vld [vmem:[%s1 + $0x1d8] sm:$0xff]
    %v90 = vld [vmem:[%s1 + $0x1e0] sm:$0xff]
    %v91 = vld [vmem:[%s1 + $0x1e8] sm:$0xff]
    %v92 = vld [vmem:[%s1 + $0x1f0] sm:$0xff]
    %v93 = vld [vmem:[%s1 + $0x1f8] sm:$0xff]
    %v94 = vld [vmem:[%s1 + $0x200] sm:$0xff]
    %v95 = vld [vmem:[%s1 + $0x208] sm:$0xff]
    %v96 = vld [vmem:[%s1 + $0x210] sm:$0xff]
    %v97 = vld [vmem:[%s1 + $0x218] sm:$0xff]
    %v98 = vld [vmem:[%s1 + $0x220] sm:$0xff]
    %v99 = vld [vmem:[%s1 + $0x228] sm:$0xff]
    %v100 = vld [vmem:[%s1 + $0x230] sm:$0xff]
    %v101 = vld [vmem:[%s1 + $0x238] sm:$0xff]
    %v102 = vld [vmem:[%s1 + $0x240] sm:$0xff]
    %v103 = vld [vmem:[%s1 + $0x248] sm:$0xff]
    %v104 = vld [vmem:[%s1 + $0x250] sm:$0xff]
    %v105 = vld [vmem:[%s1 + $0x258] sm:$0xff]
    %v106 = vld [vmem:[%s1 + $0x260] sm:$0xff]
    %v107 = vld [vmem:[%s1 + $0x268] sm:$0xff]
    %v108 = vld [vmem:[%s1 + $0x270] sm:$0xff]
    %v109 = vld [vmem:[%s1 + $0x278] sm:$0xff]
    %v110 = vld [vmem:[%s1 + $0x280] sm:$0xff]
    %v111 = vld [vmem:[%s1 + $0x288] sm:$0xff]
    %v112 = vld [vmem:[%s1 + $0x290] sm:$0xff]
    %v113 = vld [vmem:[%s1 + $0x298] sm:$0xff]
    %v114 = vld [vmem:[%s1 + $0x2a0] sm:$0xff]
    %v115 = vld [vmem:[%s1 + $0x2a8] sm:$0xff]
    %v116 = vld [vmem:[%s1 + $0x2b0] sm:$0xff]
    %v117 = vld [vmem:[%s1 + $0x2b8] sm:$0xff]
    %v118 = vld [vmem:[%s1 + $0x2c0] sm:$0xff]
    %v119 = vld [vmem:[%s1 + $0x2c8] sm:$0xff]
    %v120 = vld [vmem:[%s1 + $0x2d0] sm:$0xff]
    %v121 = vld [vmem:[%s1 + $0x2d8] sm:$0xff]
    %v122 = vld [vmem:[%s1 + $0x2e0] sm:$0xff]
    %v123 = vld [vmem:[%s1 + $0x2e8] sm:$0xff]
    %v124 = vld [vmem:[%s1 + $0x2f0] sm:$0xff]
    %v125 = vld [vmem:[%s1 + $0x2f8] sm:$0xff]
    %v126 = vld [vmem:[%s1 + $0x300] sm:$0xff]
    %v127 = vld [vmem:[%s1 + $0x308] sm:$0xff]
    %v128 = vld [vmem:[%s1 + $0x310] sm:$0xff]
    %v129 = vld [vmem:[%s1 + $0x318] sm:$0xff]
    %v130 = vld [vmem:[%s1 + $0x320] sm:$0xff]
    %v131 = vld [vmem:[%s1 + $0x328] sm:$0xff]
    %v132 = vld [vmem:[%s1 + $0x330] sm:$0xff]
    %v133 = vld [vmem:[%s1 + $0x338] sm:$0xff]
    %v134 = vld [vmem:[%s1 + $0x340] sm:$0xff]
    %v135 = vld [vmem:[%s1 + $0x348] sm:$0xff]
    %v136 = vld [vmem:[%s1 + $0x350] sm:$0xff]
    %v137 = vld [vmem:[%s1 + $0x358] sm:$0xff]
    %v138 = vld [vmem:[%s1 + $0x360] sm:$0xff]
    %v139 = vld [vmem:[%s1 + $0x368] sm:$0xff]
    %v140 = vld [vmem:[%s1 + $0x370] sm:$0xff]
    %v141 = vld [vmem:[%s1 + $0x378] sm:$0xff]
    %v142 = vld [vmem:[%s1 + $0x380] sm:$0xff]
    %v143 = vld [vmem:[%s1 + $0x388] sm:$0xff]
    %v144 = vld [vmem:[%s1 + $0x390] sm:$0xff]
    %v145 = vld [vmem:[%s1 + $0x398] sm:$0xff]
    %v146 = vld [vmem:[%s1 + $0x3a0] sm:$0xff]
    %v147 = vld [vmem:[%s1 + $0x3a8] sm:$0xff]
    %v148 = vld [vmem:[%s1 + $0x3b0] sm:$0xff]
    %v149 = vld [vmem:[%s1 + $0x3b8] sm:$0xff]
    %v150 = vld [vmem:[%s1 + $0x3c0] sm:$0xff]
    %v151 = vld [vmem:[%s1 + $0x3c8] sm:$0xff]
    %v152 = vld [vmem:[%s1 + $0x3d0] sm:$0xff]
    %v153 = vld [vmem:[%s1 + $0x3d8] sm:$0xff]
    %v154 = vld [vmem:[%s1 + $0x3e0] sm:$0xff]
    %v155 = vld [vmem:[%s1 + $0x3e8] sm:$0xff]
    %v156 = vld [vmem:[%s1 + $0x3f0] sm:$0xff]
    %v157 = vld [vmem:[%s1 + $0x3f8] sm:$0xff]
    %v158 = vld [vmem:[%s1 + $0x400] sm:$0xff]
    %v159 = vld [vmem:[%s1 + $0x408] sm:$0xff]
    %v160 = vld [vmem:[%s1 + $0x410] sm:$0xff]
    %v161 = vld [vmem:[%s1 + $0x418] sm:$0xff]
    %v162 = vld [vmem:[%s1 + $0x420] sm:$0xff]
    %v163 = vld [vmem:[%s1 + $0x428] sm:$0xff]
    %v164 = vld [vmem:[%s1 + $0x430] sm:$0xff]
    %v165 = vld [vmem:[%s1 + $0x438] sm:$0xff]
    %v166 = vld [vmem:[%s1 + $0x440] sm:$0xff]
    %v167 = vld [vmem:[%s1 + $0x448] sm:$0xff]
    %v168 = vld [vmem:[%s1 + $0x450] sm:$0xff]
    %v169 = vld [vmem:[%s1 + $0x458] sm:$0xff]
    %v170 = vld [vmem:[%s1 + $0x460] sm:$0xff]
    %v171 = vld [vmem:[%s1 + $0x468] sm:$0xff]
    %v172 = vld [vmem:[%s1 + $0x470] sm:$0xff]
    %v173 = vld [vmem:[%s1 + $0x478] sm:$0xff]
    %v174 = vld [vmem:[%s1 + $0x480] sm:$0xff]
    %v175 = vld [vmem:[%s1 + $0x488] sm:$0xff]
    %v176 = vld [vmem:[%s1 + $0x490] sm:$0xff]
    %v177 = vld [vmem:[%s1 + $0x498] sm:$0xff]
    %v178 = vld [vmem:[%s1 + $0x4a0] sm:$0xff]
    %v179 = vld [vmem:[%s1 + $0x4a8] sm:$0xff]
    %v180 = vld [vmem:[%s1 + $0x4b0] sm:$0xff]
    %v181 = vld [vmem:[%s1 + $0x4b8] sm:$0xff]
    %v182 = vld [vmem:[%s1 + $0x4c0] sm:$0xff]
    %v183 = vld [vmem:[%s1 + $0x4c8] sm:$0xff]
    %v184 = vld [vmem:[%s1 + $0x4d0] sm:$0xff]
    %v185 = vld [vmem:[%s1 + $0x4d8] sm:$0xff]
    %v186 = vld [vmem:[%s1 + $0x4e0] sm:$0xff]
    %v187 = vld [vmem:[%s1 + $0x4e8] sm:$0xff]
    %v188 = vld [vmem:[%s1 + $0x4f0] sm:$0xff]
    %v189 = vld [vmem:[%s1 + $0x4f8] sm:$0xff]
    %v190 = vld [vmem:[%s1 + $0x500] sm:$0xff]
    %v191 = vld [vmem:[%s1 + $0x508] sm:$0xff]
    %v192 = vld [vmem:[%s1 + $0x510] sm:$0xff]
    %v193 = vld [vmem:[%s1 + $0x518] sm:$0xff]
    %v194 = vld [vmem:[%s1 + $0x520] sm:$0xff]
    %v195 = vld [vmem:[%s1 + $0x528] sm:$0xff]
    %v196 = vld [vmem:[%s1 + $0x530] sm:$0xff]
    %v197 = vld [vmem:[%s1 + $0x538] sm:$0xff]
    %v198 = vld [vmem:[%s1 + $0x540] sm:$0xff]
    %v199 = vld [vmem:[%s1 + $0x548] sm:$0xff]
    %v200 = vld [vmem:[%s1 + $0x550] sm:$0xff]
    %v201 = vld [vmem:[%s1 + $0x558] sm:$0xff]
    %v202 = vld [vmem:[%s1 + $0x560] sm:$0xff]
    %v203 = vld [vmem:[%s1 + $0x568] sm:$0xff]
    %v204 = vld [vmem:[%s1 + $0x570] sm:$0xff]
    %v205 = vld [vmem:[%s1 + $0x578] sm:$0xff]
    %v206 = vld [vmem:[%s1 + $0x580] sm:$0xff]
    %v207 = vld [vmem:[%s1 + $0x588] sm:$0xff]
    %v208 = vld [vmem:[%s1 + $0x590] sm:$0xff]
    %v209 = vld [vmem:[%s1 + $0x598] sm:$0xff]
    %v210 = vld [vmem:[%s1 + $0x5a0] sm:$0xff]
    %v211 = vld [vmem:[%s1 + $0x5a8] sm:$0xff]
    %v212 = vld [vmem:[%s1 + $0x5b0] sm:$0xff]
    %v213 = vld [vmem:[%s1 + $0x5b8] sm:$0xff]
    %v214 = vld [vmem:[%s1 + $0x5c0] sm:$0xff]
    %v215 = vld [vmem:[%s1 + $0x5c8] sm:$0xff]
    %v216 = vld [vmem:[%s1 + $0x5d0] sm:$0xff]
    %v217 = vld [vmem:[%s1 + $0x5d8] sm:$0xff]
    %v218 = vld [vmem:[%s1 + $0x5e0] sm:$0xff]
    %v219 = vld [vmem:[%s1 + $0x5e8] sm:$0xff]
    %v220 = vld [vmem:[%s1 + $0x5f0] sm:$0xff]
    %v221 = vld [vmem:[%s1 + $0x5f8] sm:$0xff]
    %v222 = vld [vmem:[%s1 + $0x600] sm:$0xff]
    %v223 = vld [vmem:[%s1 + $0x608] sm:$0xff]
    %v224 = vld [vmem:[%s1 + $0x610] sm:$0xff]
    %v225 = vld [vmem:[%s1 + $0x618] sm:$0xff]
    %v226 = vld [vmem:[%s1 + $0x620] sm:$0xff]
    %v227 = vld [vmem:[%s1 + $0x628] sm:$0xff]
    %v228 = vld [vmem:[%s1 + $0x630] sm:$0xff]
    %v229 = vld [vmem:[%s1 + $0x638] sm:$0xff]
    %v230 = vld [vmem:[%s1 + $0x640] sm:$0xff]
    %v231 = vld [vmem:[%s1 + $0x648] sm:$0xff]
    %v232 = vld [vmem:[%s1 + $0x650] sm:$0xff]
    %v233 = vld [vmem:[%s1 + $0x658] sm:$0xff]
    %v234 = vld [vmem:[%s1 + $0x660] sm:$0xff]
    %v235 = vld [vmem:[%s1 + $0x668] sm:$0xff]
    %v236 = vld [vmem:[%s1 + $0x670] sm:$0xff]
    %v237 = vld [vmem:[%s1 + $0x678] sm:$0xff]
    %v238 = vld [vmem:[%s1 + $0x680] sm:$0xff]
    %v239 = vld [vmem:[%s1 + $0x688] sm:$0xff]
    %v240 = vld [vmem:[%s1 + $0x690] sm:$0xff]
    %v241 = vld [vmem:[%s1 + $0x698] sm:$0xff]
    %v242 = vld [vmem:[%s1 + $0x6a0] sm:$0xff]
    %v243 = vld [vmem:[%s1 + $0x6a8] sm:$0xff]
    %v244 = vld [vmem:[%s1 + $0x6b0] sm:$0xff]
    %v245 = vld [vmem:[%s1 + $0x6b8] sm:$0xff]
    %v246 = vld [vmem:[%s1 + $0x6c0] sm:$0xff]
    %v247 = vld [vmem:[%s1 + $0x6c8] sm:$0xff]
    %v248 = vld [vmem:[%s1 + $0x6d0] sm:$0xff]
    %v249 = vld [vmem:[%s1 + $0x6d8] sm:$0xff]
    %v250 = vld [vmem:[%s1 + $0x6e0] sm:$0xff]
    %v251 = vld [vmem:[%s1 + $0x6e8] sm:$0xff]
    %v252 = vld [vmem:[%s1 + $0x6f0] sm:$0xff]
    %v253 = vld [vmem:[%s1 + $0x6f8] sm:$0xff]
    %v254 = vld [vmem:[%s1 + $0x700] sm:$0xff]
    %v255 = vld [vmem:[%s1 + $0x708] sm:$0xff]
    %v256 = vld [vmem:[%s1 + $0x710] sm:$0xff]
    %v257 = vld [vmem:[%s1 + $0x718] sm:$0xff]
    %v258 = vld [vmem:[%s1 + $0x720] sm:$0xff]
    %v259 = vld [vmem:[%s1 + $0x728] sm:$0xff]
    %v260 = vld [vmem:[%s1 + $0x730] sm:$0xff]
    %v261 = vld [vmem:[%s1 + $0x738] sm:$0xff]
    %v262 = vld [vmem:[%s1 + $0x740] sm:$0xff]
    %v263 = vld [vmem:[%s1 + $0x748] sm:$0xff]
    %v264 = vld [vmem:[%s1 + $0x750] sm:$0xff]
    %v265 = vld [vmem:[%s1 + $0x758] sm:$0xff]
    %v266 = vld [vmem:[%s1 + $0x760] sm:$0xff]
    %v267 = vld [vmem:[%s1 + $0x768] sm:$0xff]
    %v268 = vld [vmem:[%s1 + $0x770] sm:$0xff]
    %v269 = vld [vmem:[%s1 + $0x778] sm:$0xff]
    %v270 = vld [vmem:[%s1 + $0x780] sm:$0xff]
    %v271 = vld [vmem:[%s1 + $0x788] sm:$0xff]
    %v272 = vld [vmem:[%s1 + $0x790] sm:$0xff]
    %v273 = vld [vmem:[%s1 + $0x798] sm:$0xff]
    %v274 = vld [vmem:[%s1 + $0x7a0] sm:$0xff]
    %v275 = vld [vmem:[%s1 + $0x7a8] sm:$0xff]
    %v276 = vld [vmem:[%s1 + $0x7b0] sm:$0xff]
    %v277 = vld [vmem:[%s1 + $0x7b8] sm:$0xff]
    %v278 = vld [vmem:[%s1 + $0x7c0] sm:$0xff]
    %v279 = vld [vmem:[%s1 + $0x7c8] sm:$0xff]
    %v280 = vld [vmem:[%s1 + $0x7d0] sm:$0xff]
    %v281 = vld [vmem:[%s1 + $0x7d8] sm:$0xff]
    %v282 = vld [vmem:[%s1 + $0x7e0] sm:$0xff]
    %v283 = vld [vmem:[%s1 + $0x7e8] sm:$0xff]
    %v284 = vld [vmem:[%s1 + $0x7f0] sm:$0xff]
    %v285 = vld [vmem:[%s1 + $0x7f8] sm:$0xff]
    %v286 = vld [vmem:[%s1 + $0x800] sm:$0xff]
    %v287 = vld [vmem:[%s1 + $0x808] sm:$0xff]
    %v288 = vld [vmem:[%s1 + $0x810] sm:$0xff]
    %v289 = vld [vmem:[%s1 + $0x818] sm:$0xff]
    %v290 = vld [vmem:[%s1 + $0x820] sm:$0xff]
    %v291 = vld [vmem:[%s1 + $0x828] sm:$0xff]
    %v292 = vld [vmem:[%s1 + $0x830] sm:$0xff]
    %v293 = vld [vmem:[%s1 + $0x838] sm:$0xff]
    %v294 = vld [vmem:[%s1 + $0x840] sm:$0xff]
    %v295 = vld [vmem:[%s1 + $0x848] sm:$0xff]
    %v296 = vld [vmem:[%s1 + $0x850] sm:$0xff]
    %v297 = vld [vmem:[%s1 + $0x858] sm:$0xff]
    %v298 = vld [vmem:[%s1 + $0x860] sm:$0xff]
    %v299 = vld [vmem:[%s1 + $0x868] sm:$0xff]
    %v300 = vld [vmem:[%s1 + $0x870] sm:$0xff]
    %v301 = vld [vmem:[%s1 + $0x878] sm:$0xff]
    %v302 = vld [vmem:[%s1 + $0x880] sm:$0xff]
    %v303 = vld [vmem:[%s1 + $0x888] sm:$0xff]
    %v304 = vld [vmem:[%s1 + $0x890] sm:$0xff]
    %v305 = vld [vmem:[%s1 + $0x898] sm:$0xff]
    %v306 = vld [vmem:[%s1 + $0x8a0] sm:$0xff]
    %v307 = vld [vmem:[%s1 + $0x8a8] sm:$0xff]
    %v308 = vld [vmem:[%s1 + $0x8b0] sm:$0xff]
    %v309 = vld [vmem:[%s1 + $0x8b8] sm:$0xff]
    %v310 = vld [vmem:[%s1 + $0x8c0] sm:$0xff]
    %v311 = vld [vmem:[%s1 + $0x8c8] sm:$0xff]
    %v312 = vld [vmem:[%s1 + $0x8d0] sm:$0xff]
    %v313 = vld [vmem:[%s1 + $0x8d8] sm:$0xff]
    %v314 = vld [vmem:[%s1 + $0x8e0] sm:$0xff]
    %v315 = vld [vmem:[%s1 + $0x8e8] sm:$0xff]
    %v316 = vld [vmem:[%s1 + $0x8f0] sm:$0xff]
    %v317 = vld [vmem:[%s1 + $0x8f8] sm:$0xff]
    %v318 = vld [vmem:[%s1 + $0x900] sm:$0xff]
    %v319 = vld [vmem:[%s1 + $0x908] sm:$0xff]
    %v320 = vld [vmem:[%s1 + $0x910] sm:$0xff]
    %v321 = vld [vmem:[%s1 + $0x918] sm:$0xff]
    %v322 = vld [vmem:[%s1 + $0x920] sm:$0xff]
    %v323 = vld [vmem:[%s1 + $0x928] sm:$0xff]
    %v324 = vld [vmem:[%s1 + $0x930] sm:$0xff]
    %v325 = vld [vmem:[%s1 + $0x938] sm:$0xff]
    %v326 = vld [vmem:[%s1 + $0x940] sm:$0xff]
    %v327 = vld [vmem:[%s1 + $0x948] sm:$0xff]
    %v328 = vld [vmem:[%s1 + $0x950] sm:$0xff]
    %v329 = vld [vmem:[%s1 + $0x958] sm:$0xff]
    %v330 = vld [vmem:[%s1 + $0x960] sm:$0xff]
    %v331 = vld [vmem:[%s1 + $0x968] sm:$0xff]
    %v332 = vld [vmem:[%s1 + $0x970] sm:$0xff]
    %v333 = vld [vmem:[%s1 + $0x978] sm:$0xff]
    %v334 = vld [vmem:[%s1 + $0x980] sm:$0xff]
    %v335 = vld [vmem:[%s1 + $0x988] sm:$0xff]
    %v336 = vld [vmem:[%s1 + $0x990] sm:$0xff]
    %v337 = vld [vmem:[%s1 + $0x998] sm:$0xff]
    %v338 = vld [vmem:[%s1 + $0x9a0] sm:$0xff]
    %v339 = vld [vmem:[%s1 + $0x9a8] sm:$0xff]
    %v340 = vld [vmem:[%s1 + $0x9b0] sm:$0xff]
    %v341 = vld [vmem:[%s1 + $0x9b8] sm:$0xff]
    %v342 = vld [vmem:[%s1 + $0x9c0] sm:$0xff]
    %v343 = vld [vmem:[%s1 + $0x9c8] sm:$0xff]
    %v344 = vld [vmem:[%s1 + $0x9d0] sm:$0xff]
    %v345 = vld [vmem:[%s1 + $0x9d8] sm:$0xff]
    %v346 = vld [vmem:[%s1 + $0x9e0] sm:$0xff]
    %v347 = vld [vmem:[%s1 + $0x9e8] sm:$0xff]
    %v348 = vld [vmem:[%s1 + $0x9f0] sm:$0xff]
    %v349 = vld [vmem:[%s1 + $0x9f8] sm:$0xff]
    %v350 = vld [vmem:[%s1 + $0xa00] sm:$0xff]
    %v351 = vld [vmem:[%s1 + $0xa08] sm:$0xff]
    %v352 = vld [vmem:[%s1 + $0xa10] sm:$0xff]
    %v353 = vld [vmem:[%s1 + $0xa18] sm:$0xff]
    %v354 = vld [vmem:[%s1 + $0xa20] sm:$0xff]
    %v355 = vld [vmem:[%s1 + $0xa28] sm:$0xff]
    %v356 = vld [vmem:[%s1 + $0xa30] sm:$0xff]
    %v357 = vld [vmem:[%s1 + $0xa38] sm:$0xff]
    %v358 = vld [vmem:[%s1 + $0xa40] sm:$0xff]
    %v359 = vld [vmem:[%s1 + $0xa48] sm:$0xff]
    %v360 = vld [vmem:[%s1 + $0xa50] sm:$0xff]
    %v361 = vld [vmem:[%s1 + $0xa58] sm:$0xff]
    %v362 = vld [vmem:[%s1 + $0xa60] sm:$0xff]
    %v363 = vld [vmem:[%s1 + $0xa68] sm:$0xff]
    %v364 = vld [vmem:[%s1 + $0xa70] sm:$0xff]
    %v365 = vld [vmem:[%s1 + $0xa78] sm:$0xff]
    %v366 = vld [vmem:[%s1 + $0xa80] sm:$0xff]
    %v367 = vld [vmem:[%s1 + $0xa88] sm:$0xff]
    %v368 = vld [vmem:[%s1 + $0xa90] sm:$0xff]
    %v369 = vld [vmem:[%s1 + $0xa98] sm:$0xff]
    %v370 = vld [vmem:[%s1 + $0xaa0] sm:$0xff]
    %v371 = vld [vmem:[%s1 + $0xaa8] sm:$0xff]
    %v372 = vld [vmem:[%s1 + $0xab0] sm:$0xff]
    %v373 = vld [vmem:[%s1 + $0xab8] sm:$0xff]
    %v374 = vld [vmem:[%s1 + $0xac0] sm:$0xff]
    %v375 = vld [vmem:[%s1 + $0xac8] sm:$0xff]
    %v376 = vld [vmem:[%s1 + $0xad0] sm:$0xff]
    %v377 = vld [vmem:[%s1 + $0xad8] sm:$0xff]
    %v378 = vld [vmem:[%s1 + $0xae0] sm:$0xff]
    %v379 = vld [vmem:[%s1 + $0xae8] sm:$0xff]
    %v380 = vld [vmem:[%s1 + $0xaf0] sm:$0xff]
    %v381 = vld [vmem:[%s1 + $0xaf8] sm:$0xff]
    %v382 = vld [vmem:[%s1 + $0xb00] sm:$0xff]
    %v383 = vld [vmem:[%s1 + $0xb08] sm:$0xff]
    %v384 = vld [vmem:[%s1 + $0xb10] sm:$0xff]
    %v385 = vld [vmem:[%s1 + $0xb18] sm:$0xff]
    %v386 = vld [vmem:[%s1 + $0xb20] sm:$0xff]
    %v387 = vld [vmem:[%s1 + $0xb28] sm:$0xff]
    %v388 = vld [vmem:[%s1 + $0xb30] sm:$0xff]
    %v389 = vld [vmem:[%s1 + $0xb38] sm:$0xff]
    %v390 = vld [vmem:[%s1 + $0xb40] sm:$0xff]
    %v391 = vld [vmem:[%s1 + $0xb48] sm:$0xff]
    %v392 = vld [vmem:[%s1 + $0xb50] sm:$0xff]
    %v393 = vld [vmem:[%s1 + $0xb58] sm:$0xff]
    %v394 = vld [vmem:[%s1 + $0xb60] sm:$0xff]
    %v395 = vld [vmem:[%s1 + $0xb68] sm:$0xff]
    %v396 = vld [vmem:[%s1 + $0xb70] sm:$0xff]
    %v397 = vld [vmem:[%s1 + $0xb78] sm:$0xff]
    %v398 = vld [vmem:[%s1 + $0xb80] sm:$0xff]
    %v399 = vld [vmem:[%s1 + $0xb88] sm:$0xff]
    %v400 = vld [vmem:[%s1 + $0xb90] sm:$0xff]
    %v401 = vld [vmem:[%s1 + $0xb98] sm:$0xff]
    %v402 = vld [vmem:[%s1 + $0xba0] sm:$0xff]
    %v403 = vld [vmem:[%s1 + $0xba8] sm:$0xff]
    %v404 = vld [vmem:[%s1 + $0xbb0] sm:$0xff]
    %v405 = vld [vmem:[%s1 + $0xbb8] sm:$0xff]
    %v406 = vld [vmem:[%s1 + $0xbc0] sm:$0xff]
    %v407 = vld [vmem:[%s1 + $0xbc8] sm:$0xff]
    %v408 = vld [vmem:[%s1 + $0xbd0] sm:$0xff]
    %v409 = vld [vmem:[%s1 + $0xbd8] sm:$0xff]
    %v410 = vld [vmem:[%s1 + $0xbe0] sm:$0xff]
    %v411 = vld [vmem:[%s1 + $0xbe8] sm:$0xff]
    %v412 = vld [vmem:[%s1 + $0xbf0] sm:$0xff]
    %v413 = vld [vmem:[%s1 + $0xbf8] sm:$0xff]
    %v414 = vld [vmem:[%s1 + $0xc00] sm:$0xff]
    %v415 = vld [vmem:[%s1 + $0xc08] sm:$0xff]
    %v416 = vld [vmem:[%s1 + $0xc10] sm:$0xff]
    %v417 = vld [vmem:[%s1 + $0xc18] sm:$0xff]
    %v418 = vld [vmem:[%s1 + $0xc20] sm:$0xff]
    %v419 = vld [vmem:[%s1 + $0xc28] sm:$0xff]
    %v420 = vld [vmem:[%s1 + $0xc30] sm:$0xff]
    %v421 = vld [vmem:[%s1 + $0xc38] sm:$0xff]
    %v422 = vld [vmem:[%s1 + $0xc40] sm:$0xff]
    %v423 = vld [vmem:[%s1 + $0xc48] sm:$0xff]
    %v424 = vld [vmem:[%s1 + $0xc50] sm:$0xff]
    %v425 = vld [vmem:[%s1 + $0xc58] sm:$0xff]
    %v426 = vld [vmem:[%s1 + $0xc60] sm:$0xff]
    %v427 = vld [vmem:[%s1 + $0xc68] sm:$0xff]
    %v428 = vld [vmem:[%s1 + $0xc70] sm:$0xff]
    %v429 = vld [vmem:[%s1 + $0xc78] sm:$0xff]
    %v430 = vld [vmem:[%s1 + $0xc80] sm:$0xff]
    %v431 = vld [vmem:[%s1 + $0xc88] sm:$0xff]
    %v432 = vld [vmem:[%s1 + $0xc90] sm:$0xff]
    %v433 = vld [vmem:[%s1 + $0xc98] sm:$0xff]
    %v434 = vld [vmem:[%s1 + $0xca0] sm:$0xff]
    %v435 = vld [vmem:[%s1 + $0xca8] sm:$0xff]
    %v436 = vld [vmem:[%s1 + $0xcb0] sm:$0xff]
    %v437 = vld [vmem:[%s1 + $0xcb8] sm:$0xff]
    %v438 = vld [vmem:[%s1 + $0xcc0] sm:$0xff]
    %v439 = vld [vmem:[%s1 + $0xcc8] sm:$0xff]
    %v440 = vld [vmem:[%s1 + $0xcd0] sm:$0xff]
    %v441 = vld [vmem:[%s1 + $0xcd8] sm:$0xff]
    %v442 = vld [vmem:[%s1 + $0xce0] sm:$0xff]
    %v443 = vld [vmem:[%s1 + $0xce8] sm:$0xff]
    %v444 = vld [vmem:[%s1 + $0xcf0] sm:$0xff]
    %v445 = vld [vmem:[%s1 + $0xcf8] sm:$0xff]
    %v446 = vld [vmem:[%s1 + $0xd00] sm:$0xff]
    %v447 = vld [vmem:[%s1 + $0xd08] sm:$0xff]
    %v448 = vld [vmem:[%s1 + $0xd10] sm:$0xff]
    %v449 = vld [vmem:[%s1 + $0xd18] sm:$0xff]
    %v450 = vld [vmem:[%s1 + $0xd20] sm:$0xff]
    %v451 = vld [vmem:[%s1 + $0xd28] sm:$0xff]
    %v452 = vld [vmem:[%s1 + $0xd30] sm:$0xff]
    %v453 = vld [vmem:[%s1 + $0xd38] sm:$0xff]
    %v454 = vld [vmem:[%s1 + $0xd40] sm:$0xff]
    %v455 = vld [vmem:[%s1 + $0xd48] sm:$0xff]
    %v456 = vld [vmem:[%s1 + $0xd50] sm:$0xff]
    %v457 = vld [vmem:[%s1 + $0xd58] sm:$0xff]
    %v458 = vld [vmem:[%s1 + $0xd60] sm:$0xff]
    %v459 = vld [vmem:[%s1 + $0xd68] sm:$0xff]
    %v460 = vld [vmem:[%s1 + $0xd70] sm:$0xff]
    %v461 = vld [vmem:[%s1 + $0xd78] sm:$0xff]
    %v462 = vld [vmem:[%s1 + $0xd80] sm:$0xff]
    %v463 = vld [vmem:[%s1 + $0xd88] sm:$0xff]
    %v464 = vld [vmem:[%s1 + $0xd90] sm:$0xff]
    %v465 = vld [vmem:[%s1 + $0xd98] sm:$0xff]
    %v466 = vld [vmem:[%s1 + $0xda0] sm:$0xff]
    %v467 = vld [vmem:[%s1 + $0xda8] sm:$0xff]
    %v468 = vld [vmem:[%s1 + $0xdb0] sm:$0xff]
    %v469 = vld [vmem:[%s1 + $0xdb8] sm:$0xff]
    %v470 = vld [vmem:[%s1 + $0xdc0] sm:$0xff]
    %v471 = vld [vmem:[%s1 + $0xdc8] sm:$0xff]
    %v472 = vld [vmem:[%s1 + $0xdd0] sm:$0xff]
    %v473 = vld [vmem:[%s1 + $0xdd8] sm:$0xff]
    %v474 = vld [vmem:[%s1 + $0xde0] sm:$0xff]
    %v475 = vld [vmem:[%s1 + $0xde8] sm:$0xff]
    %v476 = vld [vmem:[%s1 + $0xdf0] sm:$0xff]
    %v477 = vld [vmem:[%s1 + $0xdf8] sm:$0xff]
    %v478 = vld [vmem:[%s1 + $0xe00] sm:$0xff]
    %v479 = vld [vmem:[%s1 + $0xe08] sm:$0xff]
    %v480 = vld [vmem:[%s1 + $0xe10] sm:$0xff]
    %v481 = vld [vmem:[%s1 + $0xe18] sm:$0xff]
    %v482 = vld [vmem:[%s1 + $0xe20] sm:$0xff]
    %v483 = vld [vmem:[%s1 + $0xe28] sm:$0xff]
    %v484 = vld [vmem:[%s1 + $0xe30] sm:$0xff]
    %v485 = vld [vmem:[%s1 + $0xe38] sm:$0xff]
    %v486 = vld [vmem:[%s1 + $0xe40] sm:$0xff]
    %v487 = vld [vmem:[%s1 + $0xe48] sm:$0xff]
    %v488 = vld [vmem:[%s1 + $0xe50] sm:$0xff]
    %v489 = vld [vmem:[%s1 + $0xe58] sm:$0xff]
    %v490 = vld [vmem:[%s1 + $0xe60] sm:$0xff]
    %v491 = vld [vmem:[%s1 + $0xe68] sm:$0xff]
    %v492 = vld [vmem:[%s1 + $0xe70] sm:$0xff]
    %v493 = vld [vmem:[%s1 + $0xe78] sm:$0xff]
    %v494 = vld [vmem:[%s1 + $0xe80] sm:$0xff]
    %v495 = vld [vmem:[%s1 + $0xe88] sm:$0xff]
    %v496 = vld [vmem:[%s1 + $0xe90] sm:$0xff]
    %v497 = vld [vmem:[%s1 + $0xe98] sm:$0xff]
    %v498 = vld [vmem:[%s1 + $0xea0] sm:$0xff]
    %v499 = vld [vmem:[%s1 + $0xea8] sm:$0xff]
    %v500 = vld [vmem:[%s1 + $0xeb0] sm:$0xff]
    %v501 = vld [vmem:[%s1 + $0xeb8] sm:$0xff]
    %v502 = vld [vmem:[%s1 + $0xec0] sm:$0xff]
    %v503 = vld [vmem:[%s1 + $0xec8] sm:$0xff]
    %v504 = vld [vmem:[%s1 + $0xed0] sm:$0xff]
    %v505 = vld [vmem:[%s1 + $0xed8] sm:$0xff]
    %v506 = vld [vmem:[%s1 + $0xee0] sm:$0xff]
    %v507 = vld [vmem:[%s1 + $0xee8] sm:$0xff]
    %v508 = vld [vmem:[%s1 + $0xef0] sm:$0xff]
    %v509 = vld [vmem:[%s1 + $0xef8] sm:$0xff]
    %v510 = vld [vmem:[%s1 + $0xf00] sm:$0xff]
    %v511 = vld [vmem:[%s1 + $0xf08] sm:$0xff]
    %v512 = vld [vmem:[%s1 + $0xf10] sm:$0xff]
    %v513 = vld [vmem:[%s1 + $0xf18] sm:$0xff]
    %v514 = vld [vmem:[%s1 + $0xf20] sm:$0xff]
    %v515 = vld [vmem:[%s1 + $0xf28] sm:$0xff]
    %v516 = vld [vmem:[%s1 + $0xf30] sm:$0xff]
    %v517 = vld [vmem:[%s1 + $0xf38] sm:$0xff]
    %v518 = vld [vmem:[%s1 + $0xf40] sm:$0xff]
    %v519 = vld [vmem:[%s1 + $0xf48] sm:$0xff]
    %v520 = vld [vmem:[%s1 + $0xf50] sm:$0xff]
    %v521 = vld [vmem:[%s1 + $0xf58] sm:$0xff]
    %v522 = vld [vmem:[%s1 + $0xf60] sm:$0xff]
    %v523 = vld [vmem:[%s1 + $0xf68] sm:$0xff]
    %v524 = vld [vmem:[%s1 + $0xf70] sm:$0xff]
    %v525 = vld [vmem:[%s1 + $0xf78] sm:$0xff]
    %v526 = vld [vmem:[%s1 + $0xf80] sm:$0xff]
    %v527 = vld [vmem:[%s1 + $0xf88] sm:$0xff]
    %v528 = vld [vmem:[%s1 + $0xf90] sm:$0xff]
    %v529 = vld [vmem:[%s1 + $0xf98] sm:$0xff]
    %v530 = vld [vmem:[%s1 + $0xfa0] sm:$0xff]
    %v531 = vld [vmem:[%s1 + $0xfa8] sm:$0xff]
    %v532 = vld [vmem:[%s1 + $0xfb0] sm:$0xff]
    %v533 = vld [vmem:[%s1 + $0xfb8] sm:$0xff]
    %v534 = vld [vmem:[%s1 + $0xfc0] sm:$0xff]
    %v535 = vld [vmem:[%s1 + $0xfc8] sm:$0xff]
    %v536 = vld [vmem:[%s1 + $0xfd0] sm:$0xff]
    %v537 = vld [vmem:[%s1 + $0xfd8] sm:$0xff]
    %v538 = vld [vmem:[%s1 + $0xfe0] sm:$0xff]
    %v539 = vld [vmem:[%s1 + $0xfe8] sm:$0xff]
    %v540 = vld [vmem:[%s1 + $0xff0] sm:$0xff]
    %v541 = vld [vmem:[%s1 + $0xff8] sm:$0xff]
    %v542 = vld [vmem:[%s1 + $0x1000] sm:$0xff]
    %v543 = vld [vmem:[%s1 + $0x1008] sm:$0xff]
    %v544 = vld [vmem:[%s1 + $0x1010] sm:$0xff]
    %v545 = vld [vmem:[%s1 + $0x1018] sm:$0xff]
    %v546 = vld [vmem:[%s1 + $0x1020] sm:$0xff]
    %v547 = vld [vmem:[%s1 + $0x1028] sm:$0xff]
    %v548 = vld [vmem:[%s1 + $0x1030] sm:$0xff]
    %v549 = vld [vmem:[%s1 + $0x1038] sm:$0xff]
    %v550 = vld [vmem:[%s1 + $0x1040] sm:$0xff]
    %v551 = vld [vmem:[%s1 + $0x1048] sm:$0xff]
    %v552 = vld [vmem:[%s1 + $0x1050] sm:$0xff]
    %v553 = vld [vmem:[%s1 + $0x1058] sm:$0xff]
    %v554 = vld [vmem:[%s1 + $0x1060] sm:$0xff]
    %v555 = vld [vmem:[%s1 + $0x1068] sm:$0xff]
    %v556 = vld [vmem:[%s1 + $0x1070] sm:$0xff]
    %v557 = vld [vmem:[%s1 + $0x1078] sm:$0xff]
    %v558 = vld [vmem:[%s1 + $0x1080] sm:$0xff]
    %v559 = vld [vmem:[%s1 + $0x1088] sm:$0xff]
    %v560 = vld [vmem:[%s1 + $0x1090] sm:$0xff]
    %v561 = vld [vmem:[%s1 + $0x1098] sm:$0xff]
    %v562 = vld [vmem:[%s1 + $0x10a0] sm:$0xff]
    %v563 = vld [vmem:[%s1 + $0x10a8] sm:$0xff]
    %v564 = vld [vmem:[%s1 + $0x10b0] sm:$0xff]
    %v565 = vld [vmem:[%s1 + $0x10b8] sm:$0xff]
    %v566 = vld [vmem:[%s1 + $0x10c0] sm:$0xff]
    %v567 = vld [vmem:[%s1 + $0x10c8] sm:$0xff]
    %v568 = vld [vmem:[%s1 + $0x10d0] sm:$0xff]
    %v569 = vld [vmem:[%s1 + $0x10d8] sm:$0xff]
    %v570 = vld [vmem:[%s1 + $0x10e0] sm:$0xff]
    %v571 = vld [vmem:[%s1 + $0x10e8] sm:$0xff]
    %v572 = vld [vmem:[%s1 + $0x10f0] sm:$0xff]
    %v573 = vld [vmem:[%s1 + $0x10f8] sm:$0xff]
    %v574 = vld [vmem:[%s1 + $0x1100] sm:$0xff]
    %v575 = vld [vmem:[%s1 + $0x1108] sm:$0xff]
    %v576 = vld [vmem:[%s1 + $0x1110] sm:$0xff]
    %v577 = vld [vmem:[%s1 + $0x1118] sm:$0xff]
    %v578 = vld [vmem:[%s1 + $0x1120] sm:$0xff]
    %v579 = vld [vmem:[%s1 + $0x1128] sm:$0xff]
    %v580 = vld [vmem:[%s1 + $0x1130] sm:$0xff]
    %v581 = vld [vmem:[%s1 + $0x1138] sm:$0xff]
    %v582 = vld [vmem:[%s1 + $0x1140] sm:$0xff]
    %v583 = vld [vmem:[%s1 + $0x1148] sm:$0xff]
    %v584 = vld [vmem:[%s1 + $0x1150] sm:$0xff]
    %v585 = vld [vmem:[%s1 + $0x1158] sm:$0xff]
    %v586 = vld [vmem:[%s1 + $0x1160] sm:$0xff]
    %v587 = vld [vmem:[%s1 + $0x1168] sm:$0xff]
    %v588 = vld [vmem:[%s1 + $0x1170] sm:$0xff]
    %v589 = vld [vmem:[%s1 + $0x1178] sm:$0xff]
    %v590 = vld [vmem:[%s1 + $0x1180] sm:$0xff]
    %v591 = vld [vmem:[%s1 + $0x1188] sm:$0xff]
    %v592 = vld [vmem:[%s1 + $0x1190] sm:$0xff]
    %v593 = vld [vmem:[%s1 + $0x1198] sm:$0xff]
    %v594 = vld [vmem:[%s1 + $0x11a0] sm:$0xff]
    %v595 = vld [vmem:[%s1 + $0x11a8] sm:$0xff]
    %v596 = vld [vmem:[%s1 + $0x11b0] sm:$0xff]
    %v597 = vld [vmem:[%s1 + $0x11b8] sm:$0xff]
    %v598 = vld [vmem:[%s1 + $0x11c0] sm:$0xff]
    %v599 = vld [vmem:[%s1 + $0x11c8] sm:$0xff]
    %v600 = vld [vmem:[%s1 + $0x11d0] sm:$0xff]
    %v601 = vld [vmem:[%s1 + $0x11d8] sm:$0xff]
    %v602 = vld [vmem:[%s1 + $0x11e0] sm:$0xff]
    %v603 = vld [vmem:[%s1 + $0x11e8] sm:$0xff]
    %v604 = vld [vmem:[%s1 + $0x11f0] sm:$0xff]
    %v605 = vld [vmem:[%s1 + $0x11f8] sm:$0xff]
    %v606 = vld [vmem:[%s1 + $0x1200] sm:$0xff]
    %v607 = vld [vmem:[%s1 + $0x1208] sm:$0xff]
    %v608 = vld [vmem:[%s1 + $0x1210] sm:$0xff]
    %v609 = vld [vmem:[%s1 + $0x1218] sm:$0xff]
    %v610 = vld [vmem:[%s1 + $0x1220] sm:$0xff]
    %v611 = vld [vmem:[%s1 + $0x1228] sm:$0xff]
    %v612 = vld [vmem:[%s1 + $0x1230] sm:$0xff]
    %v613 = vld [vmem:[%s1 + $0x1238] sm:$0xff]
    %v614 = vld [vmem:[%s1 + $0x1240] sm:$0xff]
    %v615 = vld [vmem:[%s1 + $0x1248] sm:$0xff]
    %v616 = vld [vmem:[%s1 + $0x1250] sm:$0xff]
    %v617 = vld [vmem:[%s1 + $0x1258] sm:$0xff]
    %v618 = vld [vmem:[%s1 + $0x1260] sm:$0xff]
    %v619 = vld [vmem:[%s1 + $0x1268] sm:$0xff]
    %v620 = vld [vmem:[%s1 + $0x1270] sm:$0xff]
    %v621 = vld [vmem:[%s1 + $0x1278] sm:$0xff]
    %v622 = vld [vmem:[%s1 + $0x1280] sm:$0xff]
    %v623 = vld [vmem:[%s1 + $0x1288] sm:$0xff]
    %v624 = vld [vmem:[%s1 + $0x1290] sm:$0xff]
    %v625 = vld [vmem:[%s1 + $0x1298] sm:$0xff]
    %v626 = vld [vmem:[%s1 + $0x12a0] sm:$0xff]
    %v627 = vld [vmem:[%s1 + $0x12a8] sm:$0xff]
    %v628 = vld [vmem:[%s1 + $0x12b0] sm:$0xff]
    %v629 = vld [vmem:[%s1 + $0x12b8] sm:$0xff]
    %v630 = vld [vmem:[%s1 + $0x12c0] sm:$0xff]
    %v631 = vld [vmem:[%s1 + $0x12c8] sm:$0xff]
    %v632 = vld [vmem:[%s1 + $0x12d0] sm:$0xff]
    %v633 = vld [vmem:[%s1 + $0x12d8] sm:$0xff]
    %v634 = vld [vmem:[%s1 + $0x12e0] sm:$0xff]
    %v635 = vld [vmem:[%s1 + $0x12e8] sm:$0xff]
    %v636 = vld [vmem:[%s1 + $0x12f0] sm:$0xff]
    %v637 = vld [vmem:[%s1 + $0x12f8] sm:$0xff]
    %v638 = vld [vmem:[%s1 + $0x1300] sm:$0xff]
    %v639 = vld [vmem:[%s1 + $0x1308] sm:$0xff]
    %v640 = vld [vmem:[%s1 + $0x1310] sm:$0xff]
    %v641 = vld [vmem:[%s1 + $0x1318] sm:$0xff]
    %v642 = vld [vmem:[%s1 + $0x1320] sm:$0xff]
    %v643 = vld [vmem:[%s1 + $0x1328] sm:$0xff]
    %v644 = vld [vmem:[%s1 + $0x1330] sm:$0xff]
    %v645 = vld [vmem:[%s1 + $0x1338] sm:$0xff]
    %v646 = vld [vmem:[%s1 + $0x1340] sm:$0xff]
    %v647 = vld [vmem:[%s1 + $0x1348] sm:$0xff]
    %v648 = vld [vmem:[%s1 + $0x1350] sm:$0xff]
    %v649 = vld [vmem:[%s1 + $0x1358] sm:$0xff]
    %v650 = vld [vmem:[%s1 + $0x1360] sm:$0xff]
    %v651 = vld [vmem:[%s1 + $0x1368] sm:$0xff]
    %v652 = vld [vmem:[%s1 + $0x1370] sm:$0xff]
    %v653 = vld [vmem:[%s1 + $0x1378] sm:$0xff]
    %v654 = vld [vmem:[%s1 + $0x1380] sm:$0xff]
    %v655 = vld [vmem:[%s1 + $0x1388] sm:$0xff]
    %v656 = vld [vmem:[%s1 + $0x1390] sm:$0xff]
    %v657 = vld [vmem:[%s1 + $0x1398] sm:$0xff]
    %v658 = vld [vmem:[%s1 + $0x13a0] sm:$0xff]
    %v659 = vld [vmem:[%s1 + $0x13a8] sm:$0xff]
    %v660 = vld [vmem:[%s1 + $0x13b0] sm:$0xff]
    %v661 = vld [vmem:[%s1 + $0x13b8] sm:$0xff]
    %v662 = vld [vmem:[%s1 + $0x13c0] sm:$0xff]
    %v663 = vld [vmem:[%s1 + $0x13c8] sm:$0xff]
    %v664 = vld [vmem:[%s1 + $0x13d0] sm:$0xff]
    %v665 = vld [vmem:[%s1 + $0x13d8] sm:$0xff]
    %v666 = vld [vmem:[%s1 + $0x13e0] sm:$0xff]
    %v667 = vld [vmem:[%s1 + $0x13e8] sm:$0xff]
    %v668 = vld [vmem:[%s1 + $0x13f0] sm:$0xff]
    %v669 = vld [vmem:[%s1 + $0x13f8] sm:$0xff]
    %v670 = vld [vmem:[%s1 + $0x1400] sm:$0xff]
    %v671 = vld [vmem:[%s1 + $0x1408] sm:$0xff]
    %v672 = vld [vmem:[%s1 + $0x1410] sm:$0xff]
    %v673 = vld [vmem:[%s1 + $0x1418] sm:$0xff]
    %v674 = vld [vmem:[%s1 + $0x1420] sm:$0xff]
    %v675 = vld [vmem:[%s1 + $0x1428] sm:$0xff]
    %v676 = vld [vmem:[%s1 + $0x1430] sm:$0xff]
    %v677 = vld [vmem:[%s1 + $0x1438] sm:$0xff]
    %v678 = vld [vmem:[%s1 + $0x1440] sm:$0xff]
    %v679 = vld [vmem:[%s1 + $0x1448] sm:$0xff]
    %v680 = vld [vmem:[%s1 + $0x1450] sm:$0xff]
    %v681 = vld [vmem:[%s1 + $0x1458] sm:$0xff]
    %v682 = vld [vmem:[%s1 + $0x1460] sm:$0xff]
    %v683 = vld [vmem:[%s1 + $0x1468] sm:$0xff]
    %v684 = vld [vmem:[%s1 + $0x1470] sm:$0xff]
    %v685 = vld [vmem:[%s1 + $0x1478] sm:$0xff]
    %v686 = vld [vmem:[%s1 + $0x1480] sm:$0xff]
    %v687 = vld [vmem:[%s1 + $0x1488] sm:$0xff]
    %v688 = vld [vmem:[%s1 + $0x1490] sm:$0xff]
    %v689 = vld [vmem:[%s1 + $0x1498] sm:$0xff]
    %v690 = vld [vmem:[%s1 + $0x14a0] sm:$0xff]
    %v691 = vld [vmem:[%s1 + $0x14a8] sm:$0xff]
    %v692 = vld [vmem:[%s1 + $0x14b0] sm:$0xff]
    %v693 = vld [vmem:[%s1 + $0x14b8] sm:$0xff]
    %v694 = vld [vmem:[%s1 + $0x14c0] sm:$0xff]
    %v695 = vld [vmem:[%s1 + $0x14c8] sm:$0xff]
    %v696 = vld [vmem:[%s1 + $0x14d0] sm:$0xff]
    %v697 = vld [vmem:[%s1 + $0x14d8] sm:$0xff]
    %v698 = vld [vmem:[%s1 + $0x14e0] sm:$0xff]
    %v699 = vld [vmem:[%s1 + $0x14e8] sm:$0xff]
    %v700 = vld [vmem:[%s1 + $0x14f0] sm:$0xff]
    %v701 = vld [vmem:[%s1 + $0x14f8] sm:$0xff]
    %v702 = vld [vmem:[%s1 + $0x1500] sm:$0xff]
    %v703 = vld [vmem:[%s1 + $0x1508] sm:$0xff]
    %v704 = vld [vmem:[%s1 + $0x1510] sm:$0xff]
    %v705 = vld [vmem:[%s1 + $0x1518] sm:$0xff]
    %v706 = vld [vmem:[%s1 + $0x1520] sm:$0xff]
    %v707 = vld [vmem:[%s1 + $0x1528] sm:$0xff]
    %v708 = vld [vmem:[%s1 + $0x1530] sm:$0xff]
    %v709 = vld [vmem:[%s1 + $0x1538] sm:$0xff]
    %v710 = vld [vmem:[%s1 + $0x1540] sm:$0xff]
    %v711 = vld [vmem:[%s1 + $0x1548] sm:$0xff]
    %v712 = vld [vmem:[%s1 + $0x1550] sm:$0xff]
    %v713 = vld [vmem:[%s1 + $0x1558] sm:$0xff]
    %v714 = vld [vmem:[%s1 + $0x1560] sm:$0xff]
    %v715 = vld [vmem:[%s1 + $0x1568] sm:$0xff]
    %v716 = vld [vmem:[%s1 + $0x1570] sm:$0xff]
    %v717 = vld [vmem:[%s1 + $0x1578] sm:$0xff]
    %v718 = vld [vmem:[%s1 + $0x1580] sm:$0xff]
    %v719 = vld [vmem:[%s1 + $0x1588] sm:$0xff]
    %v720 = vld [vmem:[%s1 + $0x1590] sm:$0xff]
    %v721 = vld [vmem:[%s1 + $0x1598] sm:$0xff]
    %v722 = vld [vmem:[%s1 + $0x15a0] sm:$0xff]
    %v723 = vld [vmem:[%s1 + $0x15a8] sm:$0xff]
    %v724 = vld [vmem:[%s1 + $0x15b0] sm:$0xff]
    %v725 = vld [vmem:[%s1 + $0x15b8] sm:$0xff]
    %v726 = vld [vmem:[%s1 + $0x15c0] sm:$0xff]
    %v727 = vld [vmem:[%s1 + $0x15c8] sm:$0xff]
    %v728 = vld [vmem:[%s1 + $0x15d0] sm:$0xff]
    %v729 = vld [vmem:[%s1 + $0x15d8] sm:$0xff]
    %v730 = vld [vmem:[%s1 + $0x15e0] sm:$0xff]
    %v731 = vld [vmem:[%s1 + $0x15e8] sm:$0xff]
    %v732 = vld [vmem:[%s1 + $0x15f0] sm:$0xff]
    %v733 = vld [vmem:[%s1 + $0x15f8] sm:$0xff]
    %v734 = vld [vmem:[%s1 + $0x1600] sm:$0xff]
    %v735 = vld [vmem:[%s1 + $0x1608] sm:$0xff]
    %v736 = vld [vmem:[%s1 + $0x1610] sm:$0xff]
    %v737 = vld [vmem:[%s1 + $0x1618] sm:$0xff]
    %v738 = vld [vmem:[%s1 + $0x1620] sm:$0xff]
    %v739 = vld [vmem:[%s1 + $0x1628] sm:$0xff]
    %v740 = vld [vmem:[%s1 + $0x1630] sm:$0xff]
    %v741 = vld [vmem:[%s1 + $0x1638] sm:$0xff]
    %v742 = vld [vmem:[%s1 + $0x1640] sm:$0xff]
    %v743 = vld [vmem:[%s1 + $0x1648] sm:$0xff]
    %v744 = vld [vmem:[%s1 + $0x1650] sm:$0xff]
    %v745 = vld [vmem:[%s1 + $0x1658] sm:$0xff]
    %v746 = vld [vmem:[%s1 + $0x1660] sm:$0xff]
    %v747 = vld [vmem:[%s1 + $0x1668] sm:$0xff]
    %v748 = vld [vmem:[%s1 + $0x1670] sm:$0xff]
    %v749 = vld [vmem:[%s1 + $0x1678] sm:$0xff]
    %v750 = vld [vmem:[%s1 + $0x1680] sm:$0xff]
    %v751 = vld [vmem:[%s1 + $0x1688] sm:$0xff]
    %v752 = vld [vmem:[%s1 + $0x1690] sm:$0xff]
    %v753 = vld [vmem:[%s1 + $0x1698] sm:$0xff]
    %v754 = vld [vmem:[%s1 + $0x16a0] sm:$0xff]
    %v755 = vld [vmem:[%s1 + $0x16a8] sm:$0xff]
    %v756 = vld [vmem:[%s1 + $0x16b0] sm:$0xff]
    %v757 = vld [vmem:[%s1 + $0x16b8] sm:$0xff]
    %v758 = vld [vmem:[%s1 + $0x16c0] sm:$0xff]
    %v759 = vld [vmem:[%s1 + $0x16c8] sm:$0xff]
    %v760 = vld [vmem:[%s1 + $0x16d0] sm:$0xff]
    %v761 = vld [vmem:[%s1 + $0x16d8] sm:$0xff]
    %v762 = vld [vmem:[%s1 + $0x16e0] sm:$0xff]
    %v763 = vld [vmem:[%s1 + $0x16e8] sm:$0xff]
    %v764 = vld [vmem:[%s1 + $0x16f0] sm:$0xff]
    %v765 = vld [vmem:[%s1 + $0x16f8] sm:$0xff]
    %v766 = vld [vmem:[%s1 + $0x1700] sm:$0xff]
    %v767 = vld [vmem:[%s1 + $0x1708] sm:$0xff]
    %v768 = vld [vmem:[%s1 + $0x1710] sm:$0xff]
    %v769 = vld [vmem:[%s1 + $0x1718] sm:$0xff]
    %v770 = vld [vmem:[%s1 + $0x1720] sm:$0xff]
    %v771 = vld [vmem:[%s1 + $0x1728] sm:$0xff]
    %v772 = vld [vmem:[%s1 + $0x1730] sm:$0xff]
    %v773 = vld [vmem:[%s1 + $0x1738] sm:$0xff]
    %v774 = vld [vmem:[%s1 + $0x1740] sm:$0xff]
    %v775 = vld [vmem:[%s1 + $0x1748] sm:$0xff]
    %v776 = vld [vmem:[%s1 + $0x1750] sm:$0xff]
    %v777 = vld [vmem:[%s1 + $0x1758] sm:$0xff]
    %v778 = vld [vmem:[%s1 + $0x1760] sm:$0xff]
    %v779 = vld [vmem:[%s1 + $0x1768] sm:$0xff]
    %v780 = vld [vmem:[%s1 + $0x1770] sm:$0xff]
    %v781 = vld [vmem:[%s1 + $0x1778] sm:$0xff]
    %v782 = vld [vmem:[%s1 + $0x1780] sm:$0xff]
    %v783 = vld [vmem:[%s1 + $0x1788] sm:$0xff]
    %v784 = vld [vmem:[%s1 + $0x1790] sm:$0xff]
    %v785 = vld [vmem:[%s1 + $0x1798] sm:$0xff]
    %v786 = vld [vmem:[%s1 + $0x17a0] sm:$0xff]
    %v787 = vld [vmem:[%s1 + $0x17a8] sm:$0xff]
    %v788 = vld [vmem:[%s1 + $0x17b0] sm:$0xff]
    %v789 = vld [vmem:[%s1 + $0x17b8] sm:$0xff]
    %v790 = vld [vmem:[%s1 + $0x17c0] sm:$0xff]
    %v791 = vld [vmem:[%s1 + $0x17c8] sm:$0xff]
    %v792 = vld [vmem:[%s1 + $0x17d0] sm:$0xff]
    %v793 = vld [vmem:[%s1 + $0x17d8] sm:$0xff]
    %v794 = vld [vmem:[%s1 + $0x17e0] sm:$0xff]
    %v795 = vld [vmem:[%s1 + $0x17e8] sm:$0xff]
    %v796 = vld [vmem:[%s1 + $0x17f0] sm:$0xff]
    %v797 = vld [vmem:[%s1 + $0x17f8] sm:$0xff]
    %v798 = vld [vmem:[%s1 + $0x1800] sm:$0xff]
    %v799 = vld [vmem:[%s1 + $0x1808] sm:$0xff]
    %v800 = vld [vmem:[%s1 + $0x1810] sm:$0xff]
    %v801 = vld [vmem:[%s1 + $0x1818] sm:$0xff]
    %v802 = vld [vmem:[%s1 + $0x1820] sm:$0xff]
    %v803 = vld [vmem:[%s1 + $0x1828] sm:$0xff]
    %v804 = vld [vmem:[%s1 + $0x1830] sm:$0xff]
    %v805 = vld [vmem:[%s1 + $0x1838] sm:$0xff]
    %v806 = vld [vmem:[%s1 + $0x1840] sm:$0xff]
    %v807 = vld [vmem:[%s1 + $0x1848] sm:$0xff]
    %v808 = vld [vmem:[%s1 + $0x1850] sm:$0xff]
    %v809 = vld [vmem:[%s1 + $0x1858] sm:$0xff]
    %v810 = vld [vmem:[%s1 + $0x1860] sm:$0xff]
    %v811 = vld [vmem:[%s1 + $0x1868] sm:$0xff]
    %v812 = vld [vmem:[%s1 + $0x1870] sm:$0xff]
    %v813 = vld [vmem:[%s1 + $0x1878] sm:$0xff]
    %v814 = vld [vmem:[%s1 + $0x1880] sm:$0xff]
    %v815 = vld [vmem:[%s1 + $0x1888] sm:$0xff]
    %v816 = vld [vmem:[%s1 + $0x1890] sm:$0xff]
    %v817 = vld [vmem:[%s1 + $0x1898] sm:$0xff]
    %v818 = vld [vmem:[%s1 + $0x18a0] sm:$0xff]
    %v819 = vld [vmem:[%s1 + $0x18a8] sm:$0xff]
    %v820 = vld [vmem:[%s1 + $0x18b0] sm:$0xff]
    %v821 = vld [vmem:[%s1 + $0x18b8] sm:$0xff]
    %v822 = vld [vmem:[%s1 + $0x18c0] sm:$0xff]
    %v823 = vld [vmem:[%s1 + $0x18c8] sm:$0xff]
    %v824 = vld [vmem:[%s1 + $0x18d0] sm:$0xff]
    %v825 = vld [vmem:[%s1 + $0x18d8] sm:$0xff]
    %v826 = vld [vmem:[%s1 + $0x18e0] sm:$0xff]
    %v827 = vld [vmem:[%s1 + $0x18e8] sm:$0xff]
    %v828 = vld [vmem:[%s1 + $0x18f0] sm:$0xff]
    %v829 = vld [vmem:[%s1 + $0x18f8] sm:$0xff]
    %v830 = vld [vmem:[%s1 + $0x1900] sm:$0xff]
    %v831 = vld [vmem:[%s1 + $0x1908] sm:$0xff]
    %v832 = vld [vmem:[%s1 + $0x1910] sm:$0xff]
    %v833 = vld [vmem:[%s1 + $0x1918] sm:$0xff]
    %v834 = vld [vmem:[%s1 + $0x1920] sm:$0xff]
    %v835 = vld [vmem:[%s1 + $0x1928] sm:$0xff]
    %v836 = vld [vmem:[%s1 + $0x1930] sm:$0xff]
    %v837 = vld [vmem:[%s1 + $0x1938] sm:$0xff]
    %v838 = vld [vmem:[%s1 + $0x1940] sm:$0xff]
    %v839 = vld [vmem:[%s1 + $0x1948] sm:$0xff]
    %v840 = vld [vmem:[%s1 + $0x1950] sm:$0xff]
    %v841 = vld [vmem:[%s1 + $0x1958] sm:$0xff]
    %v842 = vld [vmem:[%s1 + $0x1960] sm:$0xff]
    %v843 = vld [vmem:[%s1 + $0x1968] sm:$0xff]
    %v844 = vld [vmem:[%s1 + $0x1970] sm:$0xff]
    %v845 = vld [vmem:[%s1 + $0x1978] sm:$0xff]
    %v846 = vld [vmem:[%s1 + $0x1980] sm:$0xff]
    %v847 = vld [vmem:[%s1 + $0x1988] sm:$0xff]
    %v848 = vld [vmem:[%s1 + $0x1990] sm:$0xff]
    %v849 = vld [vmem:[%s1 + $0x1998] sm:$0xff]
    %v850 = vld [vmem:[%s1 + $0x19a0] sm:$0xff]
    %v851 = vld [vmem:[%s1 + $0x19a8] sm:$0xff]
    %v852 = vld [vmem:[%s1 + $0x19b0] sm:$0xff]
    %v853 = vld [vmem:[%s1 + $0x19b8] sm:$0xff]
    %v854 = vld [vmem:[%s1 + $0x19c0] sm:$0xff]
    %v855 = vld [vmem:[%s1 + $0x19c8] sm:$0xff]
    %v856 = vld [vmem:[%s1 + $0x19d0] sm:$0xff]
    %v857 = vld [vmem:[%s1 + $0x19d8] sm:$0xff]
    %v858 = vld [vmem:[%s1 + $0x19e0] sm:$0xff]
    %v859 = vld [vmem:[%s1 + $0x19e8] sm:$0xff]
    %v860 = vld [vmem:[%s1 + $0x19f0] sm:$0xff]
    %v861 = vld [vmem:[%s1 + $0x19f8] sm:$0xff]
    %v862 = vld [vmem:[%s1 + $0x1a00] sm:$0xff]
    %v863 = vld [vmem:[%s1 + $0x1a08] sm:$0xff]
    %v864 = vld [vmem:[%s1 + $0x1a10] sm:$0xff]
    %v865 = vld [vmem:[%s1 + $0x1a18] sm:$0xff]
    %v866 = vld [vmem:[%s1 + $0x1a20] sm:$0xff]
    %v867 = vld [vmem:[%s1 + $0x1a28] sm:$0xff]
    %v868 = vld [vmem:[%s1 + $0x1a30] sm:$0xff]
    %v869 = vld [vmem:[%s1 + $0x1a38] sm:$0xff]
    %v870 = vld [vmem:[%s1 + $0x1a40] sm:$0xff]
    %v871 = vld [vmem:[%s1 + $0x1a48] sm:$0xff]
    %v872 = vld [vmem:[%s1 + $0x1a50] sm:$0xff]
    %v873 = vld [vmem:[%s1 + $0x1a58] sm:$0xff]
    %v874 = vld [vmem:[%s1 + $0x1a60] sm:$0xff]
    %v875 = vld [vmem:[%s1 + $0x1a68] sm:$0xff]
    %v876 = vld [vmem:[%s1 + $0x1a70] sm:$0xff]
    %v877 = vld [vmem:[%s1 + $0x1a78] sm:$0xff]
    %v878 = vld [vmem:[%s1 + $0x1a80] sm:$0xff]
    %v879 = vld [vmem:[%s1 + $0x1a88] sm:$0xff]
    %v880 = vld [vmem:[%s1 + $0x1a90] sm:$0xff]
    %v881 = vld [vmem:[%s1 + $0x1a98] sm:$0xff]
    %v882 = vld [vmem:[%s1 + $0x1aa0] sm:$0xff]
    %v883 = vld [vmem:[%s1 + $0x1aa8] sm:$0xff]
    %v884 = vld [vmem:[%s1 + $0x1ab0] sm:$0xf]
    %v885 = vld [vmem:[%s1 + $0x1ab8] sm:$0xf]
    %v886 = vld [vmem:[%s1 + $0x1ac0] sm:$0xf]
    %v887 = vld [vmem:[%s1 + $0x1ac8] sm:$0xf]
    %v888 = vld [vmem:[%s1 + $0x1ad0] sm:$0xf]
    %v889 = vld [vmem:[%s1 + $0x1ad8] sm:$0xf]
    %v890 = vld [vmem:[%s1 + $0x1ae0] sm:$0xf]
    %v891 = vld [vmem:[%s0] sm:$0xff]
    %v892 = vld [vmem:[%s0 + $0x8] sm:$0xff]
    %v893 = vld [vmem:[%s0 + $0x10] sm:$0xff]
    %v894 = vld [vmem:[%s0 + $0x18] sm:$0xff]
    %v895 = vld [vmem:[%s0 + $0x20] sm:$0xff]
    %v896 = vld [vmem:[%s0 + $0x28] sm:$0xff]
    %v897 = vld [vmem:[%s0 + $0x30] sm:$0xff]
    %v898 = vld [vmem:[%s0 + $0x38] sm:$0xff]
    %v899 = vld [vmem:[%s0 + $0x40] sm:$0xff]
    %v900 = vld [vmem:[%s0 + $0x48] sm:$0xff]
    %v901 = vld [vmem:[%s0 + $0x50] sm:$0xff]
    %v902 = vld [vmem:[%s0 + $0x58] sm:$0xff]
    %v903 = vld [vmem:[%s0 + $0x60] sm:$0xff]
    %v904 = vld [vmem:[%s0 + $0x68] sm:$0xff]
    %v905 = vld [vmem:[%s0 + $0x70] sm:$0xff]
    %v906 = vld [vmem:[%s0 + $0x78] sm:$0xff]
    %v907 = vld [vmem:[%s0 + $0x80] sm:$0xff]
    %v908 = vld [vmem:[%s0 + $0x88] sm:$0xff]
    %v909 = vld [vmem:[%s0 + $0x90] sm:$0xff]
    %v910 = vld [vmem:[%s0 + $0x98] sm:$0xff]
    %v911 = vld [vmem:[%s0 + $0xa0] sm:$0xff]
    %v912 = vld [vmem:[%s0 + $0xa8] sm:$0xff]
    %v913 = vld [vmem:[%s0 + $0xb0] sm:$0xff]
    %v914 = vld [vmem:[%s0 + $0xb8] sm:$0xff]
    %v915 = vld [vmem:[%s0 + $0xc0] sm:$0xff]
    %v916 = vld [vmem:[%s0 + $0xc8] sm:$0xff]
    %v917 = vld [vmem:[%s0 + $0xd0] sm:$0xff]
    %v918 = vld [vmem:[%s0 + $0xd8] sm:$0xff]
    %v919 = vld [vmem:[%s0 + $0xe0] sm:$0xff]
    %v920 = vld [vmem:[%s0 + $0xe8] sm:$0xff]
    %v921 = vld [vmem:[%s0 + $0xf0] sm:$0xff]
    %v922 = vld [vmem:[%s0 + $0xf8] sm:$0xff]
    %v923 = vld [vmem:[%s0 + $0x100] sm:$0xff]
    %v924 = vld [vmem:[%s0 + $0x108] sm:$0xff]
    %v925 = vld [vmem:[%s0 + $0x110] sm:$0xff]
    %v926 = vld [vmem:[%s0 + $0x118] sm:$0xff]
    %v927 = vld [vmem:[%s0 + $0x120] sm:$0xff]
    %v928 = vld [vmem:[%s0 + $0x128] sm:$0xff]
    %v929 = vld [vmem:[%s0 + $0x130] sm:$0xff]
    %v930 = vld [vmem:[%s0 + $0x138] sm:$0xff]
    %v931 = vld [vmem:[%s0 + $0x140] sm:$0xff]
    %v932 = vld [vmem:[%s0 + $0x148] sm:$0xff]
    %v933 = vld [vmem:[%s0 + $0x150] sm:$0xff]
    %v934 = vld [vmem:[%s0 + $0x158] sm:$0xff]
    %v935 = vld [vmem:[%s0 + $0x160] sm:$0xff]
    %v936 = vld [vmem:[%s0 + $0x168] sm:$0xff]
    %v937 = vld [vmem:[%s0 + $0x170] sm:$0xff]
    %v938 = vld [vmem:[%s0 + $0x178] sm:$0xff]
    %v939 = vld [vmem:[%s0 + $0x180] sm:$0xff]
    %v940 = vld [vmem:[%s0 + $0x188] sm:$0xff]
    %v941 = vld [vmem:[%s0 + $0x190] sm:$0xff]
    %v942 = vld [vmem:[%s0 + $0x198] sm:$0xff]
    %v943 = vld [vmem:[%s0 + $0x1a0] sm:$0xff]
    %v944 = vld [vmem:[%s0 + $0x1a8] sm:$0xff]
    %v945 = vld [vmem:[%s0 + $0x1b0] sm:$0xff]
    %v946 = vld [vmem:[%s0 + $0x1b8] sm:$0xff]
    %v947 = vld [vmem:[%s0 + $0x1c0] sm:$0xff]
    %v948 = vld [vmem:[%s0 + $0x1c8] sm:$0xff]
    %v949 = vld [vmem:[%s0 + $0x1d0] sm:$0xff]
    %v950 = vld [vmem:[%s0 + $0x1d8] sm:$0xff]
    %v951 = vld [vmem:[%s0 + $0x1e0] sm:$0xff]
    %v952 = vld [vmem:[%s0 + $0x1e8] sm:$0xff]
    %v953 = vld [vmem:[%s0 + $0x1f0] sm:$0xff]
    %v954 = vld [vmem:[%s0 + $0x1f8] sm:$0xff]
    %v955 = vld [vmem:[%s0 + $0x200] sm:$0xff]
    %v956 = vld [vmem:[%s0 + $0x208] sm:$0xff]
    %v957 = vld [vmem:[%s0 + $0x210] sm:$0xff]
    %v958 = vld [vmem:[%s0 + $0x218] sm:$0xff]
    %v959 = vld [vmem:[%s0 + $0x220] sm:$0xff]
    %v960 = vld [vmem:[%s0 + $0x228] sm:$0xff]
    %v961 = vld [vmem:[%s0 + $0x230] sm:$0xff]
    %v962 = vld [vmem:[%s0 + $0x238] sm:$0xff]
    %v963 = vld [vmem:[%s0 + $0x240] sm:$0xff]
    %v964 = vld [vmem:[%s0 + $0x248] sm:$0xff]
    %v965 = vld [vmem:[%s0 + $0x250] sm:$0xff]
    %v966 = vld [vmem:[%s0 + $0x258] sm:$0xff]
    %v967 = vld [vmem:[%s0 + $0x260] sm:$0xff]
    %v968 = vld [vmem:[%s0 + $0x268] sm:$0xff]
    %v969 = vld [vmem:[%s0 + $0x270] sm:$0xff]
    %v970 = vld [vmem:[%s0 + $0x278] sm:$0xff]
    %v971 = vld [vmem:[%s0 + $0x280] sm:$0xff]
    %v972 = vld [vmem:[%s0 + $0x288] sm:$0xff]
    %v973 = vld [vmem:[%s0 + $0x290] sm:$0xff]
    %v974 = vld [vmem:[%s0 + $0x298] sm:$0xff]
    %v975 = vld [vmem:[%s0 + $0x2a0] sm:$0xff]
    %v976 = vld [vmem:[%s0 + $0x2a8] sm:$0xff]
    %v977 = vld [vmem:[%s0 + $0x2b0] sm:$0xff]
    %v978 = vld [vmem:[%s0 + $0x2b8] sm:$0xff]
    %v979 = vld [vmem:[%s0 + $0x2c0] sm:$0xff]
    %v980 = vld [vmem:[%s0 + $0x2c8] sm:$0xff]
    %v981 = vld [vmem:[%s0 + $0x2d0] sm:$0xff]
    %v982 = vld [vmem:[%s0 + $0x2d8] sm:$0xff]
    %v983 = vld [vmem:[%s0 + $0x2e0] sm:$0xff]
    %v984 = vld [vmem:[%s0 + $0x2e8] sm:$0xff]
    %v985 = vld [vmem:[%s0 + $0x2f0] sm:$0xff]
    %v986 = vld [vmem:[%s0 + $0x2f8] sm:$0xff]
    %v987 = vld [vmem:[%s0 + $0x300] sm:$0xff]
    %v988 = vld [vmem:[%s0 + $0x308] sm:$0xff]
    %vm989 = vcmask 130048
    %v991 = vsel %vm989, %v36, 0
    %v994 = vsel %vm989, %v43, 0
    %v997 = vsel %vm989, %v50, 0
    %v1000 = vsel %vm989, %v57, 0
    %v1003 = vsel %vm989, %v64, 0
    %v1006 = vsel %vm989, %v71, 0
    %v1009 = vsel %vm989, %v78, 0
    %v1012 = vsel %vm989, %v85, 0
    %v1015 = vsel %vm989, %v92, 0
    %v1018 = vsel %vm989, %v99, 0
    %v1021 = vsel %vm989, %v106, 0
    %v1024 = vsel %vm989, %v113, 0
    %v1027 = vsel %vm989, %v120, 0
    %v1030 = vsel %vm989, %v127, 0
    %v1033 = vsel %vm989, %v134, 0
    %v1036 = vsel %vm989, %v141, 0
    %v1039 = vsel %vm989, %v148, 0
    %v1042 = vsel %vm989, %v155, 0
    %v1045 = vsel %vm989, %v162, 0
    %v1048 = vsel %vm989, %v169, 0
    %v1051 = vsel %vm989, %v176, 0
    %v1054 = vsel %vm989, %v183, 0
    %v1057 = vsel %vm989, %v190, 0
    %v1060 = vsel %vm989, %v197, 0
    %v1063 = vsel %vm989, %v204, 0
    %v1066 = vsel %vm989, %v211, 0
    %v1069 = vsel %vm989, %v218, 0
    %v1072 = vsel %vm989, %v225, 0
    %v1075 = vsel %vm989, %v232, 0
    %v1078 = vsel %vm989, %v239, 0
    %v1081 = vsel %vm989, %v246, 0
    %v1084 = vsel %vm989, %v253, 0
    %v1087 = vsel %vm989, %v260, 0
    %v1090 = vsel %vm989, %v267, 0
    %v1093 = vsel %vm989, %v274, 0
    %v1096 = vsel %vm989, %v281, 0
    %v1099 = vsel %vm989, %v288, 0
    %v1102 = vsel %vm989, %v295, 0
    %v1105 = vsel %vm989, %v302, 0
    %v1108 = vsel %vm989, %v309, 0
    %v1111 = vsel %vm989, %v316, 0
    %v1114 = vsel %vm989, %v323, 0
    %v1117 = vsel %vm989, %v330, 0
    %v1120 = vsel %vm989, %v337, 0
    %v1123 = vsel %vm989, %v344, 0
    %v1126 = vsel %vm989, %v351, 0
    %v1129 = vsel %vm989, %v358, 0
    %v1132 = vsel %vm989, %v365, 0
    %v1135 = vsel %vm989, %v372, 0
    %v1138 = vsel %vm989, %v379, 0
    %v1141 = vsel %vm989, %v386, 0
    %v1144 = vsel %vm989, %v393, 0
    %v1147 = vsel %vm989, %v400, 0
    %v1150 = vsel %vm989, %v407, 0
    %v1153 = vsel %vm989, %v414, 0
    %v1156 = vsel %vm989, %v421, 0
    %v1159 = vsel %vm989, %v428, 0
    %v1162 = vsel %vm989, %v435, 0
    %v1165 = vsel %vm989, %v442, 0
    %v1168 = vsel %vm989, %v449, 0
    %v1171 = vsel %vm989, %v456, 0
    %v1174 = vsel %vm989, %v463, 0
    %v1177 = vsel %vm989, %v470, 0
    %v1180 = vsel %vm989, %v477, 0
    %v1183 = vsel %vm989, %v484, 0
    %v1186 = vsel %vm989, %v491, 0
    %v1189 = vsel %vm989, %v498, 0
    %v1192 = vsel %vm989, %v505, 0
    %v1195 = vsel %vm989, %v512, 0
    %v1198 = vsel %vm989, %v519, 0
    %v1201 = vsel %vm989, %v526, 0
    %v1204 = vsel %vm989, %v533, 0
    %v1207 = vsel %vm989, %v540, 0
    %v1210 = vsel %vm989, %v547, 0
    %v1213 = vsel %vm989, %v554, 0
    %v1216 = vsel %vm989, %v561, 0
    %v1219 = vsel %vm989, %v568, 0
    %v1222 = vsel %vm989, %v575, 0
    %v1225 = vsel %vm989, %v582, 0
    %v1228 = vsel %vm989, %v589, 0
    %v1231 = vsel %vm989, %v596, 0
    %v1234 = vsel %vm989, %v603, 0
    %v1237 = vsel %vm989, %v610, 0
    %v1240 = vsel %vm989, %v617, 0
    %v1243 = vsel %vm989, %v624, 0
    %v1246 = vsel %vm989, %v631, 0
    %v1249 = vsel %vm989, %v638, 0
    %v1252 = vsel %vm989, %v645, 0
    %v1255 = vsel %vm989, %v652, 0
    %v1258 = vsel %vm989, %v659, 0
    %v1261 = vsel %vm989, %v666, 0
    %v1264 = vsel %vm989, %v673, 0
    %v1267 = vsel %vm989, %v680, 0
    %v1270 = vsel %vm989, %v687, 0
    %v1273 = vsel %vm989, %v694, 0
    %v1276 = vsel %vm989, %v701, 0
    %v1279 = vsel %vm989, %v708, 0
    %v1282 = vsel %vm989, %v715, 0
    %v1285 = vsel %vm989, %v722, 0
    %v1288 = vsel %vm989, %v729, 0
    %v1291 = vsel %vm989, %v736, 0
    %v1294 = vsel %vm989, %v743, 0
    %v1297 = vsel %vm989, %v750, 0
    %v1300 = vsel %vm989, %v757, 0
    %v1303 = vsel %vm989, %v764, 0
    %v1306 = vsel %vm989, %v771, 0
    %v1309 = vsel %vm989, %v778, 0
    %v1312 = vsel %vm989, %v785, 0
    %v1315 = vsel %vm989, %v792, 0
    %v1318 = vsel %vm989, %v799, 0
    %v1321 = vsel %vm989, %v806, 0
    %v1324 = vsel %vm989, %v813, 0
    %v1327 = vsel %vm989, %v820, 0
    %v1330 = vsel %vm989, %v827, 0
    %v1333 = vsel %vm989, %v834, 0
    %v1336 = vsel %vm989, %v841, 0
    %v1339 = vsel %vm989, %v848, 0
    %v1342 = vsel %vm989, %v855, 0
    %v1345 = vsel %vm989, %v862, 0
    %v1348 = vsel %vm989, %v869, 0
    %v1351 = vsel %vm989, %v876, 0
    %v1354 = vsel %vm989, %v883, 0
    %v1357 = vsel %vm989, %v890, 0
    %1359 = vmatprep.subr.mxu0 0.0
    %1360 = vmatpush1.msra.mxu0 %v891
    %1361 = vmatprep.subr.mxu0 0.0
    %1362 = vmatpush1.msra.mxu0 %v892
    %1363 = vmatprep.subr.mxu0 0.0
    %1364 = vmatpush1.msra.mxu0 %v893
    %1365 = vmatprep.subr.mxu0 0.0
    %1366 = vmatpush1.msra.mxu0 %v894
    %1367 = vmatprep.subr.mxu0 0.0
    %1368 = vmatpush1.msra.mxu0 %v895
    %1369 = vmatprep.subr.mxu0 0.0
    %1370 = vmatpush1.msra.mxu0 %v896
    %1371 = vmatprep.subr.mxu0 0.0
    %1372 = vmatpush1.msra.mxu0 %v897
    %1373 = vmatprep.subr.mxu0 0.0
    %1374 = vmatpush1.msra.mxu0 %v898
    %1375 = vmatprep.subr.mxu0 0.0
    %1376 = vmatpush1.msra.mxu0 %v899
    %1377 = vmatprep.subr.mxu0 0.0
    %1378 = vmatpush1.msra.mxu0 %v900
    %1379 = vmatprep.subr.mxu0 0.0
    %1380 = vmatpush1.msra.mxu0 %v901
    %1381 = vmatprep.subr.mxu0 0.0
    %1382 = vmatpush1.msra.mxu0 %v902
    %1383 = vmatprep.subr.mxu0 0.0
    %1384 = vmatpush1.msra.mxu0 %v903
    %1385 = vmatprep.subr.mxu0 0.0
    %1386 = vmatpush1.msra.mxu0 %v904
    %1387 = vmatprep.subr.mxu0 0.0
    %1388 = vmatpush1.msra.mxu0 %v905
    %1389 = vmatprep.subr.mxu0 0.0
    %1390 = vmatpush1.msra.mxu0 %v906
    %1391 = vmatprep.subr.mxu0 0.0
    %1392 = vmatpush1.msra.mxu0 %v907
    %1393 = vmatprep.subr.mxu0 0.0
    %1394 = vmatpush1.msra.mxu0 %v908
    %1395 = vmatprep.subr.mxu0 0.0
    %1396 = vmatpush1.msra.mxu0 %v909
    %1397 = vmatprep.subr.mxu0 0.0
    %1398 = vmatpush1.msra.mxu0 %v910
    %1399 = vmatprep.subr.mxu0 0.0
    %1400 = vmatpush1.msra.mxu0 %v911
    %1401 = vmatprep.subr.mxu0 0.0
    %1402 = vmatpush1.msra.mxu0 %v912
    %1403 = vmatprep.subr.mxu0 0.0
    %1404 = vmatpush1.msra.mxu0 %v913
    %1405 = vmatprep.subr.mxu0 0.0
    %1406 = vmatpush1.msra.mxu0 %v914
    %1407 = vmatprep.subr.mxu0 0.0
    %1408 = vmatpush1.msra.mxu0 %v915
    %1409 = vmatprep.subr.mxu0 0.0
    %1410 = vmatpush1.msra.mxu0 %v916
    %1411 = vmatprep.subr.mxu0 0.0
    %1412 = vmatpush1.msra.mxu0 %v917
    %1413 = vmatprep.subr.mxu0 0.0
    %1414 = vmatpush1.msra.mxu0 %v918
    %1415 = vmatprep.subr.mxu0 0.0
    %1416 = vmatpush1.msra.mxu0 %v919
    %1417 = vmatprep.subr.mxu0 0.0
    %1418 = vmatpush1.msra.mxu0 %v920
    %1419 = vmatprep.subr.mxu0 0.0
    %1420 = vmatpush1.msra.mxu0 %v921
    %1421 = vmatprep.subr.mxu0 0.0
    %1422 = vmatpush1.msra.mxu0 %v922
    %1423 = vmatprep.mubr.f32.mxu0 %v31
    %1424 = vmatmul.mubr.f32.gmra.mrb[0].mxu0 %v30
    %v1425 = vpop.f32.mrb[0].mxu0
    %v1426 = vadd.f32 0.0, %v1425
    %v1427 = vpop.f32.mrb[0].mxu0
    %1428 = vmatprep.mubr.f32.mxu0 %v38
    %1429 = vmatmul.mubr.f32.gmra.mrb[0].mxu0 %v37
    %v1430 = vpop.f32.mrb[0].mxu0
    %v1431 = vadd.f32 0.0, %v1430
    %v1432 = vpop.f32.mrb[0].mxu0
    %1433 = vmatprep.mubr.f32.mxu0 %v45
    %1434 = vmatmul.mubr.f32.gmra.mrb[0].mxu0 %v44
    %v1435 = vpop.f32.mrb[0].mxu0
    %v1436 = vadd.f32 0.0, %v1435
    %v1437 = vpop.f32.mrb[0].mxu0
    %1438 = vmatprep.mubr.f32.mxu0 %v52
    %1439 = vmatmul.mubr.f32.gmra.mrb[0].mxu0 %v51
    %v1440 = vpop.f32.mrb[0].mxu0
    %v1441 = vadd.f32 0.0, %v1440
    %v1442 = vpop.f32.mrb[0].mxu0
    %1443 = vmatprep.mubr.f32.mxu0 %v59
    %1444 = vmatmul.mubr.f32.gmra.mrb[0].mxu0 %v58
    %v1445 = vpop.f32.mrb[0].mxu0
    %v1446 = vadd.f32 0.0, %v1445
    %v1447 = vpop.f32.mrb[0].mxu0
    %1448 = vmatprep.mubr.f32.mxu0 %v66
    %1449 = vmatmul.mubr.f32.gmra.mrb[0].mxu0 %v65
    %v1450 = vpop.f32.mrb[0].mxu0
    %v1451 = vadd.f32 0.0, %v1450
    %v1452 = vpop.f32.mrb[0].mxu0
    %1453 = vmatprep.mubr.f32.mxu0 %v73
    %1454 = vmatmul.mubr.f32.gmra.mrb[0].mxu0 %v72
    %v1455 = vpop.f32.mrb[0].mxu0
    %v1456 = vadd.f32 0.0, %v1455
    %v1457 = vpop.f32.mrb[0].mxu0
    %1458 = vmatprep.mubr.f32.mxu0 %v80
    %1459 = vmatmul.mubr.f32.gmra.mrb[0].mxu0 %v79
    %v1460 = vpop.f32.mrb[0].mxu0
    %v1461 = vadd.f32 0.0, %v1460
    %v1462 = vpop.f32.mrb[0].mxu0
    %1463 = vmatprep.mubr.f32.mxu0 %v87
    %1464 = vmatmul.mubr.f32.gmra.mrb[0].mxu0 %v86
    %v1465 = vpop.f32.mrb[0].mxu0
    %v1466 = vadd.f32 0.0, %v1465
    %v1467 = vpop.f32.mrb[0].mxu0
    %1468 = vmatprep.mubr.f32.mxu0 %v94
    %1469 = vmatmul.mubr.f32.gmra.mrb[0].mxu0 %v93
    %v1470 = vpop.f32.mrb[0].mxu0
    %v1471 = vadd.f32 0.0, %v1470
    %v1472 = vpop.f32.mrb[0].mxu0
    %1473 = vmatprep.mubr.f32.mxu0 %v101
    %1474 = vmatmul.mubr.f32.gmra.mrb[0].mxu0 %v100
    %v1475 = vpop.f32.mrb[0].mxu0
    %v1476 = vadd.f32 0.0, %v1475
    %v1477 = vpop.f32.mrb[0].mxu0
    %1478 = vmatprep.mubr.f32.mxu0 %v108
    %1479 = vmatmul.mubr.f32.gmra.mrb[0].mxu0 %v107
    %v1480 = vpop.f32.mrb[0].mxu0
    %v1481 = vadd.f32 0.0, %v1480
    %v1482 = vpop.f32.mrb[0].mxu0
    %1483 = vmatprep.mubr.f32.mxu0 %v115
    %1484 = vmatmul.mubr.f32.gmra.mrb[0].mxu0 %v114
    %v1485 = vpop.f32.mrb[0].mxu0
    %v1486 = vadd.f32 0.0, %v1485
    %v1487 = vpop.f32.mrb[0].mxu0
    %1488 = vmatprep.mubr.f32.mxu0 %v122
    %1489 = vmatmul.mubr.f32.gmra.mrb[0].mxu0 %v121
    %v1490 = vpop.f32.mrb[0].mxu0
    %v1491 = vadd.f32 0.0, %v1490
    %v1492 = vpop.f32.mrb[0].mxu0
    %1493 = vmatprep.mubr.f32.mxu0 %v129
    %1494 = vmatmul.mubr.f32.gmra.mrb[0].mxu0 %v128
    %v1495 = vpop.f32.mrb[0].mxu0
    %v1496 = vadd.f32 0.0, %v1495
    %v1497 = vpop.f32.mrb[0].mxu0
    %1498 = vmatprep.mubr.f32.mxu0 %v136
    %1499 = vmatmul.mubr.f32.gmra.mrb[0].mxu0 %v135
    %v1500 = vpop.f32.mrb[0].mxu0
    %v1501 = vadd.f32 0.0, %v1500
    %v1502 = vpop.f32.mrb[0].mxu0
    %1503 = vmatprep.mubr.f32.mxu0 %v143
    %1504 = vmatmul.mubr.f32.gmra.mrb[0].mxu0 %v142
    %v1505 = vpop.f32.mrb[0].mxu0
    %v1506 = vadd.f32 0.0, %v1505
    %v1507 = vpop.f32.mrb[0].mxu0
    %1508 = vmatprep.mubr.f32.mxu0 %v150
    %1509 = vmatmul.mubr.f32.gmra.mrb[0].mxu0 %v149
    %v1510 = vpop.f32.mrb[0].mxu0
    %v1511 = vadd.f32 0.0, %v1510
    %v1512 = vpop.f32.mrb[0].mxu0
    %1513 = vmatprep.mubr.f32.mxu0 %v157
    %1514 = vmatmul.mubr.f32.gmra.mrb[0].mxu0 %v156
    %v1515 = vpop.f32.mrb[0].mxu0
    %v1516 = vadd.f32 0.0, %v1515
    %v1517 = vpop.f32.mrb[0].mxu0
    %1518 = vmatprep.mubr.f32.mxu0 %v164
    %1519 = vmatmul.mubr.f32.gmra.mrb[0].mxu0 %v163
    %v1520 = vpop.f32.mrb[0].mxu0
    %v1521 = vadd.f32 0.0, %v1520
    %v1522 = vpop.f32.mrb[0].mxu0
    %1523 = vmatprep.mubr.f32.mxu0 %v171
    %1524 = vmatmul.mubr.f32.gmra.mrb[0].mxu0 %v170
    %v1525 = vpop.f32.mrb[0].mxu0
    %v1526 = vadd.f32 0.0, %v1525
    %v1527 = vpop.f32.mrb[0].mxu0
    %1528 = vmatprep.mubr.f32.mxu0 %v178
    %1529 = vmatmul.mubr.f32.gmra.mrb[0].mxu0 %v177
    %v1530 = vpop.f32.mrb[0].mxu0
    %v1531 = vadd.f32 0.0, %v1530
    %v1532 = vpop.f32.mrb[0].mxu0
    %1533 = vmatprep.mubr.f32.mxu0 %v185
    %1534 = vmatmul.mubr.f32.gmra.mrb[0].mxu0 %v184
    %v1535 = vpop.f32.mrb[0].mxu0
    %v1536 = vadd.f32 0.0, %v1535
    %v1537 = vpop.f32.mrb[0].mxu0
    %1538 = vmatprep.mubr.f32.mxu0 %v192
    %1539 = vmatmul.mubr.f32.gmra.mrb[0].mxu0 %v191
    %v1540 = vpop.f32.mrb[0].mxu0
    %v1541 = vadd.f32 0.0, %v1540
    %v1542 = vpop.f32.mrb[0].mxu0
    %1543 = vmatprep.mubr.f32.mxu0 %v199
    %1544 = vmatmul.mubr.f32.gmra.mrb[0].mxu0 %v198
    %v1545 = vpop.f32.mrb[0].mxu0
    %v1546 = vadd.f32 0.0, %v1545
    %v1547 = vpop.f32.mrb[0].mxu0
    %1548 = vmatprep.mubr.f32.mxu0 %v206
    %1549 = vmatmul.mubr.f32.gmra.mrb[0].mxu0 %v205
    %v1550 = vpop.f32.mrb[0].mxu0
    %v1551 = vadd.f32 0.0, %v1550
    %v1552 = vpop.f32.mrb[0].mxu0
    %1553 = vmatprep.mubr.f32.mxu0 %v213
    %1554 = vmatmul.mubr.f32.gmra.mrb[0].mxu0 %v212
    %v1555 = vpop.f32.mrb[0].mxu0
    %v1556 = vadd.f32 0.0, %v1555
    %v1557 = vpop.f32.mrb[0].mxu0
    %1558 = vmatprep.mubr.f32.mxu0 %v220
    %1559 = vmatmul.mubr.f32.gmra.mrb[0].mxu0 %v219
    %v1560 = vpop.f32.mrb[0].mxu0
    %v1561 = vadd.f32 0.0, %v1560
    %v1562 = vpop.f32.mrb[0].mxu0
    %1563 = vmatprep.mubr.f32.mxu0 %v227
    %1564 = vmatmul.mubr.f32.gmra.mrb[0].mxu0 %v226
    %v1565 = vpop.f32.mrb[0].mxu0
    %v1566 = vadd.f32 0.0, %v1565
    %v1567 = vpop.f32.mrb[0].mxu0
    %1568 = vmatprep.mubr.f32.mxu0 %v234
    %1569 = vmatmul.mubr.f32.gmra.mrb[0].mxu0 %v233
    %v1570 = vpop.f32.mrb[0].mxu0
    %v1571 = vadd.f32 0.0, %v1570
    %v1572 = vpop.f32.mrb[0].mxu0
    %1573 = vmatprep.mubr.f32.mxu0 %v241
    %1574 = vmatmul.mubr.f32.gmra.mrb[0].mxu0 %v240
    %v1575 = vpop.f32.mrb[0].mxu0
    %v1576 = vadd.f32 0.0, %v1575
    %v1577 = vpop.f32.mrb[0].mxu0
    %1578 = vmatprep.mubr.f32.mxu0 %v248
    %1579 = vmatmul.mubr.f32.gmra.mrb[0].mxu0 %v247
    %v1580 = vpop.f32.mrb[0].mxu0
    %v1581 = vadd.f32 0.0, %v1580
    %v1582 = vpop.f32.mrb[0].mxu0
    %1583 = vmatprep.mubr.f32.mxu0 %v255
    %1584 = vmatmul.mubr.f32.gmra.mrb[0].mxu0 %v254
    %v1585 = vpop.f32.mrb[0].mxu0
    %v1586 = vadd.f32 0.0, %v1585
    %v1587 = vpop.f32.mrb[0].mxu0
    %1588 = vmatprep.mubr.f32.mxu0 %v262
    %1589 = vmatmul.mubr.f32.gmra.mrb[0].mxu0 %v261
    %v1590 = vpop.f32.mrb[0].mxu0
    %v1591 = vadd.f32 0.0, %v1590
    %v1592 = vpop.f32.mrb[0].mxu0
    %1593 = vmatprep.mubr.f32.mxu0 %v269
    %1594 = vmatmul.mubr.f32.gmra.mrb[0].mxu0 %v268
    %v1595 = vpop.f32.mrb[0].mxu0
    %v1596 = vadd.f32 0.0, %v1595
    %v1597 = vpop.f32.mrb[0].mxu0
    %1598 = vmatprep.mubr.f32.mxu0 %v276
    %1599 = vmatmul.mubr.f32.gmra.mrb[0].mxu0 %v275
    %v1600 = vpop.f32.mrb[0].mxu0
    %v1601 = vadd.f32 0.0, %v1600
    %v1602 = vpop.f32.mrb[0].mxu0
    %1603 = vmatprep.mubr.f32.mxu0 %v283
    %1604 = vmatmul.mubr.f32.gmra.mrb[0].mxu0 %v282
    %v1605 = vpop.f32.mrb[0].mxu0
    %v1606 = vadd.f32 0.0, %v1605
    %v1607 = vpop.f32.mrb[0].mxu0
    %1608 = vmatprep.mubr.f32.mxu0 %v290
    %1609 = vmatmul.mubr.f32.gmra.mrb[0].mxu0 %v289
    %v1610 = vpop.f32.mrb[0].mxu0
    %v1611 = vadd.f32 0.0, %v1610
    %v1612 = vpop.f32.mrb[0].mxu0
    %1613 = vmatprep.mubr.f32.mxu0 %v297
    %1614 = vmatmul.mubr.f32.gmra.mrb[0].mxu0 %v296
    %v1615 = vpop.f32.mrb[0].mxu0
    %v1616 = vadd.f32 0.0, %v1615
    %v1617 = vpop.f32.mrb[0].mxu0
    %1618 = vmatprep.mubr.f32.mxu0 %v304
    %1619 = vmatmul.mubr.f32.gmra.mrb[0].mxu0 %v303
    %v1620 = vpop.f32.mrb[0].mxu0
    %v1621 = vadd.f32 0.0, %v1620
    %v1622 = vpop.f32.mrb[0].mxu0
    %1623 = vmatprep.mubr.f32.mxu0 %v311
    %1624 = vmatmul.mubr.f32.gmra.mrb[0].mxu0 %v310
    %v1625 = vpop.f32.mrb[0].mxu0
    %v1626 = vadd.f32 0.0, %v1625
    %v1627 = vpop.f32.mrb[0].mxu0
    %1628 = vmatprep.mubr.f32.mxu0 %v318
    %1629 = vmatmul.mubr.f32.gmra.mrb[0].mxu0 %v317
    %v1630 = vpop.f32.mrb[0].mxu0
    %v1631 = vadd.f32 0.0, %v1630
    %v1632 = vpop.f32.mrb[0].mxu0
    %1633 = vmatprep.mubr.f32.mxu0 %v325
    %1634 = vmatmul.mubr.f32.gmra.mrb[0].mxu0 %v324
    %v1635 = vpop.f32.mrb[0].mxu0
    %v1636 = vadd.f32 0.0, %v1635
    %v1637 = vpop.f32.mrb[0].mxu0
    %1638 = vmatprep.mubr.f32.mxu0 %v332
    %1639 = vmatmul.mubr.f32.gmra.mrb[0].mxu0 %v331
    %v1640 = vpop.f32.mrb[0].mxu0
    %v1641 = vadd.f32 0.0, %v1640
    %v1642 = vpop.f32.mrb[0].mxu0
    %1643 = vmatprep.mubr.f32.mxu0 %v339
    %1644 = vmatmul.mubr.f32.gmra.mrb[0].mxu0 %v338
    %v1645 = vpop.f32.mrb[0].mxu0
    %v1646 = vadd.f32 0.0, %v1645
    %v1647 = vpop.f32.mrb[0].mxu0
    %1648 = vmatprep.mubr.f32.mxu0 %v346
    %1649 = vmatmul.mubr.f32.gmra.mrb[0].mxu0 %v345
    %v1650 = vpop.f32.mrb[0].mxu0
    %v1651 = vadd.f32 0.0, %v1650
    %v1652 = vpop.f32.mrb[0].mxu0
    %1653 = vmatprep.mubr.f32.mxu0 %v353
    %1654 = vmatmul.mubr.f32.gmra.mrb[0].mxu0 %v352
    %v1655 = vpop.f32.mrb[0].mxu0
    %v1656 = vadd.f32 0.0, %v1655
    %v1657 = vpop.f32.mrb[0].mxu0
    %1658 = vmatprep.mubr.f32.mxu0 %v360
    %1659 = vmatmul.mubr.f32.gmra.mrb[0].mxu0 %v359
    %v1660 = vpop.f32.mrb[0].mxu0
    %v1661 = vadd.f32 0.0, %v1660
    %v1662 = vpop.f32.mrb[0].mxu0
    %1663 = vmatprep.mubr.f32.mxu0 %v367
    %1664 = vmatmul.mubr.f32.gmra.mrb[0].mxu0 %v366
    %v1665 = vpop.f32.mrb[0].mxu0
    %v1666 = vadd.f32 0.0, %v1665
    %v1667 = vpop.f32.mrb[0].mxu0
    %1668 = vmatprep.mubr.f32.mxu0 %v374
    %1669 = vmatmul.mubr.f32.gmra.mrb[0].mxu0 %v373
    %v1670 = vpop.f32.mrb[0].mxu0
    %v1671 = vadd.f32 0.0, %v1670
    %v1672 = vpop.f32.mrb[0].mxu0
    %1673 = vmatprep.mubr.f32.mxu0 %v381
    %1674 = vmatmul.mubr.f32.gmra.mrb[0].mxu0 %v380
    %v1675 = vpop.f32.mrb[0].mxu0
    %v1676 = vadd.f32 0.0, %v1675
    %v1677 = vpop.f32.mrb[0].mxu0
    %1678 = vmatprep.mubr.f32.mxu0 %v388
    %1679 = vmatmul.mubr.f32.gmra.mrb[0].mxu0 %v387
    %v1680 = vpop.f32.mrb[0].mxu0
    %v1681 = vadd.f32 0.0, %v1680
    %v1682 = vpop.f32.mrb[0].mxu0
    %1683 = vmatprep.mubr.f32.mxu0 %v395
    %1684 = vmatmul.mubr.f32.gmra.mrb[0].mxu0 %v394
    %v1685 = vpop.f32.mrb[0].mxu0
    %v1686 = vadd.f32 0.0, %v1685
    %v1687 = vpop.f32.mrb[0].mxu0
    %1688 = vmatprep.mubr.f32.mxu0 %v402
    %1689 = vmatmul.mubr.f32.gmra.mrb[0].mxu0 %v401
    %v1690 = vpop.f32.mrb[0].mxu0
    %v1691 = vadd.f32 0.0, %v1690
    %v1692 = vpop.f32.mrb[0].mxu0
    %1693 = vmatprep.mubr.f32.mxu0 %v409
    %1694 = vmatmul.mubr.f32.gmra.mrb[0].mxu0 %v408
    %v1695 = vpop.f32.mrb[0].mxu0
    %v1696 = vadd.f32 0.0, %v1695
    %v1697 = vpop.f32.mrb[0].mxu0
    %1698 = vmatprep.mubr.f32.mxu0 %v416
    %1699 = vmatmul.mubr.f32.gmra.mrb[0].mxu0 %v415
    %v1700 = vpop.f32.mrb[0].mxu0
    %v1701 = vadd.f32 0.0, %v1700
    %v1702 = vpop.f32.mrb[0].mxu0
    %1703 = vmatprep.mubr.f32.mxu0 %v423
    %1704 = vmatmul.mubr.f32.gmra.mrb[0].mxu0 %v422
    %v1705 = vpop.f32.mrb[0].mxu0
    %v1706 = vadd.f32 0.0, %v1705
    %v1707 = vpop.f32.mrb[0].mxu0
    %1708 = vmatprep.mubr.f32.mxu0 %v430
    %1709 = vmatmul.mubr.f32.gmra.mrb[0].mxu0 %v429
    %v1710 = vpop.f32.mrb[0].mxu0
    %v1711 = vadd.f32 0.0, %v1710
    %v1712 = vpop.f32.mrb[0].mxu0
    %1713 = vmatprep.mubr.f32.mxu0 %v437
    %1714 = vmatmul.mubr.f32.gmra.mrb[0].mxu0 %v436
    %v1715 = vpop.f32.mrb[0].mxu0
    %v1716 = vadd.f32 0.0, %v1715
    %v1717 = vpop.f32.mrb[0].mxu0
    %1718 = vmatprep.mubr.f32.mxu0 %v444
    %1719 = vmatmul.mubr.f32.gmra.mrb[0].mxu0 %v443
    %v1720 = vpop.f32.mrb[0].mxu0
    %v1721 = vadd.f32 0.0, %v1720
    %v1722 = vpop.f32.mrb[0].mxu0
    %1723 = vmatprep.mubr.f32.mxu0 %v451
    %1724 = vmatmul.mubr.f32.gmra.mrb[0].mxu0 %v450
    %v1725 = vpop.f32.mrb[0].mxu0
    %v1726 = vadd.f32 0.0, %v1725
    %v1727 = vpop.f32.mrb[0].mxu0
    %1728 = vmatprep.mubr.f32.mxu0 %v458
    %1729 = vmatmul.mubr.f32.gmra.mrb[0].mxu0 %v457
    %v1730 = vpop.f32.mrb[0].mxu0
    %v1731 = vadd.f32 0.0, %v1730
    %v1732 = vpop.f32.mrb[0].mxu0
    %1733 = vmatprep.mubr.f32.mxu0 %v465
    %1734 = vmatmul.mubr.f32.gmra.mrb[0].mxu0 %v464
    %v1735 = vpop.f32.mrb[0].mxu0
    %v1736 = vadd.f32 0.0, %v1735
    %v1737 = vpop.f32.mrb[0].mxu0
    %1738 = vmatprep.mubr.f32.mxu0 %v472
    %1739 = vmatmul.mubr.f32.gmra.mrb[0].mxu0 %v471
    %v1740 = vpop.f32.mrb[0].mxu0
    %v1741 = vadd.f32 0.0, %v1740
    %v1742 = vpop.f32.mrb[0].mxu0
    %1743 = vmatprep.mubr.f32.mxu0 %v479
    %1744 = vmatmul.mubr.f32.gmra.mrb[0].mxu0 %v478
    %v1745 = vpop.f32.mrb[0].mxu0
    %v1746 = vadd.f32 0.0, %v1745
    %v1747 = vpop.f32.mrb[0].mxu0
    %1748 = vmatprep.mubr.f32.mxu0 %v486
    %1749 = vmatmul.mubr.f32.gmra.mrb[0].mxu0 %v485
    %v1750 = vpop.f32.mrb[0].mxu0
    %v1751 = vadd.f32 0.0, %v1750
    %v1752 = vpop.f32.mrb[0].mxu0
    %1753 = vmatprep.mubr.f32.mxu0 %v493
    %1754 = vmatmul.mubr.f32.gmra.mrb[0].mxu0 %v492
    %v1755 = vpop.f32.mrb[0].mxu0
    %v1756 = vadd.f32 0.0, %v1755
    %v1757 = vpop.f32.mrb[0].mxu0
    %1758 = vmatprep.mubr.f32.mxu0 %v500
    %1759 = vmatmul.mubr.f32.gmra.mrb[0].mxu0 %v499
    %v1760 = vpop.f32.mrb[0].mxu0
    %v1761 = vadd.f32 0.0, %v1760
    %v1762 = vpop.f32.mrb[0].mxu0
    %1763 = vmatprep.mubr.f32.mxu0 %v507
    %1764 = vmatmul.mubr.f32.gmra.mrb[0].mxu0 %v506
    %v1765 = vpop.f32.mrb[0].mxu0
    %v1766 = vadd.f32 0.0, %v1765
    %v1767 = vpop.f32.mrb[0].mxu0
    %1768 = vmatprep.mubr.f32.mxu0 %v514
    %1769 = vmatmul.mubr.f32.gmra.mrb[0].mxu0 %v513
    %v1770 = vpop.f32.mrb[0].mxu0
    %v1771 = vadd.f32 0.0, %v1770
    %v1772 = vpop.f32.mrb[0].mxu0
    %1773 = vmatprep.mubr.f32.mxu0 %v521
    %1774 = vmatmul.mubr.f32.gmra.mrb[0].mxu0 %v520
    %v1775 = vpop.f32.mrb[0].mxu0
    %v1776 = vadd.f32 0.0, %v1775
    %v1777 = vpop.f32.mrb[0].mxu0
    %1778 = vmatprep.mubr.f32.mxu0 %v528
    %1779 = vmatmul.mubr.f32.gmra.mrb[0].mxu0 %v527
    %v1780 = vpop.f32.mrb[0].mxu0
    %v1781 = vadd.f32 0.0, %v1780
    %v1782 = vpop.f32.mrb[0].mxu0
    %1783 = vmatprep.mubr.f32.mxu0 %v535
    %1784 = vmatmul.mubr.f32.gmra.mrb[0].mxu0 %v534
    %v1785 = vpop.f32.mrb[0].mxu0
    %v1786 = vadd.f32 0.0, %v1785
    %v1787 = vpop.f32.mrb[0].mxu0
    %1788 = vmatprep.mubr.f32.mxu0 %v542
    %1789 = vmatmul.mubr.f32.gmra.mrb[0].mxu0 %v541
    %v1790 = vpop.f32.mrb[0].mxu0
    %v1791 = vadd.f32 0.0, %v1790
    %v1792 = vpop.f32.mrb[0].mxu0
    %1793 = vmatprep.mubr.f32.mxu0 %v549
    %1794 = vmatmul.mubr.f32.gmra.mrb[0].mxu0 %v548
    %v1795 = vpop.f32.mrb[0].mxu0
    %v1796 = vadd.f32 0.0, %v1795
    %v1797 = vpop.f32.mrb[0].mxu0
    %1798 = vmatprep.mubr.f32.mxu0 %v556
    %1799 = vmatmul.mubr.f32.gmra.mrb[0].mxu0 %v555
    %v1800 = vpop.f32.mrb[0].mxu0
    %v1801 = vadd.f32 0.0, %v1800
    %v1802 = vpop.f32.mrb[0].mxu0
    %1803 = vmatprep.mubr.f32.mxu0 %v563
    %1804 = vmatmul.mubr.f32.gmra.mrb[0].mxu0 %v562
    %v1805 = vpop.f32.mrb[0].mxu0
    %v1806 = vadd.f32 0.0, %v1805
    %v1807 = vpop.f32.mrb[0].mxu0
    %1808 = vmatprep.mubr.f32.mxu0 %v570
    %1809 = vmatmul.mubr.f32.gmra.mrb[0].mxu0 %v569
    %v1810 = vpop.f32.mrb[0].mxu0
    %v1811 = vadd.f32 0.0, %v1810
    %v1812 = vpop.f32.mrb[0].mxu0
    %1813 = vmatprep.mubr.f32.mxu0 %v577
    %1814 = vmatmul.mubr.f32.gmra.mrb[0].mxu0 %v576
    %v1815 = vpop.f32.mrb[0].mxu0
    %v1816 = vadd.f32 0.0, %v1815
    %v1817 = vpop.f32.mrb[0].mxu0
    %1818 = vmatprep.mubr.f32.mxu0 %v584
    %1819 = vmatmul.mubr.f32.gmra.mrb[0].mxu0 %v583
    %v1820 = vpop.f32.mrb[0].mxu0
    %v1821 = vadd.f32 0.0, %v1820
    %v1822 = vpop.f32.mrb[0].mxu0
    %1823 = vmatprep.mubr.f32.mxu0 %v591
    %1824 = vmatmul.mubr.f32.gmra.mrb[0].mxu0 %v590
    %v1825 = vpop.f32.mrb[0].mxu0
    %v1826 = vadd.f32 0.0, %v1825
    %v1827 = vpop.f32.mrb[0].mxu0
    %1828 = vmatprep.mubr.f32.mxu0 %v598
    %1829 = vmatmul.mubr.f32.gmra.mrb[0].mxu0 %v597
    %v1830 = vpop.f32.mrb[0].mxu0
    %v1831 = vadd.f32 0.0, %v1830
    %v1832 = vpop.f32.mrb[0].mxu0
    %1833 = vmatprep.mubr.f32.mxu0 %v605
    %1834 = vmatmul.mubr.f32.gmra.mrb[0].mxu0 %v604
    %v1835 = vpop.f32.mrb[0].mxu0
    %v1836 = vadd.f32 0.0, %v1835
    %v1837 = vpop.f32.mrb[0].mxu0
    %1838 = vmatprep.mubr.f32.mxu0 %v612
    %1839 = vmatmul.mubr.f32.gmra.mrb[0].mxu0 %v611
    %v1840 = vpop.f32.mrb[0].mxu0
    %v1841 = vadd.f32 0.0, %v1840
    %v1842 = vpop.f32.mrb[0].mxu0
    %1843 = vmatprep.mubr.f32.mxu0 %v619
    %1844 = vmatmul.mubr.f32.gmra.mrb[0].mxu0 %v618
    %v1845 = vpop.f32.mrb[0].mxu0
    %v1846 = vadd.f32 0.0, %v1845
    %v1847 = vpop.f32.mrb[0].mxu0
    %1848 = vmatprep.mubr.f32.mxu0 %v626
    %1849 = vmatmul.mubr.f32.gmra.mrb[0].mxu0 %v625
    %v1850 = vpop.f32.mrb[0].mxu0
    %v1851 = vadd.f32 0.0, %v1850
    %v1852 = vpop.f32.mrb[0].mxu0
    %1853 = vmatprep.mubr.f32.mxu0 %v633
    %1854 = vmatmul.mubr.f32.gmra.mrb[0].mxu0 %v632
    %v1855 = vpop.f32.mrb[0].mxu0
    %v1856 = vadd.f32 0.0, %v1855
    %v1857 = vpop.f32.mrb[0].mxu0
    %1858 = vmatprep.mubr.f32.mxu0 %v640
    %1859 = vmatmul.mubr.f32.gmra.mrb[0].mxu0 %v639
    %v1860 = vpop.f32.mrb[0].mxu0
    %v1861 = vadd.f32 0.0, %v1860
    %v1862 = vpop.f32.mrb[0].mxu0
    %1863 = vmatprep.mubr.f32.mxu0 %v647
    %1864 = vmatmul.mubr.f32.gmra.mrb[0].mxu0 %v646
    %v1865 = vpop.f32.mrb[0].mxu0
    %v1866 = vadd.f32 0.0, %v1865
    %v1867 = vpop.f32.mrb[0].mxu0
    %1868 = vmatprep.mubr.f32.mxu0 %v654
    %1869 = vmatmul.mubr.f32.gmra.mrb[0].mxu0 %v653
    %v1870 = vpop.f32.mrb[0].mxu0
    %v1871 = vadd.f32 0.0, %v1870
    %v1872 = vpop.f32.mrb[0].mxu0
    %1873 = vmatprep.mubr.f32.mxu0 %v661
    %1874 = vmatmul.mubr.f32.gmra.mrb[0].mxu0 %v660
    %v1875 = vpop.f32.mrb[0].mxu0
    %v1876 = vadd.f32 0.0, %v1875
    %v1877 = vpop.f32.mrb[0].mxu0
    %1878 = vmatprep.mubr.f32.mxu0 %v668
    %1879 = vmatmul.mubr.f32.gmra.mrb[0].mxu0 %v667
    %v1880 = vpop.f32.mrb[0].mxu0
    %v1881 = vadd.f32 0.0, %v1880
    %v1882 = vpop.f32.mrb[0].mxu0
    %1883 = vmatprep.mubr.f32.mxu0 %v675
    %1884 = vmatmul.mubr.f32.gmra.mrb[0].mxu0 %v674
    %v1885 = vpop.f32.mrb[0].mxu0
    %v1886 = vadd.f32 0.0, %v1885
    %v1887 = vpop.f32.mrb[0].mxu0
    %1888 = vmatprep.mubr.f32.mxu0 %v682
    %1889 = vmatmul.mubr.f32.gmra.mrb[0].mxu0 %v681
    %v1890 = vpop.f32.mrb[0].mxu0
    %v1891 = vadd.f32 0.0, %v1890
    %v1892 = vpop.f32.mrb[0].mxu0
    %1893 = vmatprep.mubr.f32.mxu0 %v689
    %1894 = vmatmul.mubr.f32.gmra.mrb[0].mxu0 %v688
    %v1895 = vpop.f32.mrb[0].mxu0
    %v1896 = vadd.f32 0.0, %v1895
    %v1897 = vpop.f32.mrb[0].mxu0
    %1898 = vmatprep.mubr.f32.mxu0 %v696
    %1899 = vmatmul.mubr.f32.gmra.mrb[0].mxu0 %v695
    %v1900 = vpop.f32.mrb[0].mxu0
    %v1901 = vadd.f32 0.0, %v1900
    %v1902 = vpop.f32.mrb[0].mxu0
    %1903 = vmatprep.mubr.f32.mxu0 %v703
    %1904 = vmatmul.mubr.f32.gmra.mrb[0].mxu0 %v702
    %v1905 = vpop.f32.mrb[0].mxu0
    %v1906 = vadd.f32 0.0, %v1905
    %v1907 = vpop.f32.mrb[0].mxu0
    %1908 = vmatprep.mubr.f32.mxu0 %v710
    %1909 = vmatmul.mubr.f32.gmra.mrb[0].mxu0 %v709
    %v1910 = vpop.f32.mrb[0].mxu0
    %v1911 = vadd.f32 0.0, %v1910
    %v1912 = vpop.f32.mrb[0].mxu0
    %1913 = vmatprep.mubr.f32.mxu0 %v717
    %1914 = vmatmul.mubr.f32.gmra.mrb[0].mxu0 %v716
    %v1915 = vpop.f32.mrb[0].mxu0
    %v1916 = vadd.f32 0.0, %v1915
    %v1917 = vpop.f32.mrb[0].mxu0
    %1918 = vmatprep.mubr.f32.mxu0 %v724
    %1919 = vmatmul.mubr.f32.gmra.mrb[0].mxu0 %v723
    %v1920 = vpop.f32.mrb[0].mxu0
    %v1921 = vadd.f32 0.0, %v1920
    %v1922 = vpop.f32.mrb[0].mxu0
    %1923 = vmatprep.mubr.f32.mxu0 %v731
    %1924 = vmatmul.mubr.f32.gmra.mrb[0].mxu0 %v730
    %v1925 = vpop.f32.mrb[0].mxu0
    %v1926 = vadd.f32 0.0, %v1925
    %v1927 = vpop.f32.mrb[0].mxu0
    %1928 = vmatprep.mubr.f32.mxu0 %v738
    %1929 = vmatmul.mubr.f32.gmra.mrb[0].mxu0 %v737
    %v1930 = vpop.f32.mrb[0].mxu0
    %v1931 = vadd.f32 0.0, %v1930
    %v1932 = vpop.f32.mrb[0].mxu0
    %1933 = vmatprep.mubr.f32.mxu0 %v745
    %1934 = vmatmul.mubr.f32.gmra.mrb[0].mxu0 %v744
    %v1935 = vpop.f32.mrb[0].mxu0
    %v1936 = vadd.f32 0.0, %v1935
    %v1937 = vpop.f32.mrb[0].mxu0
    %1938 = vmatprep.mubr.f32.mxu0 %v752
    %1939 = vmatmul.mubr.f32.gmra.mrb[0].mxu0 %v751
    %v1940 = vpop.f32.mrb[0].mxu0
    %v1941 = vadd.f32 0.0, %v1940
    %v1942 = vpop.f32.mrb[0].mxu0
    %1943 = vmatprep.mubr.f32.mxu0 %v759
    %1944 = vmatmul.mubr.f32.gmra.mrb[0].mxu0 %v758
    %v1945 = vpop.f32.mrb[0].mxu0
    %v1946 = vadd.f32 0.0, %v1945
    %v1947 = vpop.f32.mrb[0].mxu0
    %1948 = vmatprep.mubr.f32.mxu0 %v766
    %1949 = vmatmul.mubr.f32.gmra.mrb[0].mxu0 %v765
    %v1950 = vpop.f32.mrb[0].mxu0
    %v1951 = vadd.f32 0.0, %v1950
    %v1952 = vpop.f32.mrb[0].mxu0
    %1953 = vmatprep.mubr.f32.mxu0 %v773
    %1954 = vmatmul.mubr.f32.gmra.mrb[0].mxu0 %v772
    %v1955 = vpop.f32.mrb[0].mxu0
    %v1956 = vadd.f32 0.0, %v1955
    %v1957 = vpop.f32.mrb[0].mxu0
    %1958 = vmatprep.mubr.f32.mxu0 %v780
    %1959 = vmatmul.mubr.f32.gmra.mrb[0].mxu0 %v779
    %v1960 = vpop.f32.mrb[0].mxu0
    %v1961 = vadd.f32 0.0, %v1960
    %v1962 = vpop.f32.mrb[0].mxu0
    %1963 = vmatprep.mubr.f32.mxu0 %v787
    %1964 = vmatmul.mubr.f32.gmra.mrb[0].mxu0 %v786
    %v1965 = vpop.f32.mrb[0].mxu0
    %v1966 = vadd.f32 0.0, %v1965
    %v1967 = vpop.f32.mrb[0].mxu0
    %1968 = vmatprep.mubr.f32.mxu0 %v794
    %1969 = vmatmul.mubr.f32.gmra.mrb[0].mxu0 %v793
    %v1970 = vpop.f32.mrb[0].mxu0
    %v1971 = vadd.f32 0.0, %v1970
    %v1972 = vpop.f32.mrb[0].mxu0
    %1973 = vmatprep.mubr.f32.mxu0 %v801
    %1974 = vmatmul.mubr.f32.gmra.mrb[0].mxu0 %v800
    %v1975 = vpop.f32.mrb[0].mxu0
    %v1976 = vadd.f32 0.0, %v1975
    %v1977 = vpop.f32.mrb[0].mxu0
    %1978 = vmatprep.mubr.f32.mxu0 %v808
    %1979 = vmatmul.mubr.f32.gmra.mrb[0].mxu0 %v807
    %v1980 = vpop.f32.mrb[0].mxu0
    %v1981 = vadd.f32 0.0, %v1980
    %v1982 = vpop.f32.mrb[0].mxu0
    %1983 = vmatprep.mubr.f32.mxu0 %v815
    %1984 = vmatmul.mubr.f32.gmra.mrb[0].mxu0 %v814
    %v1985 = vpop.f32.mrb[0].mxu0
    %v1986 = vadd.f32 0.0, %v1985
    %v1987 = vpop.f32.mrb[0].mxu0
    %1988 = vmatprep.mubr.f32.mxu0 %v822
    %1989 = vmatmul.mubr.f32.gmra.mrb[0].mxu0 %v821
    %v1990 = vpop.f32.mrb[0].mxu0
    %v1991 = vadd.f32 0.0, %v1990
    %v1992 = vpop.f32.mrb[0].mxu0
    %1993 = vmatprep.mubr.f32.mxu0 %v829
    %1994 = vmatmul.mubr.f32.gmra.mrb[0].mxu0 %v828
    %v1995 = vpop.f32.mrb[0].mxu0
    %v1996 = vadd.f32 0.0, %v1995
    %v1997 = vpop.f32.mrb[0].mxu0
    %1998 = vmatprep.mubr.f32.mxu0 %v836
    %1999 = vmatmul.mubr.f32.gmra.mrb[0].mxu0 %v835
    %v2000 = vpop.f32.mrb[0].mxu0
    %v2001 = vadd.f32 0.0, %v2000
    %v2002 = vpop.f32.mrb[0].mxu0
    %2003 = vmatprep.mubr.f32.mxu0 %v843
    %2004 = vmatmul.mubr.f32.gmra.mrb[0].mxu0 %v842
    %v2005 = vpop.f32.mrb[0].mxu0
    %v2006 = vadd.f32 0.0, %v2005
    %v2007 = vpop.f32.mrb[0].mxu0
    %2008 = vmatprep.mubr.f32.mxu0 %v850
    %2009 = vmatmul.mubr.f32.gmra.mrb[0].mxu0 %v849
    %v2010 = vpop.f32.mrb[0].mxu0
    %v2011 = vadd.f32 0.0, %v2010
    %v2012 = vpop.f32.mrb[0].mxu0
    %2013 = vmatprep.mubr.f32.mxu0 %v857
    %2014 = vmatmul.mubr.f32.gmra.mrb[0].mxu0 %v856
    %v2015 = vpop.f32.mrb[0].mxu0
    %v2016 = vadd.f32 0.0, %v2015
    %v2017 = vpop.f32.mrb[0].mxu0
    %2018 = vmatprep.mubr.f32.mxu0 %v864
    %2019 = vmatmul.mubr.f32.gmra.mrb[0].mxu0 %v863
    %v2020 = vpop.f32.mrb[0].mxu0
    %v2021 = vadd.f32 0.0, %v2020
    %v2022 = vpop.f32.mrb[0].mxu0
    %2023 = vmatprep.mubr.f32.mxu0 %v871
    %2024 = vmatmul.mubr.f32.gmra.mrb[0].mxu0 %v870
    %v2025 = vpop.f32.mrb[0].mxu0
    %v2026 = vadd.f32 0.0, %v2025
    %v2027 = vpop.f32.mrb[0].mxu0
    %2028 = vmatprep.mubr.f32.mxu0 %v878
    %2029 = vmatmul.mubr.f32.gmra.mrb[0].mxu0 %v877
    %v2030 = vpop.f32.mrb[0].mxu0
    %v2031 = vadd.f32 0.0, %v2030
    %v2032 = vpop.f32.mrb[0].mxu0
    %2033 = vmatprep.mubr.f32.mxu0 %v885
    %2034 = vmatmul.mubr.f32.gmra.mrb[0].mxu0 %v884
    %v2035 = vpop.f32.mrb[0].mxu0
    %v2036 = vadd.f32 0.0, %v2035
    %v2037 = vpop.f32.mrb[0].mxu0
    %2038 = vdwg.mxu0
    %2039 = vmatprep.subr.mxu0 0.0
    %2040 = vmatpush1.msra.mxu0 %v923
    %2041 = vmatprep.subr.mxu0 0.0
    %2042 = vmatpush1.msra.mxu0 %v924
    %2043 = vmatprep.subr.mxu0 0.0
    %2044 = vmatpush1.msra.mxu0 %v925
    %2045 = vmatprep.subr.mxu0 0.0
    %2046 = vmatpush1.msra.mxu0 %v926
    %2047 = vmatprep.subr.mxu0 0.0
    %2048 = vmatpush1.msra.mxu0 %v927
    %2049 = vmatprep.subr.mxu0 0.0
    %2050 = vmatpush1.msra.mxu0 %v928
    %2051 = vmatprep.subr.mxu0 0.0
    %2052 = vmatpush1.msra.mxu0 %v929
    %2053 = vmatprep.subr.mxu0 0.0
    %2054 = vmatpush1.msra.mxu0 %v930
    %2055 = vmatprep.subr.mxu0 0.0
    %2056 = vmatpush1.msra.mxu0 %v931
    %2057 = vmatprep.subr.mxu0 0.0
    %2058 = vmatpush1.msra.mxu0 %v932
    %2059 = vmatprep.subr.mxu0 0.0
    %2060 = vmatpush1.msra.mxu0 %v933
    %2061 = vmatprep.subr.mxu0 0.0
    %2062 = vmatpush1.msra.mxu0 %v934
    %2063 = vmatprep.subr.mxu0 0.0
    %2064 = vmatpush1.msra.mxu0 %v935
    %2065 = vmatprep.subr.mxu0 0.0
    %2066 = vmatpush1.msra.mxu0 %v936
    %2067 = vmatprep.subr.mxu0 0.0
    %2068 = vmatpush1.msra.mxu0 %v937
    %2069 = vmatprep.subr.mxu0 0.0
    %2070 = vmatpush1.msra.mxu0 %v938
    %2071 = vmatprep.subr.mxu0 0.0
    %2072 = vmatpush1.msra.mxu0 %v939
    %2073 = vmatprep.subr.mxu0 0.0
    %2074 = vmatpush1.msra.mxu0 %v940
    %2075 = vmatprep.subr.mxu0 0.0
    %2076 = vmatpush1.msra.mxu0 %v941
    %2077 = vmatprep.subr.mxu0 0.0
    %2078 = vmatpush1.msra.mxu0 %v942
    %2079 = vmatprep.subr.mxu0 0.0
    %2080 = vmatpush1.msra.mxu0 %v943
    %2081 = vmatprep.subr.mxu0 0.0
    %2082 = vmatpush1.msra.mxu0 %v944
    %2083 = vmatprep.subr.mxu0 0.0
    %2084 = vmatpush1.msra.mxu0 %v945
    %2085 = vmatprep.subr.mxu0 0.0
    %2086 = vmatpush1.msra.mxu0 %v946
    %2087 = vmatprep.subr.mxu0 0.0
    %2088 = vmatpush1.msra.mxu0 %v947
    %2089 = vmatprep.subr.mxu0 0.0
    %2090 = vmatpush1.msra.mxu0 %v948
    %2091 = vmatprep.subr.mxu0 0.0
    %2092 = vmatpush1.msra.mxu0 %v949
    %2093 = vmatprep.subr.mxu0 0.0
    %2094 = vmatpush1.msra.mxu0 %v950
    %2095 = vmatprep.subr.mxu0 0.0
    %2096 = vmatpush1.msra.mxu0 %v951
    %2097 = vmatprep.subr.mxu0 0.0
    %2098 = vmatpush1.msra.mxu0 %v952
    %2099 = vmatprep.subr.mxu0 0.0
    %2100 = vmatpush1.msra.mxu0 %v953
    %2101 = vmatprep.subr.mxu0 0.0
    %2102 = vmatpush1.msra.mxu0 %v954
    %2103 = vmatprep.mubr.f32.mxu0 %v33
    %2104 = vmatmul.mubr.f32.gmra.mrb[0].mxu0 %v32
    %v2105 = vpop.f32.mrb[0].mxu0
    %v2106 = vadd.f32 %v1426, %v2105
    %v2107 = vpop.f32.mrb[0].mxu0
    %2108 = vmatprep.mubr.f32.mxu0 %v40
    %2109 = vmatmul.mubr.f32.gmra.mrb[0].mxu0 %v39
    %v2110 = vpop.f32.mrb[0].mxu0
    %v2111 = vadd.f32 %v1431, %v2110
    %v2112 = vpop.f32.mrb[0].mxu0
    %2113 = vmatprep.mubr.f32.mxu0 %v47
    %2114 = vmatmul.mubr.f32.gmra.mrb[0].mxu0 %v46
    %v2115 = vpop.f32.mrb[0].mxu0
    %v2116 = vadd.f32 %v1436, %v2115
    %v2117 = vpop.f32.mrb[0].mxu0
    %2118 = vmatprep.mubr.f32.mxu0 %v54
    %2119 = vmatmul.mubr.f32.gmra.mrb[0].mxu0 %v53
    %v2120 = vpop.f32.mrb[0].mxu0
    %v2121 = vadd.f32 %v1441, %v2120
    %v2122 = vpop.f32.mrb[0].mxu0
    %2123 = vmatprep.mubr.f32.mxu0 %v61
    %2124 = vmatmul.mubr.f32.gmra.mrb[0].mxu0 %v60
    %v2125 = vpop.f32.mrb[0].mxu0
    %v2126 = vadd.f32 %v1446, %v2125
    %v2127 = vpop.f32.mrb[0].mxu0
    %2128 = vmatprep.mubr.f32.mxu0 %v68
    %2129 = vmatmul.mubr.f32.gmra.mrb[0].mxu0 %v67
    %v2130 = vpop.f32.mrb[0].mxu0
    %v2131 = vadd.f32 %v1451, %v2130
    %v2132 = vpop.f32.mrb[0].mxu0
    %2133 = vmatprep.mubr.f32.mxu0 %v75
    %2134 = vmatmul.mubr.f32.gmra.mrb[0].mxu0 %v74
    %v2135 = vpop.f32.mrb[0].mxu0
    %v2136 = vadd.f32 %v1456, %v2135
    %v2137 = vpop.f32.mrb[0].mxu0
    %2138 = vmatprep.mubr.f32.mxu0 %v82
    %2139 = vmatmul.mubr.f32.gmra.mrb[0].mxu0 %v81
    %v2140 = vpop.f32.mrb[0].mxu0
    %v2141 = vadd.f32 %v1461, %v2140
    %v2142 = vpop.f32.mrb[0].mxu0
    %2143 = vmatprep.mubr.f32.mxu0 %v89
    %2144 = vmatmul.mubr.f32.gmra.mrb[0].mxu0 %v88
    %v2145 = vpop.f32.mrb[0].mxu0
    %v2146 = vadd.f32 %v1466, %v2145
    %v2147 = vpop.f32.mrb[0].mxu0
    %2148 = vmatprep.mubr.f32.mxu0 %v96
    %2149 = vmatmul.mubr.f32.gmra.mrb[0].mxu0 %v95
    %v2150 = vpop.f32.mrb[0].mxu0
    %v2151 = vadd.f32 %v1471, %v2150
    %v2152 = vpop.f32.mrb[0].mxu0
    %2153 = vmatprep.mubr.f32.mxu0 %v103
    %2154 = vmatmul.mubr.f32.gmra.mrb[0].mxu0 %v102
    %v2155 = vpop.f32.mrb[0].mxu0
    %v2156 = vadd.f32 %v1476, %v2155
    %v2157 = vpop.f32.mrb[0].mxu0
    %2158 = vmatprep.mubr.f32.mxu0 %v110
    %2159 = vmatmul.mubr.f32.gmra.mrb[0].mxu0 %v109
    %v2160 = vpop.f32.mrb[0].mxu0
    %v2161 = vadd.f32 %v1481, %v2160
    %v2162 = vpop.f32.mrb[0].mxu0
    %2163 = vmatprep.mubr.f32.mxu0 %v117
    %2164 = vmatmul.mubr.f32.gmra.mrb[0].mxu0 %v116
    %v2165 = vpop.f32.mrb[0].mxu0
    %v2166 = vadd.f32 %v1486, %v2165
    %v2167 = vpop.f32.mrb[0].mxu0
    %2168 = vmatprep.mubr.f32.mxu0 %v124
    %2169 = vmatmul.mubr.f32.gmra.mrb[0].mxu0 %v123
    %v2170 = vpop.f32.mrb[0].mxu0
    %v2171 = vadd.f32 %v1491, %v2170
    %v2172 = vpop.f32.mrb[0].mxu0
    %2173 = vmatprep.mubr.f32.mxu0 %v131
    %2174 = vmatmul.mubr.f32.gmra.mrb[0].mxu0 %v130
    %v2175 = vpop.f32.mrb[0].mxu0
    %v2176 = vadd.f32 %v1496, %v2175
    %v2177 = vpop.f32.mrb[0].mxu0
    %2178 = vmatprep.mubr.f32.mxu0 %v138
    %2179 = vmatmul.mubr.f32.gmra.mrb[0].mxu0 %v137
    %v2180 = vpop.f32.mrb[0].mxu0
    %v2181 = vadd.f32 %v1501, %v2180
    %v2182 = vpop.f32.mrb[0].mxu0
    %2183 = vmatprep.mubr.f32.mxu0 %v145
    %2184 = vmatmul.mubr.f32.gmra.mrb[0].mxu0 %v144
    %v2185 = vpop.f32.mrb[0].mxu0
    %v2186 = vadd.f32 %v1506, %v2185
    %v2187 = vpop.f32.mrb[0].mxu0
    %2188 = vmatprep.mubr.f32.mxu0 %v152
    %2189 = vmatmul.mubr.f32.gmra.mrb[0].mxu0 %v151
    %v2190 = vpop.f32.mrb[0].mxu0
    %v2191 = vadd.f32 %v1511, %v2190
    %v2192 = vpop.f32.mrb[0].mxu0
    %2193 = vmatprep.mubr.f32.mxu0 %v159
    %2194 = vmatmul.mubr.f32.gmra.mrb[0].mxu0 %v158
    %v2195 = vpop.f32.mrb[0].mxu0
    %v2196 = vadd.f32 %v1516, %v2195
    %v2197 = vpop.f32.mrb[0].mxu0
    %2198 = vmatprep.mubr.f32.mxu0 %v166
    %2199 = vmatmul.mubr.f32.gmra.mrb[0].mxu0 %v165
    %v2200 = vpop.f32.mrb[0].mxu0
    %v2201 = vadd.f32 %v1521, %v2200
    %v2202 = vpop.f32.mrb[0].mxu0
    %2203 = vmatprep.mubr.f32.mxu0 %v173
    %2204 = vmatmul.mubr.f32.gmra.mrb[0].mxu0 %v172
    %v2205 = vpop.f32.mrb[0].mxu0
    %v2206 = vadd.f32 %v1526, %v2205
    %v2207 = vpop.f32.mrb[0].mxu0
    %2208 = vmatprep.mubr.f32.mxu0 %v180
    %2209 = vmatmul.mubr.f32.gmra.mrb[0].mxu0 %v179
    %v2210 = vpop.f32.mrb[0].mxu0
    %v2211 = vadd.f32 %v1531, %v2210
    %v2212 = vpop.f32.mrb[0].mxu0
    %2213 = vmatprep.mubr.f32.mxu0 %v187
    %2214 = vmatmul.mubr.f32.gmra.mrb[0].mxu0 %v186
    %v2215 = vpop.f32.mrb[0].mxu0
    %v2216 = vadd.f32 %v1536, %v2215
    %v2217 = vpop.f32.mrb[0].mxu0
    %2218 = vmatprep.mubr.f32.mxu0 %v194
    %2219 = vmatmul.mubr.f32.gmra.mrb[0].mxu0 %v193
    %v2220 = vpop.f32.mrb[0].mxu0
    %v2221 = vadd.f32 %v1541, %v2220
    %v2222 = vpop.f32.mrb[0].mxu0
    %2223 = vmatprep.mubr.f32.mxu0 %v201
    %2224 = vmatmul.mubr.f32.gmra.mrb[0].mxu0 %v200
    %v2225 = vpop.f32.mrb[0].mxu0
    %v2226 = vadd.f32 %v1546, %v2225
    %v2227 = vpop.f32.mrb[0].mxu0
    %2228 = vmatprep.mubr.f32.mxu0 %v208
    %2229 = vmatmul.mubr.f32.gmra.mrb[0].mxu0 %v207
    %v2230 = vpop.f32.mrb[0].mxu0
    %v2231 = vadd.f32 %v1551, %v2230
    %v2232 = vpop.f32.mrb[0].mxu0
    %2233 = vmatprep.mubr.f32.mxu0 %v215
    %2234 = vmatmul.mubr.f32.gmra.mrb[0].mxu0 %v214
    %v2235 = vpop.f32.mrb[0].mxu0
    %v2236 = vadd.f32 %v1556, %v2235
    %v2237 = vpop.f32.mrb[0].mxu0
    %2238 = vmatprep.mubr.f32.mxu0 %v222
    %2239 = vmatmul.mubr.f32.gmra.mrb[0].mxu0 %v221
    %v2240 = vpop.f32.mrb[0].mxu0
    %v2241 = vadd.f32 %v1561, %v2240
    %v2242 = vpop.f32.mrb[0].mxu0
    %2243 = vmatprep.mubr.f32.mxu0 %v229
    %2244 = vmatmul.mubr.f32.gmra.mrb[0].mxu0 %v228
    %v2245 = vpop.f32.mrb[0].mxu0
    %v2246 = vadd.f32 %v1566, %v2245
    %v2247 = vpop.f32.mrb[0].mxu0
    %2248 = vmatprep.mubr.f32.mxu0 %v236
    %2249 = vmatmul.mubr.f32.gmra.mrb[0].mxu0 %v235
    %v2250 = vpop.f32.mrb[0].mxu0
    %v2251 = vadd.f32 %v1571, %v2250
    %v2252 = vpop.f32.mrb[0].mxu0
    %2253 = vmatprep.mubr.f32.mxu0 %v243
    %2254 = vmatmul.mubr.f32.gmra.mrb[0].mxu0 %v242
    %v2255 = vpop.f32.mrb[0].mxu0
    %v2256 = vadd.f32 %v1576, %v2255
    %v2257 = vpop.f32.mrb[0].mxu0
    %2258 = vmatprep.mubr.f32.mxu0 %v250
    %2259 = vmatmul.mubr.f32.gmra.mrb[0].mxu0 %v249
    %v2260 = vpop.f32.mrb[0].mxu0
    %v2261 = vadd.f32 %v1581, %v2260
    %v2262 = vpop.f32.mrb[0].mxu0
    %2263 = vmatprep.mubr.f32.mxu0 %v257
    %2264 = vmatmul.mubr.f32.gmra.mrb[0].mxu0 %v256
    %v2265 = vpop.f32.mrb[0].mxu0
    %v2266 = vadd.f32 %v1586, %v2265
    %v2267 = vpop.f32.mrb[0].mxu0
    %2268 = vmatprep.mubr.f32.mxu0 %v264
    %2269 = vmatmul.mubr.f32.gmra.mrb[0].mxu0 %v263
    %v2270 = vpop.f32.mrb[0].mxu0
    %v2271 = vadd.f32 %v1591, %v2270
    %v2272 = vpop.f32.mrb[0].mxu0
    %2273 = vmatprep.mubr.f32.mxu0 %v271
    %2274 = vmatmul.mubr.f32.gmra.mrb[0].mxu0 %v270
    %v2275 = vpop.f32.mrb[0].mxu0
    %v2276 = vadd.f32 %v1596, %v2275
    %v2277 = vpop.f32.mrb[0].mxu0
    %2278 = vmatprep.mubr.f32.mxu0 %v278
    %2279 = vmatmul.mubr.f32.gmra.mrb[0].mxu0 %v277
    %v2280 = vpop.f32.mrb[0].mxu0
    %v2281 = vadd.f32 %v1601, %v2280
    %v2282 = vpop.f32.mrb[0].mxu0
    %2283 = vmatprep.mubr.f32.mxu0 %v285
    %2284 = vmatmul.mubr.f32.gmra.mrb[0].mxu0 %v284
    %v2285 = vpop.f32.mrb[0].mxu0
    %v2286 = vadd.f32 %v1606, %v2285
    %v2287 = vpop.f32.mrb[0].mxu0
    %2288 = vmatprep.mubr.f32.mxu0 %v292
    %2289 = vmatmul.mubr.f32.gmra.mrb[0].mxu0 %v291
    %v2290 = vpop.f32.mrb[0].mxu0
    %v2291 = vadd.f32 %v1611, %v2290
    %v2292 = vpop.f32.mrb[0].mxu0
    %2293 = vmatprep.mubr.f32.mxu0 %v299
    %2294 = vmatmul.mubr.f32.gmra.mrb[0].mxu0 %v298
    %v2295 = vpop.f32.mrb[0].mxu0
    %v2296 = vadd.f32 %v1616, %v2295
    %v2297 = vpop.f32.mrb[0].mxu0
    %2298 = vmatprep.mubr.f32.mxu0 %v306
    %2299 = vmatmul.mubr.f32.gmra.mrb[0].mxu0 %v305
    %v2300 = vpop.f32.mrb[0].mxu0
    %v2301 = vadd.f32 %v1621, %v2300
    %v2302 = vpop.f32.mrb[0].mxu0
    %2303 = vmatprep.mubr.f32.mxu0 %v313
    %2304 = vmatmul.mubr.f32.gmra.mrb[0].mxu0 %v312
    %v2305 = vpop.f32.mrb[0].mxu0
    %v2306 = vadd.f32 %v1626, %v2305
    %v2307 = vpop.f32.mrb[0].mxu0
    %2308 = vmatprep.mubr.f32.mxu0 %v320
    %2309 = vmatmul.mubr.f32.gmra.mrb[0].mxu0 %v319
    %v2310 = vpop.f32.mrb[0].mxu0
    %v2311 = vadd.f32 %v1631, %v2310
    %v2312 = vpop.f32.mrb[0].mxu0
    %2313 = vmatprep.mubr.f32.mxu0 %v327
    %2314 = vmatmul.mubr.f32.gmra.mrb[0].mxu0 %v326
    %v2315 = vpop.f32.mrb[0].mxu0
    %v2316 = vadd.f32 %v1636, %v2315
    %v2317 = vpop.f32.mrb[0].mxu0
    %2318 = vmatprep.mubr.f32.mxu0 %v334
    %2319 = vmatmul.mubr.f32.gmra.mrb[0].mxu0 %v333
    %v2320 = vpop.f32.mrb[0].mxu0
    %v2321 = vadd.f32 %v1641, %v2320
    %v2322 = vpop.f32.mrb[0].mxu0
    %2323 = vmatprep.mubr.f32.mxu0 %v341
    %2324 = vmatmul.mubr.f32.gmra.mrb[0].mxu0 %v340
    %v2325 = vpop.f32.mrb[0].mxu0
    %v2326 = vadd.f32 %v1646, %v2325
    %v2327 = vpop.f32.mrb[0].mxu0
    %2328 = vmatprep.mubr.f32.mxu0 %v348
    %2329 = vmatmul.mubr.f32.gmra.mrb[0].mxu0 %v347
    %v2330 = vpop.f32.mrb[0].mxu0
    %v2331 = vadd.f32 %v1651, %v2330
    %v2332 = vpop.f32.mrb[0].mxu0
    %2333 = vmatprep.mubr.f32.mxu0 %v355
    %2334 = vmatmul.mubr.f32.gmra.mrb[0].mxu0 %v354
    %v2335 = vpop.f32.mrb[0].mxu0
    %v2336 = vadd.f32 %v1656, %v2335
    %v2337 = vpop.f32.mrb[0].mxu0
    %2338 = vmatprep.mubr.f32.mxu0 %v362
    %2339 = vmatmul.mubr.f32.gmra.mrb[0].mxu0 %v361
    %v2340 = vpop.f32.mrb[0].mxu0
    %v2341 = vadd.f32 %v1661, %v2340
    %v2342 = vpop.f32.mrb[0].mxu0
    %2343 = vmatprep.mubr.f32.mxu0 %v369
    %2344 = vmatmul.mubr.f32.gmra.mrb[0].mxu0 %v368
    %v2345 = vpop.f32.mrb[0].mxu0
    %v2346 = vadd.f32 %v1666, %v2345
    %v2347 = vpop.f32.mrb[0].mxu0
    %2348 = vmatprep.mubr.f32.mxu0 %v376
    %2349 = vmatmul.mubr.f32.gmra.mrb[0].mxu0 %v375
    %v2350 = vpop.f32.mrb[0].mxu0
    %v2351 = vadd.f32 %v1671, %v2350
    %v2352 = vpop.f32.mrb[0].mxu0
    %2353 = vmatprep.mubr.f32.mxu0 %v383
    %2354 = vmatmul.mubr.f32.gmra.mrb[0].mxu0 %v382
    %v2355 = vpop.f32.mrb[0].mxu0
    %v2356 = vadd.f32 %v1676, %v2355
    %v2357 = vpop.f32.mrb[0].mxu0
    %2358 = vmatprep.mubr.f32.mxu0 %v390
    %2359 = vmatmul.mubr.f32.gmra.mrb[0].mxu0 %v389
    %v2360 = vpop.f32.mrb[0].mxu0
    %v2361 = vadd.f32 %v1681, %v2360
    %v2362 = vpop.f32.mrb[0].mxu0
    %2363 = vmatprep.mubr.f32.mxu0 %v397
    %2364 = vmatmul.mubr.f32.gmra.mrb[0].mxu0 %v396
    %v2365 = vpop.f32.mrb[0].mxu0
    %v2366 = vadd.f32 %v1686, %v2365
    %v2367 = vpop.f32.mrb[0].mxu0
    %2368 = vmatprep.mubr.f32.mxu0 %v404
    %2369 = vmatmul.mubr.f32.gmra.mrb[0].mxu0 %v403
    %v2370 = vpop.f32.mrb[0].mxu0
    %v2371 = vadd.f32 %v1691, %v2370
    %v2372 = vpop.f32.mrb[0].mxu0
    %2373 = vmatprep.mubr.f32.mxu0 %v411
    %2374 = vmatmul.mubr.f32.gmra.mrb[0].mxu0 %v410
    %v2375 = vpop.f32.mrb[0].mxu0
    %v2376 = vadd.f32 %v1696, %v2375
    %v2377 = vpop.f32.mrb[0].mxu0
    %2378 = vmatprep.mubr.f32.mxu0 %v418
    %2379 = vmatmul.mubr.f32.gmra.mrb[0].mxu0 %v417
    %v2380 = vpop.f32.mrb[0].mxu0
    %v2381 = vadd.f32 %v1701, %v2380
    %v2382 = vpop.f32.mrb[0].mxu0
    %2383 = vmatprep.mubr.f32.mxu0 %v425
    %2384 = vmatmul.mubr.f32.gmra.mrb[0].mxu0 %v424
    %v2385 = vpop.f32.mrb[0].mxu0
    %v2386 = vadd.f32 %v1706, %v2385
    %v2387 = vpop.f32.mrb[0].mxu0
    %2388 = vmatprep.mubr.f32.mxu0 %v432
    %2389 = vmatmul.mubr.f32.gmra.mrb[0].mxu0 %v431
    %v2390 = vpop.f32.mrb[0].mxu0
    %v2391 = vadd.f32 %v1711, %v2390
    %v2392 = vpop.f32.mrb[0].mxu0
    %2393 = vmatprep.mubr.f32.mxu0 %v439
    %2394 = vmatmul.mubr.f32.gmra.mrb[0].mxu0 %v438
    %v2395 = vpop.f32.mrb[0].mxu0
    %v2396 = vadd.f32 %v1716, %v2395
    %v2397 = vpop.f32.mrb[0].mxu0
    %2398 = vmatprep.mubr.f32.mxu0 %v446
    %2399 = vmatmul.mubr.f32.gmra.mrb[0].mxu0 %v445
    %v2400 = vpop.f32.mrb[0].mxu0
    %v2401 = vadd.f32 %v1721, %v2400
    %v2402 = vpop.f32.mrb[0].mxu0
    %2403 = vmatprep.mubr.f32.mxu0 %v453
    %2404 = vmatmul.mubr.f32.gmra.mrb[0].mxu0 %v452
    %v2405 = vpop.f32.mrb[0].mxu0
    %v2406 = vadd.f32 %v1726, %v2405
    %v2407 = vpop.f32.mrb[0].mxu0
    %2408 = vmatprep.mubr.f32.mxu0 %v460
    %2409 = vmatmul.mubr.f32.gmra.mrb[0].mxu0 %v459
    %v2410 = vpop.f32.mrb[0].mxu0
    %v2411 = vadd.f32 %v1731, %v2410
    %v2412 = vpop.f32.mrb[0].mxu0
    %2413 = vmatprep.mubr.f32.mxu0 %v467
    %2414 = vmatmul.mubr.f32.gmra.mrb[0].mxu0 %v466
    %v2415 = vpop.f32.mrb[0].mxu0
    %v2416 = vadd.f32 %v1736, %v2415
    %v2417 = vpop.f32.mrb[0].mxu0
    %2418 = vmatprep.mubr.f32.mxu0 %v474
    %2419 = vmatmul.mubr.f32.gmra.mrb[0].mxu0 %v473
    %v2420 = vpop.f32.mrb[0].mxu0
    %v2421 = vadd.f32 %v1741, %v2420
    %v2422 = vpop.f32.mrb[0].mxu0
    %2423 = vmatprep.mubr.f32.mxu0 %v481
    %2424 = vmatmul.mubr.f32.gmra.mrb[0].mxu0 %v480
    %v2425 = vpop.f32.mrb[0].mxu0
    %v2426 = vadd.f32 %v1746, %v2425
    %v2427 = vpop.f32.mrb[0].mxu0
    %2428 = vmatprep.mubr.f32.mxu0 %v488
    %2429 = vmatmul.mubr.f32.gmra.mrb[0].mxu0 %v487
    %v2430 = vpop.f32.mrb[0].mxu0
    %v2431 = vadd.f32 %v1751, %v2430
    %v2432 = vpop.f32.mrb[0].mxu0
    %2433 = vmatprep.mubr.f32.mxu0 %v495
    %2434 = vmatmul.mubr.f32.gmra.mrb[0].mxu0 %v494
    %v2435 = vpop.f32.mrb[0].mxu0
    %v2436 = vadd.f32 %v1756, %v2435
    %v2437 = vpop.f32.mrb[0].mxu0
    %2438 = vmatprep.mubr.f32.mxu0 %v502
    %2439 = vmatmul.mubr.f32.gmra.mrb[0].mxu0 %v501
    %v2440 = vpop.f32.mrb[0].mxu0
    %v2441 = vadd.f32 %v1761, %v2440
    %v2442 = vpop.f32.mrb[0].mxu0
    %2443 = vmatprep.mubr.f32.mxu0 %v509
    %2444 = vmatmul.mubr.f32.gmra.mrb[0].mxu0 %v508
    %v2445 = vpop.f32.mrb[0].mxu0
    %v2446 = vadd.f32 %v1766, %v2445
    %v2447 = vpop.f32.mrb[0].mxu0
    %2448 = vmatprep.mubr.f32.mxu0 %v516
    %2449 = vmatmul.mubr.f32.gmra.mrb[0].mxu0 %v515
    %v2450 = vpop.f32.mrb[0].mxu0
    %v2451 = vadd.f32 %v1771, %v2450
    %v2452 = vpop.f32.mrb[0].mxu0
    %2453 = vmatprep.mubr.f32.mxu0 %v523
    %2454 = vmatmul.mubr.f32.gmra.mrb[0].mxu0 %v522
    %v2455 = vpop.f32.mrb[0].mxu0
    %v2456 = vadd.f32 %v1776, %v2455
    %v2457 = vpop.f32.mrb[0].mxu0
    %2458 = vmatprep.mubr.f32.mxu0 %v530
    %2459 = vmatmul.mubr.f32.gmra.mrb[0].mxu0 %v529
    %v2460 = vpop.f32.mrb[0].mxu0
    %v2461 = vadd.f32 %v1781, %v2460
    %v2462 = vpop.f32.mrb[0].mxu0
    %2463 = vmatprep.mubr.f32.mxu0 %v537
    %2464 = vmatmul.mubr.f32.gmra.mrb[0].mxu0 %v536
    %v2465 = vpop.f32.mrb[0].mxu0
    %v2466 = vadd.f32 %v1786, %v2465
    %v2467 = vpop.f32.mrb[0].mxu0
    %2468 = vmatprep.mubr.f32.mxu0 %v544
    %2469 = vmatmul.mubr.f32.gmra.mrb[0].mxu0 %v543
    %v2470 = vpop.f32.mrb[0].mxu0
    %v2471 = vadd.f32 %v1791, %v2470
    %v2472 = vpop.f32.mrb[0].mxu0
    %2473 = vmatprep.mubr.f32.mxu0 %v551
    %2474 = vmatmul.mubr.f32.gmra.mrb[0].mxu0 %v550
    %v2475 = vpop.f32.mrb[0].mxu0
    %v2476 = vadd.f32 %v1796, %v2475
    %v2477 = vpop.f32.mrb[0].mxu0
    %2478 = vmatprep.mubr.f32.mxu0 %v558
    %2479 = vmatmul.mubr.f32.gmra.mrb[0].mxu0 %v557
    %v2480 = vpop.f32.mrb[0].mxu0
    %v2481 = vadd.f32 %v1801, %v2480
    %v2482 = vpop.f32.mrb[0].mxu0
    %2483 = vmatprep.mubr.f32.mxu0 %v565
    %2484 = vmatmul.mubr.f32.gmra.mrb[0].mxu0 %v564
    %v2485 = vpop.f32.mrb[0].mxu0
    %v2486 = vadd.f32 %v1806, %v2485
    %v2487 = vpop.f32.mrb[0].mxu0
    %2488 = vmatprep.mubr.f32.mxu0 %v572
    %2489 = vmatmul.mubr.f32.gmra.mrb[0].mxu0 %v571
    %v2490 = vpop.f32.mrb[0].mxu0
    %v2491 = vadd.f32 %v1811, %v2490
    %v2492 = vpop.f32.mrb[0].mxu0
    %2493 = vmatprep.mubr.f32.mxu0 %v579
    %2494 = vmatmul.mubr.f32.gmra.mrb[0].mxu0 %v578
    %v2495 = vpop.f32.mrb[0].mxu0
    %v2496 = vadd.f32 %v1816, %v2495
    %v2497 = vpop.f32.mrb[0].mxu0
    %2498 = vmatprep.mubr.f32.mxu0 %v586
    %2499 = vmatmul.mubr.f32.gmra.mrb[0].mxu0 %v585
    %v2500 = vpop.f32.mrb[0].mxu0
    %v2501 = vadd.f32 %v1821, %v2500
    %v2502 = vpop.f32.mrb[0].mxu0
    %2503 = vmatprep.mubr.f32.mxu0 %v593
    %2504 = vmatmul.mubr.f32.gmra.mrb[0].mxu0 %v592
    %v2505 = vpop.f32.mrb[0].mxu0
    %v2506 = vadd.f32 %v1826, %v2505
    %v2507 = vpop.f32.mrb[0].mxu0
    %2508 = vmatprep.mubr.f32.mxu0 %v600
    %2509 = vmatmul.mubr.f32.gmra.mrb[0].mxu0 %v599
    %v2510 = vpop.f32.mrb[0].mxu0
    %v2511 = vadd.f32 %v1831, %v2510
    %v2512 = vpop.f32.mrb[0].mxu0
    %2513 = vmatprep.mubr.f32.mxu0 %v607
    %2514 = vmatmul.mubr.f32.gmra.mrb[0].mxu0 %v606
    %v2515 = vpop.f32.mrb[0].mxu0
    %v2516 = vadd.f32 %v1836, %v2515
    %v2517 = vpop.f32.mrb[0].mxu0
    %2518 = vmatprep.mubr.f32.mxu0 %v614
    %2519 = vmatmul.mubr.f32.gmra.mrb[0].mxu0 %v613
    %v2520 = vpop.f32.mrb[0].mxu0
    %v2521 = vadd.f32 %v1841, %v2520
    %v2522 = vpop.f32.mrb[0].mxu0
    %2523 = vmatprep.mubr.f32.mxu0 %v621
    %2524 = vmatmul.mubr.f32.gmra.mrb[0].mxu0 %v620
    %v2525 = vpop.f32.mrb[0].mxu0
    %v2526 = vadd.f32 %v1846, %v2525
    %v2527 = vpop.f32.mrb[0].mxu0
    %2528 = vmatprep.mubr.f32.mxu0 %v628
    %2529 = vmatmul.mubr.f32.gmra.mrb[0].mxu0 %v627
    %v2530 = vpop.f32.mrb[0].mxu0
    %v2531 = vadd.f32 %v1851, %v2530
    %v2532 = vpop.f32.mrb[0].mxu0
    %2533 = vmatprep.mubr.f32.mxu0 %v635
    %2534 = vmatmul.mubr.f32.gmra.mrb[0].mxu0 %v634
    %v2535 = vpop.f32.mrb[0].mxu0
    %v2536 = vadd.f32 %v1856, %v2535
    %v2537 = vpop.f32.mrb[0].mxu0
    %2538 = vmatprep.mubr.f32.mxu0 %v642
    %2539 = vmatmul.mubr.f32.gmra.mrb[0].mxu0 %v641
    %v2540 = vpop.f32.mrb[0].mxu0
    %v2541 = vadd.f32 %v1861, %v2540
    %v2542 = vpop.f32.mrb[0].mxu0
    %2543 = vmatprep.mubr.f32.mxu0 %v649
    %2544 = vmatmul.mubr.f32.gmra.mrb[0].mxu0 %v648
    %v2545 = vpop.f32.mrb[0].mxu0
    %v2546 = vadd.f32 %v1866, %v2545
    %v2547 = vpop.f32.mrb[0].mxu0
    %2548 = vmatprep.mubr.f32.mxu0 %v656
    %2549 = vmatmul.mubr.f32.gmra.mrb[0].mxu0 %v655
    %v2550 = vpop.f32.mrb[0].mxu0
    %v2551 = vadd.f32 %v1871, %v2550
    %v2552 = vpop.f32.mrb[0].mxu0
    %2553 = vmatprep.mubr.f32.mxu0 %v663
    %2554 = vmatmul.mubr.f32.gmra.mrb[0].mxu0 %v662
    %v2555 = vpop.f32.mrb[0].mxu0
    %v2556 = vadd.f32 %v1876, %v2555
    %v2557 = vpop.f32.mrb[0].mxu0
    %2558 = vmatprep.mubr.f32.mxu0 %v670
    %2559 = vmatmul.mubr.f32.gmra.mrb[0].mxu0 %v669
    %v2560 = vpop.f32.mrb[0].mxu0
    %v2561 = vadd.f32 %v1881, %v2560
    %v2562 = vpop.f32.mrb[0].mxu0
    %2563 = vmatprep.mubr.f32.mxu0 %v677
    %2564 = vmatmul.mubr.f32.gmra.mrb[0].mxu0 %v676
    %v2565 = vpop.f32.mrb[0].mxu0
    %v2566 = vadd.f32 %v1886, %v2565
    %v2567 = vpop.f32.mrb[0].mxu0
    %2568 = vmatprep.mubr.f32.mxu0 %v684
    %2569 = vmatmul.mubr.f32.gmra.mrb[0].mxu0 %v683
    %v2570 = vpop.f32.mrb[0].mxu0
    %v2571 = vadd.f32 %v1891, %v2570
    %v2572 = vpop.f32.mrb[0].mxu0
    %2573 = vmatprep.mubr.f32.mxu0 %v691
    %2574 = vmatmul.mubr.f32.gmra.mrb[0].mxu0 %v690
    %v2575 = vpop.f32.mrb[0].mxu0
    %v2576 = vadd.f32 %v1896, %v2575
    %v2577 = vpop.f32.mrb[0].mxu0
    %2578 = vmatprep.mubr.f32.mxu0 %v698
    %2579 = vmatmul.mubr.f32.gmra.mrb[0].mxu0 %v697
    %v2580 = vpop.f32.mrb[0].mxu0
    %v2581 = vadd.f32 %v1901, %v2580
    %v2582 = vpop.f32.mrb[0].mxu0
    %2583 = vmatprep.mubr.f32.mxu0 %v705
    %2584 = vmatmul.mubr.f32.gmra.mrb[0].mxu0 %v704
    %v2585 = vpop.f32.mrb[0].mxu0
    %v2586 = vadd.f32 %v1906, %v2585
    %v2587 = vpop.f32.mrb[0].mxu0
    %2588 = vmatprep.mubr.f32.mxu0 %v712
    %2589 = vmatmul.mubr.f32.gmra.mrb[0].mxu0 %v711
    %v2590 = vpop.f32.mrb[0].mxu0
    %v2591 = vadd.f32 %v1911, %v2590
    %v2592 = vpop.f32.mrb[0].mxu0
    %2593 = vmatprep.mubr.f32.mxu0 %v719
    %2594 = vmatmul.mubr.f32.gmra.mrb[0].mxu0 %v718
    %v2595 = vpop.f32.mrb[0].mxu0
    %v2596 = vadd.f32 %v1916, %v2595
    %v2597 = vpop.f32.mrb[0].mxu0
    %2598 = vmatprep.mubr.f32.mxu0 %v726
    %2599 = vmatmul.mubr.f32.gmra.mrb[0].mxu0 %v725
    %v2600 = vpop.f32.mrb[0].mxu0
    %v2601 = vadd.f32 %v1921, %v2600
    %v2602 = vpop.f32.mrb[0].mxu0
    %2603 = vmatprep.mubr.f32.mxu0 %v733
    %2604 = vmatmul.mubr.f32.gmra.mrb[0].mxu0 %v732
    %v2605 = vpop.f32.mrb[0].mxu0
    %v2606 = vadd.f32 %v1926, %v2605
    %v2607 = vpop.f32.mrb[0].mxu0
    %2608 = vmatprep.mubr.f32.mxu0 %v740
    %2609 = vmatmul.mubr.f32.gmra.mrb[0].mxu0 %v739
    %v2610 = vpop.f32.mrb[0].mxu0
    %v2611 = vadd.f32 %v1931, %v2610
    %v2612 = vpop.f32.mrb[0].mxu0
    %2613 = vmatprep.mubr.f32.mxu0 %v747
    %2614 = vmatmul.mubr.f32.gmra.mrb[0].mxu0 %v746
    %v2615 = vpop.f32.mrb[0].mxu0
    %v2616 = vadd.f32 %v1936, %v2615
    %v2617 = vpop.f32.mrb[0].mxu0
    %2618 = vmatprep.mubr.f32.mxu0 %v754
    %2619 = vmatmul.mubr.f32.gmra.mrb[0].mxu0 %v753
    %v2620 = vpop.f32.mrb[0].mxu0
    %v2621 = vadd.f32 %v1941, %v2620
    %v2622 = vpop.f32.mrb[0].mxu0
    %2623 = vmatprep.mubr.f32.mxu0 %v761
    %2624 = vmatmul.mubr.f32.gmra.mrb[0].mxu0 %v760
    %v2625 = vpop.f32.mrb[0].mxu0
    %v2626 = vadd.f32 %v1946, %v2625
    %v2627 = vpop.f32.mrb[0].mxu0
    %2628 = vmatprep.mubr.f32.mxu0 %v768
    %2629 = vmatmul.mubr.f32.gmra.mrb[0].mxu0 %v767
    %v2630 = vpop.f32.mrb[0].mxu0
    %v2631 = vadd.f32 %v1951, %v2630
    %v2632 = vpop.f32.mrb[0].mxu0
    %2633 = vmatprep.mubr.f32.mxu0 %v775
    %2634 = vmatmul.mubr.f32.gmra.mrb[0].mxu0 %v774
    %v2635 = vpop.f32.mrb[0].mxu0
    %v2636 = vadd.f32 %v1956, %v2635
    %v2637 = vpop.f32.mrb[0].mxu0
    %2638 = vmatprep.mubr.f32.mxu0 %v782
    %2639 = vmatmul.mubr.f32.gmra.mrb[0].mxu0 %v781
    %v2640 = vpop.f32.mrb[0].mxu0
    %v2641 = vadd.f32 %v1961, %v2640
    %v2642 = vpop.f32.mrb[0].mxu0
    %2643 = vmatprep.mubr.f32.mxu0 %v789
    %2644 = vmatmul.mubr.f32.gmra.mrb[0].mxu0 %v788
    %v2645 = vpop.f32.mrb[0].mxu0
    %v2646 = vadd.f32 %v1966, %v2645
    %v2647 = vpop.f32.mrb[0].mxu0
    %2648 = vmatprep.mubr.f32.mxu0 %v796
    %2649 = vmatmul.mubr.f32.gmra.mrb[0].mxu0 %v795
    %v2650 = vpop.f32.mrb[0].mxu0
    %v2651 = vadd.f32 %v1971, %v2650
    %v2652 = vpop.f32.mrb[0].mxu0
    %2653 = vmatprep.mubr.f32.mxu0 %v803
    %2654 = vmatmul.mubr.f32.gmra.mrb[0].mxu0 %v802
    %v2655 = vpop.f32.mrb[0].mxu0
    %v2656 = vadd.f32 %v1976, %v2655
    %v2657 = vpop.f32.mrb[0].mxu0
    %2658 = vmatprep.mubr.f32.mxu0 %v810
    %2659 = vmatmul.mubr.f32.gmra.mrb[0].mxu0 %v809
    %v2660 = vpop.f32.mrb[0].mxu0
    %v2661 = vadd.f32 %v1981, %v2660
    %v2662 = vpop.f32.mrb[0].mxu0
    %2663 = vmatprep.mubr.f32.mxu0 %v817
    %2664 = vmatmul.mubr.f32.gmra.mrb[0].mxu0 %v816
    %v2665 = vpop.f32.mrb[0].mxu0
    %v2666 = vadd.f32 %v1986, %v2665
    %v2667 = vpop.f32.mrb[0].mxu0
    %2668 = vmatprep.mubr.f32.mxu0 %v824
    %2669 = vmatmul.mubr.f32.gmra.mrb[0].mxu0 %v823
    %v2670 = vpop.f32.mrb[0].mxu0
    %v2671 = vadd.f32 %v1991, %v2670
    %v2672 = vpop.f32.mrb[0].mxu0
    %2673 = vmatprep.mubr.f32.mxu0 %v831
    %2674 = vmatmul.mubr.f32.gmra.mrb[0].mxu0 %v830
    %v2675 = vpop.f32.mrb[0].mxu0
    %v2676 = vadd.f32 %v1996, %v2675
    %v2677 = vpop.f32.mrb[0].mxu0
    %2678 = vmatprep.mubr.f32.mxu0 %v838
    %2679 = vmatmul.mubr.f32.gmra.mrb[0].mxu0 %v837
    %v2680 = vpop.f32.mrb[0].mxu0
    %v2681 = vadd.f32 %v2001, %v2680
    %v2682 = vpop.f32.mrb[0].mxu0
    %2683 = vmatprep.mubr.f32.mxu0 %v845
    %2684 = vmatmul.mubr.f32.gmra.mrb[0].mxu0 %v844
    %v2685 = vpop.f32.mrb[0].mxu0
    %v2686 = vadd.f32 %v2006, %v2685
    %v2687 = vpop.f32.mrb[0].mxu0
    %2688 = vmatprep.mubr.f32.mxu0 %v852
    %2689 = vmatmul.mubr.f32.gmra.mrb[0].mxu0 %v851
    %v2690 = vpop.f32.mrb[0].mxu0
    %v2691 = vadd.f32 %v2011, %v2690
    %v2692 = vpop.f32.mrb[0].mxu0
    %2693 = vmatprep.mubr.f32.mxu0 %v859
    %2694 = vmatmul.mubr.f32.gmra.mrb[0].mxu0 %v858
    %v2695 = vpop.f32.mrb[0].mxu0
    %v2696 = vadd.f32 %v2016, %v2695
    %v2697 = vpop.f32.mrb[0].mxu0
    %2698 = vmatprep.mubr.f32.mxu0 %v866
    %2699 = vmatmul.mubr.f32.gmra.mrb[0].mxu0 %v865
    %v2700 = vpop.f32.mrb[0].mxu0
    %v2701 = vadd.f32 %v2021, %v2700
    %v2702 = vpop.f32.mrb[0].mxu0
    %2703 = vmatprep.mubr.f32.mxu0 %v873
    %2704 = vmatmul.mubr.f32.gmra.mrb[0].mxu0 %v872
    %v2705 = vpop.f32.mrb[0].mxu0
    %v2706 = vadd.f32 %v2026, %v2705
    %v2707 = vpop.f32.mrb[0].mxu0
    %2708 = vmatprep.mubr.f32.mxu0 %v880
    %2709 = vmatmul.mubr.f32.gmra.mrb[0].mxu0 %v879
    %v2710 = vpop.f32.mrb[0].mxu0
    %v2711 = vadd.f32 %v2031, %v2710
    %v2712 = vpop.f32.mrb[0].mxu0
    %2713 = vmatprep.mubr.f32.mxu0 %v887
    %2714 = vmatmul.mubr.f32.gmra.mrb[0].mxu0 %v886
    %v2715 = vpop.f32.mrb[0].mxu0
    %v2716 = vadd.f32 %v2036, %v2715
    %v2717 = vpop.f32.mrb[0].mxu0
    %2718 = vdwg.mxu0
    %2719 = vmatprep.subr.mxu0 0.0
    %2720 = vmatpush1.msra.mxu0 %v955
    %2721 = vmatprep.subr.mxu0 0.0
    %2722 = vmatpush1.msra.mxu0 %v956
    %2723 = vmatprep.subr.mxu0 0.0
    %2724 = vmatpush1.msra.mxu0 %v957
    %2725 = vmatprep.subr.mxu0 0.0
    %2726 = vmatpush1.msra.mxu0 %v958
    %2727 = vmatprep.subr.mxu0 0.0
    %2728 = vmatpush1.msra.mxu0 %v959
    %2729 = vmatprep.subr.mxu0 0.0
    %2730 = vmatpush1.msra.mxu0 %v960
    %2731 = vmatprep.subr.mxu0 0.0
    %2732 = vmatpush1.msra.mxu0 %v961
    %2733 = vmatprep.subr.mxu0 0.0
    %2734 = vmatpush1.msra.mxu0 %v962
    %2735 = vmatprep.subr.mxu0 0.0
    %2736 = vmatpush1.msra.mxu0 %v963
    %2737 = vmatprep.subr.mxu0 0.0
    %2738 = vmatpush1.msra.mxu0 %v964
    %2739 = vmatprep.subr.mxu0 0.0
    %2740 = vmatpush1.msra.mxu0 %v965
    %2741 = vmatprep.subr.mxu0 0.0
    %2742 = vmatpush1.msra.mxu0 %v966
    %2743 = vmatprep.subr.mxu0 0.0
    %2744 = vmatpush1.msra.mxu0 %v967
    %2745 = vmatprep.subr.mxu0 0.0
    %2746 = vmatpush1.msra.mxu0 %v968
    %2747 = vmatprep.subr.mxu0 0.0
    %2748 = vmatpush1.msra.mxu0 %v969
    %2749 = vmatprep.subr.mxu0 0.0
    %2750 = vmatpush1.msra.mxu0 %v970
    %2751 = vmatprep.subr.mxu0 0.0
    %2752 = vmatpush1.msra.mxu0 %v971
    %2753 = vmatprep.subr.mxu0 0.0
    %2754 = vmatpush1.msra.mxu0 %v972
    %2755 = vmatprep.subr.mxu0 0.0
    %2756 = vmatpush1.msra.mxu0 %v973
    %2757 = vmatprep.subr.mxu0 0.0
    %2758 = vmatpush1.msra.mxu0 %v974
    %2759 = vmatprep.subr.mxu0 0.0
    %2760 = vmatpush1.msra.mxu0 %v975
    %2761 = vmatprep.subr.mxu0 0.0
    %2762 = vmatpush1.msra.mxu0 %v976
    %2763 = vmatprep.subr.mxu0 0.0
    %2764 = vmatpush1.msra.mxu0 %v977
    %2765 = vmatprep.subr.mxu0 0.0
    %2766 = vmatpush1.msra.mxu0 %v978
    %2767 = vmatprep.subr.mxu0 0.0
    %2768 = vmatpush1.msra.mxu0 %v979
    %2769 = vmatprep.subr.mxu0 0.0
    %2770 = vmatpush1.msra.mxu0 %v980
    %2771 = vmatprep.subr.mxu0 0.0
    %2772 = vmatpush1.msra.mxu0 %v981
    %2773 = vmatprep.subr.mxu0 0.0
    %2774 = vmatpush1.msra.mxu0 %v982
    %2775 = vmatprep.subr.mxu0 0.0
    %2776 = vmatpush1.msra.mxu0 %v983
    %2777 = vmatprep.subr.mxu0 0.0
    %2778 = vmatpush1.msra.mxu0 %v984
    %2779 = vmatprep.subr.mxu0 0.0
    %2780 = vmatpush1.msra.mxu0 %v985
    %2781 = vmatprep.subr.mxu0 0.0
    %2782 = vmatpush1.msra.mxu0 %v986
    %2783 = vmatprep.mubr.f32.mxu0 %v35
    %2784 = vmatmul.mubr.f32.gmra.mrb[0].mxu0 %v34
    %v2785 = vpop.f32.mrb[0].mxu0
    %v2786 = vadd.f32 %v2106, %v2785
    %v2787 = vpop.f32.mrb[0].mxu0
    %2788 = vmatprep.mubr.f32.mxu0 %v42
    %2789 = vmatmul.mubr.f32.gmra.mrb[0].mxu0 %v41
    %v2790 = vpop.f32.mrb[0].mxu0
    %v2791 = vadd.f32 %v2111, %v2790
    %v2792 = vpop.f32.mrb[0].mxu0
    %2793 = vmatprep.mubr.f32.mxu0 %v49
    %2794 = vmatmul.mubr.f32.gmra.mrb[0].mxu0 %v48
    %v2795 = vpop.f32.mrb[0].mxu0
    %v2796 = vadd.f32 %v2116, %v2795
    %v2797 = vpop.f32.mrb[0].mxu0
    %2798 = vmatprep.mubr.f32.mxu0 %v56
    %2799 = vmatmul.mubr.f32.gmra.mrb[0].mxu0 %v55
    %v2800 = vpop.f32.mrb[0].mxu0
    %v2801 = vadd.f32 %v2121, %v2800
    %v2802 = vpop.f32.mrb[0].mxu0
    %2803 = vmatprep.mubr.f32.mxu0 %v63
    %2804 = vmatmul.mubr.f32.gmra.mrb[0].mxu0 %v62
    %v2805 = vpop.f32.mrb[0].mxu0
    %v2806 = vadd.f32 %v2126, %v2805
    %v2807 = vpop.f32.mrb[0].mxu0
    %2808 = vmatprep.mubr.f32.mxu0 %v70
    %2809 = vmatmul.mubr.f32.gmra.mrb[0].mxu0 %v69
    %v2810 = vpop.f32.mrb[0].mxu0
    %v2811 = vadd.f32 %v2131, %v2810
    %v2812 = vpop.f32.mrb[0].mxu0
    %2813 = vmatprep.mubr.f32.mxu0 %v77
    %2814 = vmatmul.mubr.f32.gmra.mrb[0].mxu0 %v76
    %v2815 = vpop.f32.mrb[0].mxu0
    %v2816 = vadd.f32 %v2136, %v2815
    %v2817 = vpop.f32.mrb[0].mxu0
    %2818 = vmatprep.mubr.f32.mxu0 %v84
    %2819 = vmatmul.mubr.f32.gmra.mrb[0].mxu0 %v83
    %v2820 = vpop.f32.mrb[0].mxu0
    %v2821 = vadd.f32 %v2141, %v2820
    %v2822 = vpop.f32.mrb[0].mxu0
    %2823 = vmatprep.mubr.f32.mxu0 %v91
    %2824 = vmatmul.mubr.f32.gmra.mrb[0].mxu0 %v90
    %v2825 = vpop.f32.mrb[0].mxu0
    %v2826 = vadd.f32 %v2146, %v2825
    %v2827 = vpop.f32.mrb[0].mxu0
    %2828 = vmatprep.mubr.f32.mxu0 %v98
    %2829 = vmatmul.mubr.f32.gmra.mrb[0].mxu0 %v97
    %v2830 = vpop.f32.mrb[0].mxu0
    %v2831 = vadd.f32 %v2151, %v2830
    %v2832 = vpop.f32.mrb[0].mxu0
    %2833 = vmatprep.mubr.f32.mxu0 %v105
    %2834 = vmatmul.mubr.f32.gmra.mrb[0].mxu0 %v104
    %v2835 = vpop.f32.mrb[0].mxu0
    %v2836 = vadd.f32 %v2156, %v2835
    %v2837 = vpop.f32.mrb[0].mxu0
    %2838 = vmatprep.mubr.f32.mxu0 %v112
    %2839 = vmatmul.mubr.f32.gmra.mrb[0].mxu0 %v111
    %v2840 = vpop.f32.mrb[0].mxu0
    %v2841 = vadd.f32 %v2161, %v2840
    %v2842 = vpop.f32.mrb[0].mxu0
    %2843 = vmatprep.mubr.f32.mxu0 %v119
    %2844 = vmatmul.mubr.f32.gmra.mrb[0].mxu0 %v118
    %v2845 = vpop.f32.mrb[0].mxu0
    %v2846 = vadd.f32 %v2166, %v2845
    %v2847 = vpop.f32.mrb[0].mxu0
    %2848 = vmatprep.mubr.f32.mxu0 %v126
    %2849 = vmatmul.mubr.f32.gmra.mrb[0].mxu0 %v125
    %v2850 = vpop.f32.mrb[0].mxu0
    %v2851 = vadd.f32 %v2171, %v2850
    %v2852 = vpop.f32.mrb[0].mxu0
    %2853 = vmatprep.mubr.f32.mxu0 %v133
    %2854 = vmatmul.mubr.f32.gmra.mrb[0].mxu0 %v132
    %v2855 = vpop.f32.mrb[0].mxu0
    %v2856 = vadd.f32 %v2176, %v2855
    %v2857 = vpop.f32.mrb[0].mxu0
    %2858 = vmatprep.mubr.f32.mxu0 %v140
    %2859 = vmatmul.mubr.f32.gmra.mrb[0].mxu0 %v139
    %v2860 = vpop.f32.mrb[0].mxu0
    %v2861 = vadd.f32 %v2181, %v2860
    %v2862 = vpop.f32.mrb[0].mxu0
    %2863 = vmatprep.mubr.f32.mxu0 %v147
    %2864 = vmatmul.mubr.f32.gmra.mrb[0].mxu0 %v146
    %v2865 = vpop.f32.mrb[0].mxu0
    %v2866 = vadd.f32 %v2186, %v2865
    %v2867 = vpop.f32.mrb[0].mxu0
    %2868 = vmatprep.mubr.f32.mxu0 %v154
    %2869 = vmatmul.mubr.f32.gmra.mrb[0].mxu0 %v153
    %v2870 = vpop.f32.mrb[0].mxu0
    %v2871 = vadd.f32 %v2191, %v2870
    %v2872 = vpop.f32.mrb[0].mxu0
    %2873 = vmatprep.mubr.f32.mxu0 %v161
    %2874 = vmatmul.mubr.f32.gmra.mrb[0].mxu0 %v160
    %v2875 = vpop.f32.mrb[0].mxu0
    %v2876 = vadd.f32 %v2196, %v2875
    %v2877 = vpop.f32.mrb[0].mxu0
    %2878 = vmatprep.mubr.f32.mxu0 %v168
    %2879 = vmatmul.mubr.f32.gmra.mrb[0].mxu0 %v167
    %v2880 = vpop.f32.mrb[0].mxu0
    %v2881 = vadd.f32 %v2201, %v2880
    %v2882 = vpop.f32.mrb[0].mxu0
    %2883 = vmatprep.mubr.f32.mxu0 %v175
    %2884 = vmatmul.mubr.f32.gmra.mrb[0].mxu0 %v174
    %v2885 = vpop.f32.mrb[0].mxu0
    %v2886 = vadd.f32 %v2206, %v2885
    %v2887 = vpop.f32.mrb[0].mxu0
    %2888 = vmatprep.mubr.f32.mxu0 %v182
    %2889 = vmatmul.mubr.f32.gmra.mrb[0].mxu0 %v181
    %v2890 = vpop.f32.mrb[0].mxu0
    %v2891 = vadd.f32 %v2211, %v2890
    %v2892 = vpop.f32.mrb[0].mxu0
    %2893 = vmatprep.mubr.f32.mxu0 %v189
    %2894 = vmatmul.mubr.f32.gmra.mrb[0].mxu0 %v188
    %v2895 = vpop.f32.mrb[0].mxu0
    %v2896 = vadd.f32 %v2216, %v2895
    %v2897 = vpop.f32.mrb[0].mxu0
    %2898 = vmatprep.mubr.f32.mxu0 %v196
    %2899 = vmatmul.mubr.f32.gmra.mrb[0].mxu0 %v195
    %v2900 = vpop.f32.mrb[0].mxu0
    %v2901 = vadd.f32 %v2221, %v2900
    %v2902 = vpop.f32.mrb[0].mxu0
    %2903 = vmatprep.mubr.f32.mxu0 %v203
    %2904 = vmatmul.mubr.f32.gmra.mrb[0].mxu0 %v202
    %v2905 = vpop.f32.mrb[0].mxu0
    %v2906 = vadd.f32 %v2226, %v2905
    %v2907 = vpop.f32.mrb[0].mxu0
    %2908 = vmatprep.mubr.f32.mxu0 %v210
    %2909 = vmatmul.mubr.f32.gmra.mrb[0].mxu0 %v209
    %v2910 = vpop.f32.mrb[0].mxu0
    %v2911 = vadd.f32 %v2231, %v2910
    %v2912 = vpop.f32.mrb[0].mxu0
    %2913 = vmatprep.mubr.f32.mxu0 %v217
    %2914 = vmatmul.mubr.f32.gmra.mrb[0].mxu0 %v216
    %v2915 = vpop.f32.mrb[0].mxu0
    %v2916 = vadd.f32 %v2236, %v2915
    %v2917 = vpop.f32.mrb[0].mxu0
    %2918 = vmatprep.mubr.f32.mxu0 %v224
    %2919 = vmatmul.mubr.f32.gmra.mrb[0].mxu0 %v223
    %v2920 = vpop.f32.mrb[0].mxu0
    %v2921 = vadd.f32 %v2241, %v2920
    %v2922 = vpop.f32.mrb[0].mxu0
    %2923 = vmatprep.mubr.f32.mxu0 %v231
    %2924 = vmatmul.mubr.f32.gmra.mrb[0].mxu0 %v230
    %v2925 = vpop.f32.mrb[0].mxu0
    %v2926 = vadd.f32 %v2246, %v2925
    %v2927 = vpop.f32.mrb[0].mxu0
    %2928 = vmatprep.mubr.f32.mxu0 %v238
    %2929 = vmatmul.mubr.f32.gmra.mrb[0].mxu0 %v237
    %v2930 = vpop.f32.mrb[0].mxu0
    %v2931 = vadd.f32 %v2251, %v2930
    %v2932 = vpop.f32.mrb[0].mxu0
    %2933 = vmatprep.mubr.f32.mxu0 %v245
    %2934 = vmatmul.mubr.f32.gmra.mrb[0].mxu0 %v244
    %v2935 = vpop.f32.mrb[0].mxu0
    %v2936 = vadd.f32 %v2256, %v2935
    %v2937 = vpop.f32.mrb[0].mxu0
    %2938 = vmatprep.mubr.f32.mxu0 %v252
    %2939 = vmatmul.mubr.f32.gmra.mrb[0].mxu0 %v251
    %v2940 = vpop.f32.mrb[0].mxu0
    %v2941 = vadd.f32 %v2261, %v2940
    %v2942 = vpop.f32.mrb[0].mxu0
    %2943 = vmatprep.mubr.f32.mxu0 %v259
    %2944 = vmatmul.mubr.f32.gmra.mrb[0].mxu0 %v258
    %v2945 = vpop.f32.mrb[0].mxu0
    %v2946 = vadd.f32 %v2266, %v2945
    %v2947 = vpop.f32.mrb[0].mxu0
    %2948 = vmatprep.mubr.f32.mxu0 %v266
    %2949 = vmatmul.mubr.f32.gmra.mrb[0].mxu0 %v265
    %v2950 = vpop.f32.mrb[0].mxu0
    %v2951 = vadd.f32 %v2271, %v2950
    %v2952 = vpop.f32.mrb[0].mxu0
    %2953 = vmatprep.mubr.f32.mxu0 %v273
    %2954 = vmatmul.mubr.f32.gmra.mrb[0].mxu0 %v272
    %v2955 = vpop.f32.mrb[0].mxu0
    %v2956 = vadd.f32 %v2276, %v2955
    %v2957 = vpop.f32.mrb[0].mxu0
    %2958 = vmatprep.mubr.f32.mxu0 %v280
    %2959 = vmatmul.mubr.f32.gmra.mrb[0].mxu0 %v279
    %v2960 = vpop.f32.mrb[0].mxu0
    %v2961 = vadd.f32 %v2281, %v2960
    %v2962 = vpop.f32.mrb[0].mxu0
    %2963 = vmatprep.mubr.f32.mxu0 %v287
    %2964 = vmatmul.mubr.f32.gmra.mrb[0].mxu0 %v286
    %v2965 = vpop.f32.mrb[0].mxu0
    %v2966 = vadd.f32 %v2286, %v2965
    %v2967 = vpop.f32.mrb[0].mxu0
    %2968 = vmatprep.mubr.f32.mxu0 %v294
    %2969 = vmatmul.mubr.f32.gmra.mrb[0].mxu0 %v293
    %v2970 = vpop.f32.mrb[0].mxu0
    %v2971 = vadd.f32 %v2291, %v2970
    %v2972 = vpop.f32.mrb[0].mxu0
    %2973 = vmatprep.mubr.f32.mxu0 %v301
    %2974 = vmatmul.mubr.f32.gmra.mrb[0].mxu0 %v300
    %v2975 = vpop.f32.mrb[0].mxu0
    %v2976 = vadd.f32 %v2296, %v2975
    %v2977 = vpop.f32.mrb[0].mxu0
    %2978 = vmatprep.mubr.f32.mxu0 %v308
    %2979 = vmatmul.mubr.f32.gmra.mrb[0].mxu0 %v307
    %v2980 = vpop.f32.mrb[0].mxu0
    %v2981 = vadd.f32 %v2301, %v2980
    %v2982 = vpop.f32.mrb[0].mxu0
    %2983 = vmatprep.mubr.f32.mxu0 %v315
    %2984 = vmatmul.mubr.f32.gmra.mrb[0].mxu0 %v314
    %v2985 = vpop.f32.mrb[0].mxu0
    %v2986 = vadd.f32 %v2306, %v2985
    %v2987 = vpop.f32.mrb[0].mxu0
    %2988 = vmatprep.mubr.f32.mxu0 %v322
    %2989 = vmatmul.mubr.f32.gmra.mrb[0].mxu0 %v321
    %v2990 = vpop.f32.mrb[0].mxu0
    %v2991 = vadd.f32 %v2311, %v2990
    %v2992 = vpop.f32.mrb[0].mxu0
    %2993 = vmatprep.mubr.f32.mxu0 %v329
    %2994 = vmatmul.mubr.f32.gmra.mrb[0].mxu0 %v328
    %v2995 = vpop.f32.mrb[0].mxu0
    %v2996 = vadd.f32 %v2316, %v2995
    %v2997 = vpop.f32.mrb[0].mxu0
    %2998 = vmatprep.mubr.f32.mxu0 %v336
    %2999 = vmatmul.mubr.f32.gmra.mrb[0].mxu0 %v335
    %v3000 = vpop.f32.mrb[0].mxu0
    %v3001 = vadd.f32 %v2321, %v3000
    %v3002 = vpop.f32.mrb[0].mxu0
    %3003 = vmatprep.mubr.f32.mxu0 %v343
    %3004 = vmatmul.mubr.f32.gmra.mrb[0].mxu0 %v342
    %v3005 = vpop.f32.mrb[0].mxu0
    %v3006 = vadd.f32 %v2326, %v3005
    %v3007 = vpop.f32.mrb[0].mxu0
    %3008 = vmatprep.mubr.f32.mxu0 %v350
    %3009 = vmatmul.mubr.f32.gmra.mrb[0].mxu0 %v349
    %v3010 = vpop.f32.mrb[0].mxu0
    %v3011 = vadd.f32 %v2331, %v3010
    %v3012 = vpop.f32.mrb[0].mxu0
    %3013 = vmatprep.mubr.f32.mxu0 %v357
    %3014 = vmatmul.mubr.f32.gmra.mrb[0].mxu0 %v356
    %v3015 = vpop.f32.mrb[0].mxu0
    %v3016 = vadd.f32 %v2336, %v3015
    %v3017 = vpop.f32.mrb[0].mxu0
    %3018 = vmatprep.mubr.f32.mxu0 %v364
    %3019 = vmatmul.mubr.f32.gmra.mrb[0].mxu0 %v363
    %v3020 = vpop.f32.mrb[0].mxu0
    %v3021 = vadd.f32 %v2341, %v3020
    %v3022 = vpop.f32.mrb[0].mxu0
    %3023 = vmatprep.mubr.f32.mxu0 %v371
    %3024 = vmatmul.mubr.f32.gmra.mrb[0].mxu0 %v370
    %v3025 = vpop.f32.mrb[0].mxu0
    %v3026 = vadd.f32 %v2346, %v3025
    %v3027 = vpop.f32.mrb[0].mxu0
    %3028 = vmatprep.mubr.f32.mxu0 %v378
    %3029 = vmatmul.mubr.f32.gmra.mrb[0].mxu0 %v377
    %v3030 = vpop.f32.mrb[0].mxu0
    %v3031 = vadd.f32 %v2351, %v3030
    %v3032 = vpop.f32.mrb[0].mxu0
    %3033 = vmatprep.mubr.f32.mxu0 %v385
    %3034 = vmatmul.mubr.f32.gmra.mrb[0].mxu0 %v384
    %v3035 = vpop.f32.mrb[0].mxu0
    %v3036 = vadd.f32 %v2356, %v3035
    %v3037 = vpop.f32.mrb[0].mxu0
    %3038 = vmatprep.mubr.f32.mxu0 %v392
    %3039 = vmatmul.mubr.f32.gmra.mrb[0].mxu0 %v391
    %v3040 = vpop.f32.mrb[0].mxu0
    %v3041 = vadd.f32 %v2361, %v3040
    %v3042 = vpop.f32.mrb[0].mxu0
    %3043 = vmatprep.mubr.f32.mxu0 %v399
    %3044 = vmatmul.mubr.f32.gmra.mrb[0].mxu0 %v398
    %v3045 = vpop.f32.mrb[0].mxu0
    %v3046 = vadd.f32 %v2366, %v3045
    %v3047 = vpop.f32.mrb[0].mxu0
    %3048 = vmatprep.mubr.f32.mxu0 %v406
    %3049 = vmatmul.mubr.f32.gmra.mrb[0].mxu0 %v405
    %v3050 = vpop.f32.mrb[0].mxu0
    %v3051 = vadd.f32 %v2371, %v3050
    %v3052 = vpop.f32.mrb[0].mxu0
    %3053 = vmatprep.mubr.f32.mxu0 %v413
    %3054 = vmatmul.mubr.f32.gmra.mrb[0].mxu0 %v412
    %v3055 = vpop.f32.mrb[0].mxu0
    %v3056 = vadd.f32 %v2376, %v3055
    %v3057 = vpop.f32.mrb[0].mxu0
    %3058 = vmatprep.mubr.f32.mxu0 %v420
    %3059 = vmatmul.mubr.f32.gmra.mrb[0].mxu0 %v419
    %v3060 = vpop.f32.mrb[0].mxu0
    %v3061 = vadd.f32 %v2381, %v3060
    %v3062 = vpop.f32.mrb[0].mxu0
    %3063 = vmatprep.mubr.f32.mxu0 %v427
    %3064 = vmatmul.mubr.f32.gmra.mrb[0].mxu0 %v426
    %v3065 = vpop.f32.mrb[0].mxu0
    %v3066 = vadd.f32 %v2386, %v3065
    %v3067 = vpop.f32.mrb[0].mxu0
    %3068 = vmatprep.mubr.f32.mxu0 %v434
    %3069 = vmatmul.mubr.f32.gmra.mrb[0].mxu0 %v433
    %v3070 = vpop.f32.mrb[0].mxu0
    %v3071 = vadd.f32 %v2391, %v3070
    %v3072 = vpop.f32.mrb[0].mxu0
    %3073 = vmatprep.mubr.f32.mxu0 %v441
    %3074 = vmatmul.mubr.f32.gmra.mrb[0].mxu0 %v440
    %v3075 = vpop.f32.mrb[0].mxu0
    %v3076 = vadd.f32 %v2396, %v3075
    %v3077 = vpop.f32.mrb[0].mxu0
    %3078 = vmatprep.mubr.f32.mxu0 %v448
    %3079 = vmatmul.mubr.f32.gmra.mrb[0].mxu0 %v447
    %v3080 = vpop.f32.mrb[0].mxu0
    %v3081 = vadd.f32 %v2401, %v3080
    %v3082 = vpop.f32.mrb[0].mxu0
    %3083 = vmatprep.mubr.f32.mxu0 %v455
    %3084 = vmatmul.mubr.f32.gmra.mrb[0].mxu0 %v454
    %v3085 = vpop.f32.mrb[0].mxu0
    %v3086 = vadd.f32 %v2406, %v3085
    %v3087 = vpop.f32.mrb[0].mxu0
    %3088 = vmatprep.mubr.f32.mxu0 %v462
    %3089 = vmatmul.mubr.f32.gmra.mrb[0].mxu0 %v461
    %v3090 = vpop.f32.mrb[0].mxu0
    %v3091 = vadd.f32 %v2411, %v3090
    %v3092 = vpop.f32.mrb[0].mxu0
    %3093 = vmatprep.mubr.f32.mxu0 %v469
    %3094 = vmatmul.mubr.f32.gmra.mrb[0].mxu0 %v468
    %v3095 = vpop.f32.mrb[0].mxu0
    %v3096 = vadd.f32 %v2416, %v3095
    %v3097 = vpop.f32.mrb[0].mxu0
    %3098 = vmatprep.mubr.f32.mxu0 %v476
    %3099 = vmatmul.mubr.f32.gmra.mrb[0].mxu0 %v475
    %v3100 = vpop.f32.mrb[0].mxu0
    %v3101 = vadd.f32 %v2421, %v3100
    %v3102 = vpop.f32.mrb[0].mxu0
    %3103 = vmatprep.mubr.f32.mxu0 %v483
    %3104 = vmatmul.mubr.f32.gmra.mrb[0].mxu0 %v482
    %v3105 = vpop.f32.mrb[0].mxu0
    %v3106 = vadd.f32 %v2426, %v3105
    %v3107 = vpop.f32.mrb[0].mxu0
    %3108 = vmatprep.mubr.f32.mxu0 %v490
    %3109 = vmatmul.mubr.f32.gmra.mrb[0].mxu0 %v489
    %v3110 = vpop.f32.mrb[0].mxu0
    %v3111 = vadd.f32 %v2431, %v3110
    %v3112 = vpop.f32.mrb[0].mxu0
    %3113 = vmatprep.mubr.f32.mxu0 %v497
    %3114 = vmatmul.mubr.f32.gmra.mrb[0].mxu0 %v496
    %v3115 = vpop.f32.mrb[0].mxu0
    %v3116 = vadd.f32 %v2436, %v3115
    %v3117 = vpop.f32.mrb[0].mxu0
    %3118 = vmatprep.mubr.f32.mxu0 %v504
    %3119 = vmatmul.mubr.f32.gmra.mrb[0].mxu0 %v503
    %v3120 = vpop.f32.mrb[0].mxu0
    %v3121 = vadd.f32 %v2441, %v3120
    %v3122 = vpop.f32.mrb[0].mxu0
    %3123 = vmatprep.mubr.f32.mxu0 %v511
    %3124 = vmatmul.mubr.f32.gmra.mrb[0].mxu0 %v510
    %v3125 = vpop.f32.mrb[0].mxu0
    %v3126 = vadd.f32 %v2446, %v3125
    %v3127 = vpop.f32.mrb[0].mxu0
    %3128 = vmatprep.mubr.f32.mxu0 %v518
    %3129 = vmatmul.mubr.f32.gmra.mrb[0].mxu0 %v517
    %v3130 = vpop.f32.mrb[0].mxu0
    %v3131 = vadd.f32 %v2451, %v3130
    %v3132 = vpop.f32.mrb[0].mxu0
    %3133 = vmatprep.mubr.f32.mxu0 %v525
    %3134 = vmatmul.mubr.f32.gmra.mrb[0].mxu0 %v524
    %v3135 = vpop.f32.mrb[0].mxu0
    %v3136 = vadd.f32 %v2456, %v3135
    %v3137 = vpop.f32.mrb[0].mxu0
    %3138 = vmatprep.mubr.f32.mxu0 %v532
    %3139 = vmatmul.mubr.f32.gmra.mrb[0].mxu0 %v531
    %v3140 = vpop.f32.mrb[0].mxu0
    %v3141 = vadd.f32 %v2461, %v3140
    %v3142 = vpop.f32.mrb[0].mxu0
    %3143 = vmatprep.mubr.f32.mxu0 %v539
    %3144 = vmatmul.mubr.f32.gmra.mrb[0].mxu0 %v538
    %v3145 = vpop.f32.mrb[0].mxu0
    %v3146 = vadd.f32 %v2466, %v3145
    %v3147 = vpop.f32.mrb[0].mxu0
    %3148 = vmatprep.mubr.f32.mxu0 %v546
    %3149 = vmatmul.mubr.f32.gmra.mrb[0].mxu0 %v545
    %v3150 = vpop.f32.mrb[0].mxu0
    %v3151 = vadd.f32 %v2471, %v3150
    %v3152 = vpop.f32.mrb[0].mxu0
    %3153 = vmatprep.mubr.f32.mxu0 %v553
    %3154 = vmatmul.mubr.f32.gmra.mrb[0].mxu0 %v552
    %v3155 = vpop.f32.mrb[0].mxu0
    %v3156 = vadd.f32 %v2476, %v3155
    %v3157 = vpop.f32.mrb[0].mxu0
    %3158 = vmatprep.mubr.f32.mxu0 %v560
    %3159 = vmatmul.mubr.f32.gmra.mrb[0].mxu0 %v559
    %v3160 = vpop.f32.mrb[0].mxu0
    %v3161 = vadd.f32 %v2481, %v3160
    %v3162 = vpop.f32.mrb[0].mxu0
    %3163 = vmatprep.mubr.f32.mxu0 %v567
    %3164 = vmatmul.mubr.f32.gmra.mrb[0].mxu0 %v566
    %v3165 = vpop.f32.mrb[0].mxu0
    %v3166 = vadd.f32 %v2486, %v3165
    %v3167 = vpop.f32.mrb[0].mxu0
    %3168 = vmatprep.mubr.f32.mxu0 %v574
    %3169 = vmatmul.mubr.f32.gmra.mrb[0].mxu0 %v573
    %v3170 = vpop.f32.mrb[0].mxu0
    %v3171 = vadd.f32 %v2491, %v3170
    %v3172 = vpop.f32.mrb[0].mxu0
    %3173 = vmatprep.mubr.f32.mxu0 %v581
    %3174 = vmatmul.mubr.f32.gmra.mrb[0].mxu0 %v580
    %v3175 = vpop.f32.mrb[0].mxu0
    %v3176 = vadd.f32 %v2496, %v3175
    %v3177 = vpop.f32.mrb[0].mxu0
    %3178 = vmatprep.mubr.f32.mxu0 %v588
    %3179 = vmatmul.mubr.f32.gmra.mrb[0].mxu0 %v587
    %v3180 = vpop.f32.mrb[0].mxu0
    %v3181 = vadd.f32 %v2501, %v3180
    %v3182 = vpop.f32.mrb[0].mxu0
    %3183 = vmatprep.mubr.f32.mxu0 %v595
    %3184 = vmatmul.mubr.f32.gmra.mrb[0].mxu0 %v594
    %v3185 = vpop.f32.mrb[0].mxu0
    %v3186 = vadd.f32 %v2506, %v3185
    %v3187 = vpop.f32.mrb[0].mxu0
    %3188 = vmatprep.mubr.f32.mxu0 %v602
    %3189 = vmatmul.mubr.f32.gmra.mrb[0].mxu0 %v601
    %v3190 = vpop.f32.mrb[0].mxu0
    %v3191 = vadd.f32 %v2511, %v3190
    %v3192 = vpop.f32.mrb[0].mxu0
    %3193 = vmatprep.mubr.f32.mxu0 %v609
    %3194 = vmatmul.mubr.f32.gmra.mrb[0].mxu0 %v608
    %v3195 = vpop.f32.mrb[0].mxu0
    %v3196 = vadd.f32 %v2516, %v3195
    %v3197 = vpop.f32.mrb[0].mxu0
    %3198 = vmatprep.mubr.f32.mxu0 %v616
    %3199 = vmatmul.mubr.f32.gmra.mrb[0].mxu0 %v615
    %v3200 = vpop.f32.mrb[0].mxu0
    %v3201 = vadd.f32 %v2521, %v3200
    %v3202 = vpop.f32.mrb[0].mxu0
    %3203 = vmatprep.mubr.f32.mxu0 %v623
    %3204 = vmatmul.mubr.f32.gmra.mrb[0].mxu0 %v622
    %v3205 = vpop.f32.mrb[0].mxu0
    %v3206 = vadd.f32 %v2526, %v3205
    %v3207 = vpop.f32.mrb[0].mxu0
    %3208 = vmatprep.mubr.f32.mxu0 %v630
    %3209 = vmatmul.mubr.f32.gmra.mrb[0].mxu0 %v629
    %v3210 = vpop.f32.mrb[0].mxu0
    %v3211 = vadd.f32 %v2531, %v3210
    %v3212 = vpop.f32.mrb[0].mxu0
    %3213 = vmatprep.mubr.f32.mxu0 %v637
    %3214 = vmatmul.mubr.f32.gmra.mrb[0].mxu0 %v636
    %v3215 = vpop.f32.mrb[0].mxu0
    %v3216 = vadd.f32 %v2536, %v3215
    %v3217 = vpop.f32.mrb[0].mxu0
    %3218 = vmatprep.mubr.f32.mxu0 %v644
    %3219 = vmatmul.mubr.f32.gmra.mrb[0].mxu0 %v643
    %v3220 = vpop.f32.mrb[0].mxu0
    %v3221 = vadd.f32 %v2541, %v3220
    %v3222 = vpop.f32.mrb[0].mxu0
    %3223 = vmatprep.mubr.f32.mxu0 %v651
    %3224 = vmatmul.mubr.f32.gmra.mrb[0].mxu0 %v650
    %v3225 = vpop.f32.mrb[0].mxu0
    %v3226 = vadd.f32 %v2546, %v3225
    %v3227 = vpop.f32.mrb[0].mxu0
    %3228 = vmatprep.mubr.f32.mxu0 %v658
    %3229 = vmatmul.mubr.f32.gmra.mrb[0].mxu0 %v657
    %v3230 = vpop.f32.mrb[0].mxu0
    %v3231 = vadd.f32 %v2551, %v3230
    %v3232 = vpop.f32.mrb[0].mxu0
    %3233 = vmatprep.mubr.f32.mxu0 %v665
    %3234 = vmatmul.mubr.f32.gmra.mrb[0].mxu0 %v664
    %v3235 = vpop.f32.mrb[0].mxu0
    %v3236 = vadd.f32 %v2556, %v3235
    %v3237 = vpop.f32.mrb[0].mxu0
    %3238 = vmatprep.mubr.f32.mxu0 %v672
    %3239 = vmatmul.mubr.f32.gmra.mrb[0].mxu0 %v671
    %v3240 = vpop.f32.mrb[0].mxu0
    %v3241 = vadd.f32 %v2561, %v3240
    %v3242 = vpop.f32.mrb[0].mxu0
    %3243 = vmatprep.mubr.f32.mxu0 %v679
    %3244 = vmatmul.mubr.f32.gmra.mrb[0].mxu0 %v678
    %v3245 = vpop.f32.mrb[0].mxu0
    %v3246 = vadd.f32 %v2566, %v3245
    %v3247 = vpop.f32.mrb[0].mxu0
    %3248 = vmatprep.mubr.f32.mxu0 %v686
    %3249 = vmatmul.mubr.f32.gmra.mrb[0].mxu0 %v685
    %v3250 = vpop.f32.mrb[0].mxu0
    %v3251 = vadd.f32 %v2571, %v3250
    %v3252 = vpop.f32.mrb[0].mxu0
    %3253 = vmatprep.mubr.f32.mxu0 %v693
    %3254 = vmatmul.mubr.f32.gmra.mrb[0].mxu0 %v692
    %v3255 = vpop.f32.mrb[0].mxu0
    %v3256 = vadd.f32 %v2576, %v3255
    %v3257 = vpop.f32.mrb[0].mxu0
    %3258 = vmatprep.mubr.f32.mxu0 %v700
    %3259 = vmatmul.mubr.f32.gmra.mrb[0].mxu0 %v699
    %v3260 = vpop.f32.mrb[0].mxu0
    %v3261 = vadd.f32 %v2581, %v3260
    %v3262 = vpop.f32.mrb[0].mxu0
    %3263 = vmatprep.mubr.f32.mxu0 %v707
    %3264 = vmatmul.mubr.f32.gmra.mrb[0].mxu0 %v706
    %v3265 = vpop.f32.mrb[0].mxu0
    %v3266 = vadd.f32 %v2586, %v3265
    %v3267 = vpop.f32.mrb[0].mxu0
    %3268 = vmatprep.mubr.f32.mxu0 %v714
    %3269 = vmatmul.mubr.f32.gmra.mrb[0].mxu0 %v713
    %v3270 = vpop.f32.mrb[0].mxu0
    %v3271 = vadd.f32 %v2591, %v3270
    %v3272 = vpop.f32.mrb[0].mxu0
    %3273 = vmatprep.mubr.f32.mxu0 %v721
    %3274 = vmatmul.mubr.f32.gmra.mrb[0].mxu0 %v720
    %v3275 = vpop.f32.mrb[0].mxu0
    %v3276 = vadd.f32 %v2596, %v3275
    %v3277 = vpop.f32.mrb[0].mxu0
    %3278 = vmatprep.mubr.f32.mxu0 %v728
    %3279 = vmatmul.mubr.f32.gmra.mrb[0].mxu0 %v727
    %v3280 = vpop.f32.mrb[0].mxu0
    %v3281 = vadd.f32 %v2601, %v3280
    %v3282 = vpop.f32.mrb[0].mxu0
    %3283 = vmatprep.mubr.f32.mxu0 %v735
    %3284 = vmatmul.mubr.f32.gmra.mrb[0].mxu0 %v734
    %v3285 = vpop.f32.mrb[0].mxu0
    %v3286 = vadd.f32 %v2606, %v3285
    %v3287 = vpop.f32.mrb[0].mxu0
    %3288 = vmatprep.mubr.f32.mxu0 %v742
    %3289 = vmatmul.mubr.f32.gmra.mrb[0].mxu0 %v741
    %v3290 = vpop.f32.mrb[0].mxu0
    %v3291 = vadd.f32 %v2611, %v3290
    %v3292 = vpop.f32.mrb[0].mxu0
    %3293 = vmatprep.mubr.f32.mxu0 %v749
    %3294 = vmatmul.mubr.f32.gmra.mrb[0].mxu0 %v748
    %v3295 = vpop.f32.mrb[0].mxu0
    %v3296 = vadd.f32 %v2616, %v3295
    %v3297 = vpop.f32.mrb[0].mxu0
    %3298 = vmatprep.mubr.f32.mxu0 %v756
    %3299 = vmatmul.mubr.f32.gmra.mrb[0].mxu0 %v755
    %v3300 = vpop.f32.mrb[0].mxu0
    %v3301 = vadd.f32 %v2621, %v3300
    %v3302 = vpop.f32.mrb[0].mxu0
    %3303 = vmatprep.mubr.f32.mxu0 %v763
    %3304 = vmatmul.mubr.f32.gmra.mrb[0].mxu0 %v762
    %v3305 = vpop.f32.mrb[0].mxu0
    %v3306 = vadd.f32 %v2626, %v3305
    %v3307 = vpop.f32.mrb[0].mxu0
    %3308 = vmatprep.mubr.f32.mxu0 %v770
    %3309 = vmatmul.mubr.f32.gmra.mrb[0].mxu0 %v769
    %v3310 = vpop.f32.mrb[0].mxu0
    %v3311 = vadd.f32 %v2631, %v3310
    %v3312 = vpop.f32.mrb[0].mxu0
    %3313 = vmatprep.mubr.f32.mxu0 %v777
    %3314 = vmatmul.mubr.f32.gmra.mrb[0].mxu0 %v776
    %v3315 = vpop.f32.mrb[0].mxu0
    %v3316 = vadd.f32 %v2636, %v3315
    %v3317 = vpop.f32.mrb[0].mxu0
    %3318 = vmatprep.mubr.f32.mxu0 %v784
    %3319 = vmatmul.mubr.f32.gmra.mrb[0].mxu0 %v783
    %v3320 = vpop.f32.mrb[0].mxu0
    %v3321 = vadd.f32 %v2641, %v3320
    %v3322 = vpop.f32.mrb[0].mxu0
    %3323 = vmatprep.mubr.f32.mxu0 %v791
    %3324 = vmatmul.mubr.f32.gmra.mrb[0].mxu0 %v790
    %v3325 = vpop.f32.mrb[0].mxu0
    %v3326 = vadd.f32 %v2646, %v3325
    %v3327 = vpop.f32.mrb[0].mxu0
    %3328 = vmatprep.mubr.f32.mxu0 %v798
    %3329 = vmatmul.mubr.f32.gmra.mrb[0].mxu0 %v797
    %v3330 = vpop.f32.mrb[0].mxu0
    %v3331 = vadd.f32 %v2651, %v3330
    %v3332 = vpop.f32.mrb[0].mxu0
    %3333 = vmatprep.mubr.f32.mxu0 %v805
    %3334 = vmatmul.mubr.f32.gmra.mrb[0].mxu0 %v804
    %v3335 = vpop.f32.mrb[0].mxu0
    %v3336 = vadd.f32 %v2656, %v3335
    %v3337 = vpop.f32.mrb[0].mxu0
    %3338 = vmatprep.mubr.f32.mxu0 %v812
    %3339 = vmatmul.mubr.f32.gmra.mrb[0].mxu0 %v811
    %v3340 = vpop.f32.mrb[0].mxu0
    %v3341 = vadd.f32 %v2661, %v3340
    %v3342 = vpop.f32.mrb[0].mxu0
    %3343 = vmatprep.mubr.f32.mxu0 %v819
    %3344 = vmatmul.mubr.f32.gmra.mrb[0].mxu0 %v818
    %v3345 = vpop.f32.mrb[0].mxu0
    %v3346 = vadd.f32 %v2666, %v3345
    %v3347 = vpop.f32.mrb[0].mxu0
    %3348 = vmatprep.mubr.f32.mxu0 %v826
    %3349 = vmatmul.mubr.f32.gmra.mrb[0].mxu0 %v825
    %v3350 = vpop.f32.mrb[0].mxu0
    %v3351 = vadd.f32 %v2671, %v3350
    %v3352 = vpop.f32.mrb[0].mxu0
    %3353 = vmatprep.mubr.f32.mxu0 %v833
    %3354 = vmatmul.mubr.f32.gmra.mrb[0].mxu0 %v832
    %v3355 = vpop.f32.mrb[0].mxu0
    %v3356 = vadd.f32 %v2676, %v3355
    %v3357 = vpop.f32.mrb[0].mxu0
    %3358 = vmatprep.mubr.f32.mxu0 %v840
    %3359 = vmatmul.mubr.f32.gmra.mrb[0].mxu0 %v839
    %v3360 = vpop.f32.mrb[0].mxu0
    %v3361 = vadd.f32 %v2681, %v3360
    %v3362 = vpop.f32.mrb[0].mxu0
    %3363 = vmatprep.mubr.f32.mxu0 %v847
    %3364 = vmatmul.mubr.f32.gmra.mrb[0].mxu0 %v846
    %v3365 = vpop.f32.mrb[0].mxu0
    %v3366 = vadd.f32 %v2686, %v3365
    %v3367 = vpop.f32.mrb[0].mxu0
    %3368 = vmatprep.mubr.f32.mxu0 %v854
    %3369 = vmatmul.mubr.f32.gmra.mrb[0].mxu0 %v853
    %v3370 = vpop.f32.mrb[0].mxu0
    %v3371 = vadd.f32 %v2691, %v3370
    %v3372 = vpop.f32.mrb[0].mxu0
    %3373 = vmatprep.mubr.f32.mxu0 %v861
    %3374 = vmatmul.mubr.f32.gmra.mrb[0].mxu0 %v860
    %v3375 = vpop.f32.mrb[0].mxu0
    %v3376 = vadd.f32 %v2696, %v3375
    %v3377 = vpop.f32.mrb[0].mxu0
    %3378 = vmatprep.mubr.f32.mxu0 %v868
    %3379 = vmatmul.mubr.f32.gmra.mrb[0].mxu0 %v867
    %v3380 = vpop.f32.mrb[0].mxu0
    %v3381 = vadd.f32 %v2701, %v3380
    %v3382 = vpop.f32.mrb[0].mxu0
    %3383 = vmatprep.mubr.f32.mxu0 %v875
    %3384 = vmatmul.mubr.f32.gmra.mrb[0].mxu0 %v874
    %v3385 = vpop.f32.mrb[0].mxu0
    %v3386 = vadd.f32 %v2706, %v3385
    %v3387 = vpop.f32.mrb[0].mxu0
    %3388 = vmatprep.mubr.f32.mxu0 %v882
    %3389 = vmatmul.mubr.f32.gmra.mrb[0].mxu0 %v881
    %v3390 = vpop.f32.mrb[0].mxu0
    %v3391 = vadd.f32 %v2711, %v3390
    %v3392 = vpop.f32.mrb[0].mxu0
    %3393 = vmatprep.mubr.f32.mxu0 %v889
    %3394 = vmatmul.mubr.f32.gmra.mrb[0].mxu0 %v888
    %v3395 = vpop.f32.mrb[0].mxu0
    %v3396 = vadd.f32 %v2716, %v3395
    %v3397 = vpop.f32.mrb[0].mxu0
    %3398 = vdwg.mxu0
    %3399 = vmatprep.subr.mxu0 0.0
    %3400 = vmatpush1.msra.mxu0 %v987
    %3401 = vmatprep.subr.mxu0 0.0
    %3402 = vmatpush1.msra.mxu0 %v988
    %3403 = vmatprep.subr.mxu0 0.0
    %3404 = vmatpush1.msra.mxu0 0.0
    %3405 = vmatprep.subr.mxu0 0.0
    %3406 = vmatpush1.msra.mxu0 0.0
    %3407 = vmatprep.subr.mxu0 0.0
    %3408 = vmatpush1.msra.mxu0 0.0
    %3409 = vmatprep.subr.mxu0 0.0
    %3410 = vmatpush1.msra.mxu0 0.0
    %3411 = vmatprep.subr.mxu0 0.0
    %3412 = vmatpush1.msra.mxu0 0.0
    %3413 = vmatprep.subr.mxu0 0.0
    %3414 = vmatpush1.msra.mxu0 0.0
    %3415 = vmatprep.subr.mxu0 0.0
    %3416 = vmatpush1.msra.mxu0 0.0
    %3417 = vmatprep.subr.mxu0 0.0
    %3418 = vmatpush1.msra.mxu0 0.0
    %3419 = vmatprep.subr.mxu0 0.0
    %3420 = vmatpush1.msra.mxu0 0.0
    %3421 = vmatprep.subr.mxu0 0.0
    %3422 = vmatpush1.msra.mxu0 0.0
    %3423 = vmatprep.subr.mxu0 0.0
    %3424 = vmatpush1.msra.mxu0 0.0
    %3425 = vmatprep.subr.mxu0 0.0
    %3426 = vmatpush1.msra.mxu0 0.0
    %3427 = vmatprep.subr.mxu0 0.0
    %3428 = vmatpush1.msra.mxu0 0.0
    %3429 = vmatprep.subr.mxu0 0.0
    %3430 = vmatpush1.msra.mxu0 0.0
    %3431 = vmatprep.subr.mxu0 0.0
    %3432 = vmatpush1.msra.mxu0 0.0
    %3433 = vmatprep.subr.mxu0 0.0
    %3434 = vmatpush1.msra.mxu0 0.0
    %3435 = vmatprep.subr.mxu0 0.0
    %3436 = vmatpush1.msra.mxu0 0.0
    %3437 = vmatprep.subr.mxu0 0.0
    %3438 = vmatpush1.msra.mxu0 0.0
    %3439 = vmatprep.subr.mxu0 0.0
    %3440 = vmatpush1.msra.mxu0 0.0
    %3441 = vmatprep.subr.mxu0 0.0
    %3442 = vmatpush1.msra.mxu0 0.0
    %3443 = vmatprep.subr.mxu0 0.0
    %3444 = vmatpush1.msra.mxu0 0.0
    %3445 = vmatprep.subr.mxu0 0.0
    %3446 = vmatpush1.msra.mxu0 0.0
    %3447 = vmatprep.subr.mxu0 0.0
    %3448 = vmatpush1.msra.mxu0 0.0
    %3449 = vmatprep.subr.mxu0 0.0
    %3450 = vmatpush1.msra.mxu0 0.0
    %3451 = vmatprep.subr.mxu0 0.0
    %3452 = vmatpush1.msra.mxu0 0.0
    %3453 = vmatprep.subr.mxu0 0.0
    %3454 = vmatpush1.msra.mxu0 0.0
    %3455 = vmatprep.subr.mxu0 0.0
    %3456 = vmatpush1.msra.mxu0 0.0
    %3457 = vmatprep.subr.mxu0 0.0
    %3458 = vmatpush1.msra.mxu0 0.0
    %3459 = vmatprep.subr.mxu0 0.0
    %3460 = vmatpush1.msra.mxu0 0.0
    %3461 = vmatprep.subr.mxu0 0.0
    %3462 = vmatpush1.msra.mxu0 0.0
    %3463 = vmatprep.mubr.f32.mxu0 0.0
    %3464 = vmatmul.mubr.f32.gmra.mrb[0].mxu0 %v991
    %v3465 = vpop.f32.mrb[0].mxu0
    %v3466 = vadd.f32 %v2786, %v3465
    %v3467 = vpop.f32.mrb[0].mxu0
    %3468 = vmatprep.mubr.f32.mxu0 0.0
    %3469 = vmatmul.mubr.f32.gmra.mrb[0].mxu0 %v994
    %v3470 = vpop.f32.mrb[0].mxu0
    %v3471 = vadd.f32 %v2791, %v3470
    %v3472 = vpop.f32.mrb[0].mxu0
    %3473 = vmatprep.mubr.f32.mxu0 0.0
    %3474 = vmatmul.mubr.f32.gmra.mrb[0].mxu0 %v997
    %v3475 = vpop.f32.mrb[0].mxu0
    %v3476 = vadd.f32 %v2796, %v3475
    %v3477 = vpop.f32.mrb[0].mxu0
    %3478 = vmatprep.mubr.f32.mxu0 0.0
    %3479 = vmatmul.mubr.f32.gmra.mrb[0].mxu0 %v1000
    %v3480 = vpop.f32.mrb[0].mxu0
    %v3481 = vadd.f32 %v2801, %v3480
    %v3482 = vpop.f32.mrb[0].mxu0
    %3483 = vmatprep.mubr.f32.mxu0 0.0
    %3484 = vmatmul.mubr.f32.gmra.mrb[0].mxu0 %v1003
    %v3485 = vpop.f32.mrb[0].mxu0
    %v3486 = vadd.f32 %v2806, %v3485
    %v3487 = vpop.f32.mrb[0].mxu0
    %3488 = vmatprep.mubr.f32.mxu0 0.0
    %3489 = vmatmul.mubr.f32.gmra.mrb[0].mxu0 %v1006
    %v3490 = vpop.f32.mrb[0].mxu0
    %v3491 = vadd.f32 %v2811, %v3490
    %v3492 = vpop.f32.mrb[0].mxu0
    %3493 = vmatprep.mubr.f32.mxu0 0.0
    %3494 = vmatmul.mubr.f32.gmra.mrb[0].mxu0 %v1009
    %v3495 = vpop.f32.mrb[0].mxu0
    %v3496 = vadd.f32 %v2816, %v3495
    %v3497 = vpop.f32.mrb[0].mxu0
    %3498 = vmatprep.mubr.f32.mxu0 0.0
    %3499 = vmatmul.mubr.f32.gmra.mrb[0].mxu0 %v1012
    %v3500 = vpop.f32.mrb[0].mxu0
    %v3501 = vadd.f32 %v2821, %v3500
    %v3502 = vpop.f32.mrb[0].mxu0
    %3503 = vmatprep.mubr.f32.mxu0 0.0
    %3504 = vmatmul.mubr.f32.gmra.mrb[0].mxu0 %v1015
    %v3505 = vpop.f32.mrb[0].mxu0
    %v3506 = vadd.f32 %v2826, %v3505
    %v3507 = vpop.f32.mrb[0].mxu0
    %3508 = vmatprep.mubr.f32.mxu0 0.0
    %3509 = vmatmul.mubr.f32.gmra.mrb[0].mxu0 %v1018
    %v3510 = vpop.f32.mrb[0].mxu0
    %v3511 = vadd.f32 %v2831, %v3510
    %v3512 = vpop.f32.mrb[0].mxu0
    %3513 = vmatprep.mubr.f32.mxu0 0.0
    %3514 = vmatmul.mubr.f32.gmra.mrb[0].mxu0 %v1021
    %v3515 = vpop.f32.mrb[0].mxu0
    %v3516 = vadd.f32 %v2836, %v3515
    %v3517 = vpop.f32.mrb[0].mxu0
    %3518 = vmatprep.mubr.f32.mxu0 0.0
    %3519 = vmatmul.mubr.f32.gmra.mrb[0].mxu0 %v1024
    %v3520 = vpop.f32.mrb[0].mxu0
    %v3521 = vadd.f32 %v2841, %v3520
    %v3522 = vpop.f32.mrb[0].mxu0
    %3523 = vmatprep.mubr.f32.mxu0 0.0
    %3524 = vmatmul.mubr.f32.gmra.mrb[0].mxu0 %v1027
    %v3525 = vpop.f32.mrb[0].mxu0
    %v3526 = vadd.f32 %v2846, %v3525
    %v3527 = vpop.f32.mrb[0].mxu0
    %3528 = vmatprep.mubr.f32.mxu0 0.0
    %3529 = vmatmul.mubr.f32.gmra.mrb[0].mxu0 %v1030
    %v3530 = vpop.f32.mrb[0].mxu0
    %v3531 = vadd.f32 %v2851, %v3530
    %v3532 = vpop.f32.mrb[0].mxu0
    %3533 = vmatprep.mubr.f32.mxu0 0.0
    %3534 = vmatmul.mubr.f32.gmra.mrb[0].mxu0 %v1033
    %v3535 = vpop.f32.mrb[0].mxu0
    %v3536 = vadd.f32 %v2856, %v3535
    %v3537 = vpop.f32.mrb[0].mxu0
    %3538 = vmatprep.mubr.f32.mxu0 0.0
    %3539 = vmatmul.mubr.f32.gmra.mrb[0].mxu0 %v1036
    %v3540 = vpop.f32.mrb[0].mxu0
    %v3541 = vadd.f32 %v2861, %v3540
    %v3542 = vpop.f32.mrb[0].mxu0
    %3543 = vmatprep.mubr.f32.mxu0 0.0
    %3544 = vmatmul.mubr.f32.gmra.mrb[0].mxu0 %v1039
    %v3545 = vpop.f32.mrb[0].mxu0
    %v3546 = vadd.f32 %v2866, %v3545
    %v3547 = vpop.f32.mrb[0].mxu0
    %3548 = vmatprep.mubr.f32.mxu0 0.0
    %3549 = vmatmul.mubr.f32.gmra.mrb[0].mxu0 %v1042
    %v3550 = vpop.f32.mrb[0].mxu0
    %v3551 = vadd.f32 %v2871, %v3550
    %v3552 = vpop.f32.mrb[0].mxu0
    %3553 = vmatprep.mubr.f32.mxu0 0.0
    %3554 = vmatmul.mubr.f32.gmra.mrb[0].mxu0 %v1045
    %v3555 = vpop.f32.mrb[0].mxu0
    %v3556 = vadd.f32 %v2876, %v3555
    %v3557 = vpop.f32.mrb[0].mxu0
    %3558 = vmatprep.mubr.f32.mxu0 0.0
    %3559 = vmatmul.mubr.f32.gmra.mrb[0].mxu0 %v1048
    %v3560 = vpop.f32.mrb[0].mxu0
    %v3561 = vadd.f32 %v2881, %v3560
    %v3562 = vpop.f32.mrb[0].mxu0
    %3563 = vmatprep.mubr.f32.mxu0 0.0
    %3564 = vmatmul.mubr.f32.gmra.mrb[0].mxu0 %v1051
    %v3565 = vpop.f32.mrb[0].mxu0
    %v3566 = vadd.f32 %v2886, %v3565
    %v3567 = vpop.f32.mrb[0].mxu0
    %3568 = vmatprep.mubr.f32.mxu0 0.0
    %3569 = vmatmul.mubr.f32.gmra.mrb[0].mxu0 %v1054
    %v3570 = vpop.f32.mrb[0].mxu0
    %v3571 = vadd.f32 %v2891, %v3570
    %v3572 = vpop.f32.mrb[0].mxu0
    %3573 = vmatprep.mubr.f32.mxu0 0.0
    %3574 = vmatmul.mubr.f32.gmra.mrb[0].mxu0 %v1057
    %v3575 = vpop.f32.mrb[0].mxu0
    %v3576 = vadd.f32 %v2896, %v3575
    %v3577 = vpop.f32.mrb[0].mxu0
    %3578 = vmatprep.mubr.f32.mxu0 0.0
    %3579 = vmatmul.mubr.f32.gmra.mrb[0].mxu0 %v1060
    %v3580 = vpop.f32.mrb[0].mxu0
    %v3581 = vadd.f32 %v2901, %v3580
    %v3582 = vpop.f32.mrb[0].mxu0
    %3583 = vmatprep.mubr.f32.mxu0 0.0
    %3584 = vmatmul.mubr.f32.gmra.mrb[0].mxu0 %v1063
    %v3585 = vpop.f32.mrb[0].mxu0
    %v3586 = vadd.f32 %v2906, %v3585
    %v3587 = vpop.f32.mrb[0].mxu0
    %3588 = vmatprep.mubr.f32.mxu0 0.0
    %3589 = vmatmul.mubr.f32.gmra.mrb[0].mxu0 %v1066
    %v3590 = vpop.f32.mrb[0].mxu0
    %v3591 = vadd.f32 %v2911, %v3590
    %v3592 = vpop.f32.mrb[0].mxu0
    %3593 = vmatprep.mubr.f32.mxu0 0.0
    %3594 = vmatmul.mubr.f32.gmra.mrb[0].mxu0 %v1069
    %v3595 = vpop.f32.mrb[0].mxu0
    %v3596 = vadd.f32 %v2916, %v3595
    %v3597 = vpop.f32.mrb[0].mxu0
    %3598 = vmatprep.mubr.f32.mxu0 0.0
    %3599 = vmatmul.mubr.f32.gmra.mrb[0].mxu0 %v1072
    %v3600 = vpop.f32.mrb[0].mxu0
    %v3601 = vadd.f32 %v2921, %v3600
    %v3602 = vpop.f32.mrb[0].mxu0
    %3603 = vmatprep.mubr.f32.mxu0 0.0
    %3604 = vmatmul.mubr.f32.gmra.mrb[0].mxu0 %v1075
    %v3605 = vpop.f32.mrb[0].mxu0
    %v3606 = vadd.f32 %v2926, %v3605
    %v3607 = vpop.f32.mrb[0].mxu0
    %3608 = vmatprep.mubr.f32.mxu0 0.0
    %3609 = vmatmul.mubr.f32.gmra.mrb[0].mxu0 %v1078
    %v3610 = vpop.f32.mrb[0].mxu0
    %v3611 = vadd.f32 %v2931, %v3610
    %v3612 = vpop.f32.mrb[0].mxu0
    %3613 = vmatprep.mubr.f32.mxu0 0.0
    %3614 = vmatmul.mubr.f32.gmra.mrb[0].mxu0 %v1081
    %v3615 = vpop.f32.mrb[0].mxu0
    %v3616 = vadd.f32 %v2936, %v3615
    %v3617 = vpop.f32.mrb[0].mxu0
    %3618 = vmatprep.mubr.f32.mxu0 0.0
    %3619 = vmatmul.mubr.f32.gmra.mrb[0].mxu0 %v1084
    %v3620 = vpop.f32.mrb[0].mxu0
    %v3621 = vadd.f32 %v2941, %v3620
    %v3622 = vpop.f32.mrb[0].mxu0
    %3623 = vmatprep.mubr.f32.mxu0 0.0
    %3624 = vmatmul.mubr.f32.gmra.mrb[0].mxu0 %v1087
    %v3625 = vpop.f32.mrb[0].mxu0
    %v3626 = vadd.f32 %v2946, %v3625
    %v3627 = vpop.f32.mrb[0].mxu0
    %3628 = vmatprep.mubr.f32.mxu0 0.0
    %3629 = vmatmul.mubr.f32.gmra.mrb[0].mxu0 %v1090
    %v3630 = vpop.f32.mrb[0].mxu0
    %v3631 = vadd.f32 %v2951, %v3630
    %v3632 = vpop.f32.mrb[0].mxu0
    %3633 = vmatprep.mubr.f32.mxu0 0.0
    %3634 = vmatmul.mubr.f32.gmra.mrb[0].mxu0 %v1093
    %v3635 = vpop.f32.mrb[0].mxu0
    %v3636 = vadd.f32 %v2956, %v3635
    %v3637 = vpop.f32.mrb[0].mxu0
    %3638 = vmatprep.mubr.f32.mxu0 0.0
    %3639 = vmatmul.mubr.f32.gmra.mrb[0].mxu0 %v1096
    %v3640 = vpop.f32.mrb[0].mxu0
    %v3641 = vadd.f32 %v2961, %v3640
    %v3642 = vpop.f32.mrb[0].mxu0
    %3643 = vmatprep.mubr.f32.mxu0 0.0
    %3644 = vmatmul.mubr.f32.gmra.mrb[0].mxu0 %v1099
    %v3645 = vpop.f32.mrb[0].mxu0
    %v3646 = vadd.f32 %v2966, %v3645
    %v3647 = vpop.f32.mrb[0].mxu0
    %3648 = vmatprep.mubr.f32.mxu0 0.0
    %3649 = vmatmul.mubr.f32.gmra.mrb[0].mxu0 %v1102
    %v3650 = vpop.f32.mrb[0].mxu0
    %v3651 = vadd.f32 %v2971, %v3650
    %v3652 = vpop.f32.mrb[0].mxu0
    %3653 = vmatprep.mubr.f32.mxu0 0.0
    %3654 = vmatmul.mubr.f32.gmra.mrb[0].mxu0 %v1105
    %v3655 = vpop.f32.mrb[0].mxu0
    %v3656 = vadd.f32 %v2976, %v3655
    %v3657 = vpop.f32.mrb[0].mxu0
    %3658 = vmatprep.mubr.f32.mxu0 0.0
    %3659 = vmatmul.mubr.f32.gmra.mrb[0].mxu0 %v1108
    %v3660 = vpop.f32.mrb[0].mxu0
    %v3661 = vadd.f32 %v2981, %v3660
    %v3662 = vpop.f32.mrb[0].mxu0
    %3663 = vmatprep.mubr.f32.mxu0 0.0
    %3664 = vmatmul.mubr.f32.gmra.mrb[0].mxu0 %v1111
    %v3665 = vpop.f32.mrb[0].mxu0
    %v3666 = vadd.f32 %v2986, %v3665
    %v3667 = vpop.f32.mrb[0].mxu0
    %3668 = vmatprep.mubr.f32.mxu0 0.0
    %3669 = vmatmul.mubr.f32.gmra.mrb[0].mxu0 %v1114
    %v3670 = vpop.f32.mrb[0].mxu0
    %v3671 = vadd.f32 %v2991, %v3670
    %v3672 = vpop.f32.mrb[0].mxu0
    %3673 = vmatprep.mubr.f32.mxu0 0.0
    %3674 = vmatmul.mubr.f32.gmra.mrb[0].mxu0 %v1117
    %v3675 = vpop.f32.mrb[0].mxu0
    %v3676 = vadd.f32 %v2996, %v3675
    %v3677 = vpop.f32.mrb[0].mxu0
    %3678 = vmatprep.mubr.f32.mxu0 0.0
    %3679 = vmatmul.mubr.f32.gmra.mrb[0].mxu0 %v1120
    %v3680 = vpop.f32.mrb[0].mxu0
    %v3681 = vadd.f32 %v3001, %v3680
    %v3682 = vpop.f32.mrb[0].mxu0
    %3683 = vmatprep.mubr.f32.mxu0 0.0
    %3684 = vmatmul.mubr.f32.gmra.mrb[0].mxu0 %v1123
    %v3685 = vpop.f32.mrb[0].mxu0
    %v3686 = vadd.f32 %v3006, %v3685
    %v3687 = vpop.f32.mrb[0].mxu0
    %3688 = vmatprep.mubr.f32.mxu0 0.0
    %3689 = vmatmul.mubr.f32.gmra.mrb[0].mxu0 %v1126
    %v3690 = vpop.f32.mrb[0].mxu0
    %v3691 = vadd.f32 %v3011, %v3690
    %v3692 = vpop.f32.mrb[0].mxu0
    %3693 = vmatprep.mubr.f32.mxu0 0.0
    %3694 = vmatmul.mubr.f32.gmra.mrb[0].mxu0 %v1129
    %v3695 = vpop.f32.mrb[0].mxu0
    %v3696 = vadd.f32 %v3016, %v3695
    %v3697 = vpop.f32.mrb[0].mxu0
    %3698 = vmatprep.mubr.f32.mxu0 0.0
    %3699 = vmatmul.mubr.f32.gmra.mrb[0].mxu0 %v1132
    %v3700 = vpop.f32.mrb[0].mxu0
    %v3701 = vadd.f32 %v3021, %v3700
    %v3702 = vpop.f32.mrb[0].mxu0
    %3703 = vmatprep.mubr.f32.mxu0 0.0
    %3704 = vmatmul.mubr.f32.gmra.mrb[0].mxu0 %v1135
    %v3705 = vpop.f32.mrb[0].mxu0
    %v3706 = vadd.f32 %v3026, %v3705
    %v3707 = vpop.f32.mrb[0].mxu0
    %3708 = vmatprep.mubr.f32.mxu0 0.0
    %3709 = vmatmul.mubr.f32.gmra.mrb[0].mxu0 %v1138
    %v3710 = vpop.f32.mrb[0].mxu0
    %v3711 = vadd.f32 %v3031, %v3710
    %v3712 = vpop.f32.mrb[0].mxu0
    %3713 = vmatprep.mubr.f32.mxu0 0.0
    %3714 = vmatmul.mubr.f32.gmra.mrb[0].mxu0 %v1141
    %v3715 = vpop.f32.mrb[0].mxu0
    %v3716 = vadd.f32 %v3036, %v3715
    %v3717 = vpop.f32.mrb[0].mxu0
    %3718 = vmatprep.mubr.f32.mxu0 0.0
    %3719 = vmatmul.mubr.f32.gmra.mrb[0].mxu0 %v1144
    %v3720 = vpop.f32.mrb[0].mxu0
    %v3721 = vadd.f32 %v3041, %v3720
    %v3722 = vpop.f32.mrb[0].mxu0
    %3723 = vmatprep.mubr.f32.mxu0 0.0
    %3724 = vmatmul.mubr.f32.gmra.mrb[0].mxu0 %v1147
    %v3725 = vpop.f32.mrb[0].mxu0
    %v3726 = vadd.f32 %v3046, %v3725
    %v3727 = vpop.f32.mrb[0].mxu0
    %3728 = vmatprep.mubr.f32.mxu0 0.0
    %3729 = vmatmul.mubr.f32.gmra.mrb[0].mxu0 %v1150
    %v3730 = vpop.f32.mrb[0].mxu0
    %v3731 = vadd.f32 %v3051, %v3730
    %v3732 = vpop.f32.mrb[0].mxu0
    %3733 = vmatprep.mubr.f32.mxu0 0.0
    %3734 = vmatmul.mubr.f32.gmra.mrb[0].mxu0 %v1153
    %v3735 = vpop.f32.mrb[0].mxu0
    %v3736 = vadd.f32 %v3056, %v3735
    %v3737 = vpop.f32.mrb[0].mxu0
    %3738 = vmatprep.mubr.f32.mxu0 0.0
    %3739 = vmatmul.mubr.f32.gmra.mrb[0].mxu0 %v1156
    %v3740 = vpop.f32.mrb[0].mxu0
    %v3741 = vadd.f32 %v3061, %v3740
    %v3742 = vpop.f32.mrb[0].mxu0
    %3743 = vmatprep.mubr.f32.mxu0 0.0
    %3744 = vmatmul.mubr.f32.gmra.mrb[0].mxu0 %v1159
    %v3745 = vpop.f32.mrb[0].mxu0
    %v3746 = vadd.f32 %v3066, %v3745
    %v3747 = vpop.f32.mrb[0].mxu0
    %3748 = vmatprep.mubr.f32.mxu0 0.0
    %3749 = vmatmul.mubr.f32.gmra.mrb[0].mxu0 %v1162
    %v3750 = vpop.f32.mrb[0].mxu0
    %v3751 = vadd.f32 %v3071, %v3750
    %v3752 = vpop.f32.mrb[0].mxu0
    %3753 = vmatprep.mubr.f32.mxu0 0.0
    %3754 = vmatmul.mubr.f32.gmra.mrb[0].mxu0 %v1165
    %v3755 = vpop.f32.mrb[0].mxu0
    %v3756 = vadd.f32 %v3076, %v3755
    %v3757 = vpop.f32.mrb[0].mxu0
    %3758 = vmatprep.mubr.f32.mxu0 0.0
    %3759 = vmatmul.mubr.f32.gmra.mrb[0].mxu0 %v1168
    %v3760 = vpop.f32.mrb[0].mxu0
    %v3761 = vadd.f32 %v3081, %v3760
    %v3762 = vpop.f32.mrb[0].mxu0
    %3763 = vmatprep.mubr.f32.mxu0 0.0
    %3764 = vmatmul.mubr.f32.gmra.mrb[0].mxu0 %v1171
    %v3765 = vpop.f32.mrb[0].mxu0
    %v3766 = vadd.f32 %v3086, %v3765
    %v3767 = vpop.f32.mrb[0].mxu0
    %3768 = vmatprep.mubr.f32.mxu0 0.0
    %3769 = vmatmul.mubr.f32.gmra.mrb[0].mxu0 %v1174
    %v3770 = vpop.f32.mrb[0].mxu0
    %v3771 = vadd.f32 %v3091, %v3770
    %v3772 = vpop.f32.mrb[0].mxu0
    %3773 = vmatprep.mubr.f32.mxu0 0.0
    %3774 = vmatmul.mubr.f32.gmra.mrb[0].mxu0 %v1177
    %v3775 = vpop.f32.mrb[0].mxu0
    %v3776 = vadd.f32 %v3096, %v3775
    %v3777 = vpop.f32.mrb[0].mxu0
    %3778 = vmatprep.mubr.f32.mxu0 0.0
    %3779 = vmatmul.mubr.f32.gmra.mrb[0].mxu0 %v1180
    %v3780 = vpop.f32.mrb[0].mxu0
    %v3781 = vadd.f32 %v3101, %v3780
    %v3782 = vpop.f32.mrb[0].mxu0
    %3783 = vmatprep.mubr.f32.mxu0 0.0
    %3784 = vmatmul.mubr.f32.gmra.mrb[0].mxu0 %v1183
    %v3785 = vpop.f32.mrb[0].mxu0
    %v3786 = vadd.f32 %v3106, %v3785
    %v3787 = vpop.f32.mrb[0].mxu0
    %3788 = vmatprep.mubr.f32.mxu0 0.0
    %3789 = vmatmul.mubr.f32.gmra.mrb[0].mxu0 %v1186
    %v3790 = vpop.f32.mrb[0].mxu0
    %v3791 = vadd.f32 %v3111, %v3790
    %v3792 = vpop.f32.mrb[0].mxu0
    %3793 = vmatprep.mubr.f32.mxu0 0.0
    %3794 = vmatmul.mubr.f32.gmra.mrb[0].mxu0 %v1189
    %v3795 = vpop.f32.mrb[0].mxu0
    %v3796 = vadd.f32 %v3116, %v3795
    %v3797 = vpop.f32.mrb[0].mxu0
    %3798 = vmatprep.mubr.f32.mxu0 0.0
    %3799 = vmatmul.mubr.f32.gmra.mrb[0].mxu0 %v1192
    %v3800 = vpop.f32.mrb[0].mxu0
    %v3801 = vadd.f32 %v3121, %v3800
    %v3802 = vpop.f32.mrb[0].mxu0
    %3803 = vmatprep.mubr.f32.mxu0 0.0
    %3804 = vmatmul.mubr.f32.gmra.mrb[0].mxu0 %v1195
    %v3805 = vpop.f32.mrb[0].mxu0
    %v3806 = vadd.f32 %v3126, %v3805
    %v3807 = vpop.f32.mrb[0].mxu0
    %3808 = vmatprep.mubr.f32.mxu0 0.0
    %3809 = vmatmul.mubr.f32.gmra.mrb[0].mxu0 %v1198
    %v3810 = vpop.f32.mrb[0].mxu0
    %v3811 = vadd.f32 %v3131, %v3810
    %v3812 = vpop.f32.mrb[0].mxu0
    %3813 = vmatprep.mubr.f32.mxu0 0.0
    %3814 = vmatmul.mubr.f32.gmra.mrb[0].mxu0 %v1201
    %v3815 = vpop.f32.mrb[0].mxu0
    %v3816 = vadd.f32 %v3136, %v3815
    %v3817 = vpop.f32.mrb[0].mxu0
    %3818 = vmatprep.mubr.f32.mxu0 0.0
    %3819 = vmatmul.mubr.f32.gmra.mrb[0].mxu0 %v1204
    %v3820 = vpop.f32.mrb[0].mxu0
    %v3821 = vadd.f32 %v3141, %v3820
    %v3822 = vpop.f32.mrb[0].mxu0
    %3823 = vmatprep.mubr.f32.mxu0 0.0
    %3824 = vmatmul.mubr.f32.gmra.mrb[0].mxu0 %v1207
    %v3825 = vpop.f32.mrb[0].mxu0
    %v3826 = vadd.f32 %v3146, %v3825
    %v3827 = vpop.f32.mrb[0].mxu0
    %3828 = vmatprep.mubr.f32.mxu0 0.0
    %3829 = vmatmul.mubr.f32.gmra.mrb[0].mxu0 %v1210
    %v3830 = vpop.f32.mrb[0].mxu0
    %v3831 = vadd.f32 %v3151, %v3830
    %v3832 = vpop.f32.mrb[0].mxu0
    %3833 = vmatprep.mubr.f32.mxu0 0.0
    %3834 = vmatmul.mubr.f32.gmra.mrb[0].mxu0 %v1213
    %v3835 = vpop.f32.mrb[0].mxu0
    %v3836 = vadd.f32 %v3156, %v3835
    %v3837 = vpop.f32.mrb[0].mxu0
    %3838 = vmatprep.mubr.f32.mxu0 0.0
    %3839 = vmatmul.mubr.f32.gmra.mrb[0].mxu0 %v1216
    %v3840 = vpop.f32.mrb[0].mxu0
    %v3841 = vadd.f32 %v3161, %v3840
    %v3842 = vpop.f32.mrb[0].mxu0
    %3843 = vmatprep.mubr.f32.mxu0 0.0
    %3844 = vmatmul.mubr.f32.gmra.mrb[0].mxu0 %v1219
    %v3845 = vpop.f32.mrb[0].mxu0
    %v3846 = vadd.f32 %v3166, %v3845
    %v3847 = vpop.f32.mrb[0].mxu0
    %3848 = vmatprep.mubr.f32.mxu0 0.0
    %3849 = vmatmul.mubr.f32.gmra.mrb[0].mxu0 %v1222
    %v3850 = vpop.f32.mrb[0].mxu0
    %v3851 = vadd.f32 %v3171, %v3850
    %v3852 = vpop.f32.mrb[0].mxu0
    %3853 = vmatprep.mubr.f32.mxu0 0.0
    %3854 = vmatmul.mubr.f32.gmra.mrb[0].mxu0 %v1225
    %v3855 = vpop.f32.mrb[0].mxu0
    %v3856 = vadd.f32 %v3176, %v3855
    %v3857 = vpop.f32.mrb[0].mxu0
    %3858 = vmatprep.mubr.f32.mxu0 0.0
    %3859 = vmatmul.mubr.f32.gmra.mrb[0].mxu0 %v1228
    %v3860 = vpop.f32.mrb[0].mxu0
    %v3861 = vadd.f32 %v3181, %v3860
    %v3862 = vpop.f32.mrb[0].mxu0
    %3863 = vmatprep.mubr.f32.mxu0 0.0
    %3864 = vmatmul.mubr.f32.gmra.mrb[0].mxu0 %v1231
    %v3865 = vpop.f32.mrb[0].mxu0
    %v3866 = vadd.f32 %v3186, %v3865
    %v3867 = vpop.f32.mrb[0].mxu0
    %3868 = vmatprep.mubr.f32.mxu0 0.0
    %3869 = vmatmul.mubr.f32.gmra.mrb[0].mxu0 %v1234
    %v3870 = vpop.f32.mrb[0].mxu0
    %v3871 = vadd.f32 %v3191, %v3870
    %v3872 = vpop.f32.mrb[0].mxu0
    %3873 = vmatprep.mubr.f32.mxu0 0.0
    %3874 = vmatmul.mubr.f32.gmra.mrb[0].mxu0 %v1237
    %v3875 = vpop.f32.mrb[0].mxu0
    %v3876 = vadd.f32 %v3196, %v3875
    %v3877 = vpop.f32.mrb[0].mxu0
    %3878 = vmatprep.mubr.f32.mxu0 0.0
    %3879 = vmatmul.mubr.f32.gmra.mrb[0].mxu0 %v1240
    %v3880 = vpop.f32.mrb[0].mxu0
    %v3881 = vadd.f32 %v3201, %v3880
    %v3882 = vpop.f32.mrb[0].mxu0
    %3883 = vmatprep.mubr.f32.mxu0 0.0
    %3884 = vmatmul.mubr.f32.gmra.mrb[0].mxu0 %v1243
    %v3885 = vpop.f32.mrb[0].mxu0
    %v3886 = vadd.f32 %v3206, %v3885
    %v3887 = vpop.f32.mrb[0].mxu0
    %3888 = vmatprep.mubr.f32.mxu0 0.0
    %3889 = vmatmul.mubr.f32.gmra.mrb[0].mxu0 %v1246
    %v3890 = vpop.f32.mrb[0].mxu0
    %v3891 = vadd.f32 %v3211, %v3890
    %v3892 = vpop.f32.mrb[0].mxu0
    %3893 = vmatprep.mubr.f32.mxu0 0.0
    %3894 = vmatmul.mubr.f32.gmra.mrb[0].mxu0 %v1249
    %v3895 = vpop.f32.mrb[0].mxu0
    %v3896 = vadd.f32 %v3216, %v3895
    %v3897 = vpop.f32.mrb[0].mxu0
    %3898 = vmatprep.mubr.f32.mxu0 0.0
    %3899 = vmatmul.mubr.f32.gmra.mrb[0].mxu0 %v1252
    %v3900 = vpop.f32.mrb[0].mxu0
    %v3901 = vadd.f32 %v3221, %v3900
    %v3902 = vpop.f32.mrb[0].mxu0
    %3903 = vmatprep.mubr.f32.mxu0 0.0
    %3904 = vmatmul.mubr.f32.gmra.mrb[0].mxu0 %v1255
    %v3905 = vpop.f32.mrb[0].mxu0
    %v3906 = vadd.f32 %v3226, %v3905
    %v3907 = vpop.f32.mrb[0].mxu0
    %3908 = vmatprep.mubr.f32.mxu0 0.0
    %3909 = vmatmul.mubr.f32.gmra.mrb[0].mxu0 %v1258
    %v3910 = vpop.f32.mrb[0].mxu0
    %v3911 = vadd.f32 %v3231, %v3910
    %v3912 = vpop.f32.mrb[0].mxu0
    %3913 = vmatprep.mubr.f32.mxu0 0.0
    %3914 = vmatmul.mubr.f32.gmra.mrb[0].mxu0 %v1261
    %v3915 = vpop.f32.mrb[0].mxu0
    %v3916 = vadd.f32 %v3236, %v3915
    %v3917 = vpop.f32.mrb[0].mxu0
    %3918 = vmatprep.mubr.f32.mxu0 0.0
    %3919 = vmatmul.mubr.f32.gmra.mrb[0].mxu0 %v1264
    %v3920 = vpop.f32.mrb[0].mxu0
    %v3921 = vadd.f32 %v3241, %v3920
    %v3922 = vpop.f32.mrb[0].mxu0
    %3923 = vmatprep.mubr.f32.mxu0 0.0
    %3924 = vmatmul.mubr.f32.gmra.mrb[0].mxu0 %v1267
    %v3925 = vpop.f32.mrb[0].mxu0
    %v3926 = vadd.f32 %v3246, %v3925
    %v3927 = vpop.f32.mrb[0].mxu0
    %3928 = vmatprep.mubr.f32.mxu0 0.0
    %3929 = vmatmul.mubr.f32.gmra.mrb[0].mxu0 %v1270
    %v3930 = vpop.f32.mrb[0].mxu0
    %v3931 = vadd.f32 %v3251, %v3930
    %v3932 = vpop.f32.mrb[0].mxu0
    %3933 = vmatprep.mubr.f32.mxu0 0.0
    %3934 = vmatmul.mubr.f32.gmra.mrb[0].mxu0 %v1273
    %v3935 = vpop.f32.mrb[0].mxu0
    %v3936 = vadd.f32 %v3256, %v3935
    %v3937 = vpop.f32.mrb[0].mxu0
    %3938 = vmatprep.mubr.f32.mxu0 0.0
    %3939 = vmatmul.mubr.f32.gmra.mrb[0].mxu0 %v1276
    %v3940 = vpop.f32.mrb[0].mxu0
    %v3941 = vadd.f32 %v3261, %v3940
    %v3942 = vpop.f32.mrb[0].mxu0
    %3943 = vmatprep.mubr.f32.mxu0 0.0
    %3944 = vmatmul.mubr.f32.gmra.mrb[0].mxu0 %v1279
    %v3945 = vpop.f32.mrb[0].mxu0
    %v3946 = vadd.f32 %v3266, %v3945
    %v3947 = vpop.f32.mrb[0].mxu0
    %3948 = vmatprep.mubr.f32.mxu0 0.0
    %3949 = vmatmul.mubr.f32.gmra.mrb[0].mxu0 %v1282
    %v3950 = vpop.f32.mrb[0].mxu0
    %v3951 = vadd.f32 %v3271, %v3950
    %v3952 = vpop.f32.mrb[0].mxu0
    %3953 = vmatprep.mubr.f32.mxu0 0.0
    %3954 = vmatmul.mubr.f32.gmra.mrb[0].mxu0 %v1285
    %v3955 = vpop.f32.mrb[0].mxu0
    %v3956 = vadd.f32 %v3276, %v3955
    %v3957 = vpop.f32.mrb[0].mxu0
    %3958 = vmatprep.mubr.f32.mxu0 0.0
    %3959 = vmatmul.mubr.f32.gmra.mrb[0].mxu0 %v1288
    %v3960 = vpop.f32.mrb[0].mxu0
    %v3961 = vadd.f32 %v3281, %v3960
    %v3962 = vpop.f32.mrb[0].mxu0
    %3963 = vmatprep.mubr.f32.mxu0 0.0
    %3964 = vmatmul.mubr.f32.gmra.mrb[0].mxu0 %v1291
    %v3965 = vpop.f32.mrb[0].mxu0
    %v3966 = vadd.f32 %v3286, %v3965
    %v3967 = vpop.f32.mrb[0].mxu0
    %3968 = vmatprep.mubr.f32.mxu0 0.0
    %3969 = vmatmul.mubr.f32.gmra.mrb[0].mxu0 %v1294
    %v3970 = vpop.f32.mrb[0].mxu0
    %v3971 = vadd.f32 %v3291, %v3970
    %v3972 = vpop.f32.mrb[0].mxu0
    %3973 = vmatprep.mubr.f32.mxu0 0.0
    %3974 = vmatmul.mubr.f32.gmra.mrb[0].mxu0 %v1297
    %v3975 = vpop.f32.mrb[0].mxu0
    %v3976 = vadd.f32 %v3296, %v3975
    %v3977 = vpop.f32.mrb[0].mxu0
    %3978 = vmatprep.mubr.f32.mxu0 0.0
    %3979 = vmatmul.mubr.f32.gmra.mrb[0].mxu0 %v1300
    %v3980 = vpop.f32.mrb[0].mxu0
    %v3981 = vadd.f32 %v3301, %v3980
    %v3982 = vpop.f32.mrb[0].mxu0
    %3983 = vmatprep.mubr.f32.mxu0 0.0
    %3984 = vmatmul.mubr.f32.gmra.mrb[0].mxu0 %v1303
    %v3985 = vpop.f32.mrb[0].mxu0
    %v3986 = vadd.f32 %v3306, %v3985
    %v3987 = vpop.f32.mrb[0].mxu0
    %3988 = vmatprep.mubr.f32.mxu0 0.0
    %3989 = vmatmul.mubr.f32.gmra.mrb[0].mxu0 %v1306
    %v3990 = vpop.f32.mrb[0].mxu0
    %v3991 = vadd.f32 %v3311, %v3990
    %v3992 = vpop.f32.mrb[0].mxu0
    %3993 = vmatprep.mubr.f32.mxu0 0.0
    %3994 = vmatmul.mubr.f32.gmra.mrb[0].mxu0 %v1309
    %v3995 = vpop.f32.mrb[0].mxu0
    %v3996 = vadd.f32 %v3316, %v3995
    %v3997 = vpop.f32.mrb[0].mxu0
    %3998 = vmatprep.mubr.f32.mxu0 0.0
    %3999 = vmatmul.mubr.f32.gmra.mrb[0].mxu0 %v1312
    %v4000 = vpop.f32.mrb[0].mxu0
    %v4001 = vadd.f32 %v3321, %v4000
    %v4002 = vpop.f32.mrb[0].mxu0
    %4003 = vmatprep.mubr.f32.mxu0 0.0
    %4004 = vmatmul.mubr.f32.gmra.mrb[0].mxu0 %v1315
    %v4005 = vpop.f32.mrb[0].mxu0
    %v4006 = vadd.f32 %v3326, %v4005
    %v4007 = vpop.f32.mrb[0].mxu0
    %4008 = vmatprep.mubr.f32.mxu0 0.0
    %4009 = vmatmul.mubr.f32.gmra.mrb[0].mxu0 %v1318
    %v4010 = vpop.f32.mrb[0].mxu0
    %v4011 = vadd.f32 %v3331, %v4010
    %v4012 = vpop.f32.mrb[0].mxu0
    %4013 = vmatprep.mubr.f32.mxu0 0.0
    %4014 = vmatmul.mubr.f32.gmra.mrb[0].mxu0 %v1321
    %v4015 = vpop.f32.mrb[0].mxu0
    %v4016 = vadd.f32 %v3336, %v4015
    %v4017 = vpop.f32.mrb[0].mxu0
    %4018 = vmatprep.mubr.f32.mxu0 0.0
    %4019 = vmatmul.mubr.f32.gmra.mrb[0].mxu0 %v1324
    %v4020 = vpop.f32.mrb[0].mxu0
    %v4021 = vadd.f32 %v3341, %v4020
    %v4022 = vpop.f32.mrb[0].mxu0
    %4023 = vmatprep.mubr.f32.mxu0 0.0
    %4024 = vmatmul.mubr.f32.gmra.mrb[0].mxu0 %v1327
    %v4025 = vpop.f32.mrb[0].mxu0
    %v4026 = vadd.f32 %v3346, %v4025
    %v4027 = vpop.f32.mrb[0].mxu0
    %4028 = vmatprep.mubr.f32.mxu0 0.0
    %4029 = vmatmul.mubr.f32.gmra.mrb[0].mxu0 %v1330
    %v4030 = vpop.f32.mrb[0].mxu0
    %v4031 = vadd.f32 %v3351, %v4030
    %v4032 = vpop.f32.mrb[0].mxu0
    %4033 = vmatprep.mubr.f32.mxu0 0.0
    %4034 = vmatmul.mubr.f32.gmra.mrb[0].mxu0 %v1333
    %v4035 = vpop.f32.mrb[0].mxu0
    %v4036 = vadd.f32 %v3356, %v4035
    %v4037 = vpop.f32.mrb[0].mxu0
    %4038 = vmatprep.mubr.f32.mxu0 0.0
    %4039 = vmatmul.mubr.f32.gmra.mrb[0].mxu0 %v1336
    %v4040 = vpop.f32.mrb[0].mxu0
    %v4041 = vadd.f32 %v3361, %v4040
    %v4042 = vpop.f32.mrb[0].mxu0
    %4043 = vmatprep.mubr.f32.mxu0 0.0
    %4044 = vmatmul.mubr.f32.gmra.mrb[0].mxu0 %v1339
    %v4045 = vpop.f32.mrb[0].mxu0
    %v4046 = vadd.f32 %v3366, %v4045
    %v4047 = vpop.f32.mrb[0].mxu0
    %4048 = vmatprep.mubr.f32.mxu0 0.0
    %4049 = vmatmul.mubr.f32.gmra.mrb[0].mxu0 %v1342
    %v4050 = vpop.f32.mrb[0].mxu0
    %v4051 = vadd.f32 %v3371, %v4050
    %v4052 = vpop.f32.mrb[0].mxu0
    %4053 = vmatprep.mubr.f32.mxu0 0.0
    %4054 = vmatmul.mubr.f32.gmra.mrb[0].mxu0 %v1345
    %v4055 = vpop.f32.mrb[0].mxu0
    %v4056 = vadd.f32 %v3376, %v4055
    %v4057 = vpop.f32.mrb[0].mxu0
    %4058 = vmatprep.mubr.f32.mxu0 0.0
    %4059 = vmatmul.mubr.f32.gmra.mrb[0].mxu0 %v1348
    %v4060 = vpop.f32.mrb[0].mxu0
    %v4061 = vadd.f32 %v3381, %v4060
    %v4062 = vpop.f32.mrb[0].mxu0
    %4063 = vmatprep.mubr.f32.mxu0 0.0
    %4064 = vmatmul.mubr.f32.gmra.mrb[0].mxu0 %v1351
    %v4065 = vpop.f32.mrb[0].mxu0
    %v4066 = vadd.f32 %v3386, %v4065
    %v4067 = vpop.f32.mrb[0].mxu0
    %4068 = vmatprep.mubr.f32.mxu0 0.0
    %4069 = vmatmul.mubr.f32.gmra.mrb[0].mxu0 %v1354
    %v4070 = vpop.f32.mrb[0].mxu0
    %v4071 = vadd.f32 %v3391, %v4070
    %v4072 = vpop.f32.mrb[0].mxu0
    %4073 = vmatprep.mubr.f32.mxu0 0.0
    %4074 = vmatmul.mubr.f32.gmra.mrb[0].mxu0 %v1357
    %v4075 = vpop.f32.mrb[0].mxu0
    %v4076 = vadd.f32 %v3396, %v4075
    %v4077 = vpop.f32.mrb[0].mxu0
    %4078 = vdwg.mxu0
    %v4079 = vtanh.pop %v3466
    %v4080 = vtanh.pop %v3471
    %v4081 = vtanh.pop %v3476
    %v4082 = vtanh.pop %v3481
    %v4083 = vtanh.pop %v3486
    %v4084 = vtanh.pop %v3491
    %v4085 = vtanh.pop %v3496
    %v4086 = vtanh.pop %v3501
    %v4087 = vtanh.pop %v3506
    %v4088 = vtanh.pop %v3511
    %v4089 = vtanh.pop %v3516
    %v4090 = vtanh.pop %v3521
    %v4091 = vtanh.pop %v3526
    %v4092 = vtanh.pop %v3531
    %v4093 = vtanh.pop %v3536
    %v4094 = vtanh.pop %v3541
    %v4095 = vtanh.pop %v3546
    %v4096 = vtanh.pop %v3551
    %v4097 = vtanh.pop %v3556
    %v4098 = vtanh.pop %v3561
    %v4099 = vtanh.pop %v3566
    %v4100 = vtanh.pop %v3571
    %v4101 = vtanh.pop %v3576
    %v4102 = vtanh.pop %v3581
    %v4103 = vtanh.pop %v3586
    %v4104 = vtanh.pop %v3591
    %v4105 = vtanh.pop %v3596
    %v4106 = vtanh.pop %v3601
    %v4107 = vtanh.pop %v3606
    %v4108 = vtanh.pop %v3611
    %v4109 = vtanh.pop %v3616
    %v4110 = vtanh.pop %v3621
    %v4111 = vtanh.pop %v3626
    %v4112 = vtanh.pop %v3631
    %v4113 = vtanh.pop %v3636
    %v4114 = vtanh.pop %v3641
    %v4115 = vtanh.pop %v3646
    %v4116 = vtanh.pop %v3651
    %v4117 = vtanh.pop %v3656
    %v4118 = vtanh.pop %v3661
    %v4119 = vtanh.pop %v3666
    %v4120 = vtanh.pop %v3671
    %v4121 = vtanh.pop %v3676
    %v4122 = vtanh.pop %v3681
    %v4123 = vtanh.pop %v3686
    %v4124 = vtanh.pop %v3691
    %v4125 = vtanh.pop %v3696
    %v4126 = vtanh.pop %v3701
    %v4127 = vtanh.pop %v3706
    %v4128 = vtanh.pop %v3711
    %v4129 = vtanh.pop %v3716
    %v4130 = vtanh.pop %v3721
    %v4131 = vtanh.pop %v3726
    %v4132 = vtanh.pop %v3731
    %v4133 = vtanh.pop %v3736
    %v4134 = vtanh.pop %v3741
    %v4135 = vtanh.pop %v3746
    %v4136 = vtanh.pop %v3751
    %v4137 = vtanh.pop %v3756
    %v4138 = vtanh.pop %v3761
    %v4139 = vtanh.pop %v3766
    %v4140 = vtanh.pop %v3771
    %v4141 = vtanh.pop %v3776
    %v4142 = vtanh.pop %v3781
    %v4143 = vtanh.pop %v3786
    %v4144 = vtanh.pop %v3791
    %v4145 = vtanh.pop %v3796
    %v4146 = vtanh.pop %v3801
    %v4147 = vtanh.pop %v3806
    %v4148 = vtanh.pop %v3811
    %v4149 = vtanh.pop %v3816
    %v4150 = vtanh.pop %v3821
    %v4151 = vtanh.pop %v3826
    %v4152 = vtanh.pop %v3831
    %v4153 = vtanh.pop %v3836
    %v4154 = vtanh.pop %v3841
    %v4155 = vtanh.pop %v3846
    %v4156 = vtanh.pop %v3851
    %v4157 = vtanh.pop %v3856
    %v4158 = vtanh.pop %v3861
    %v4159 = vtanh.pop %v3866
    %v4160 = vtanh.pop %v3871
    %v4161 = vtanh.pop %v3876
    %v4162 = vtanh.pop %v3881
    %v4163 = vtanh.pop %v3886
    %v4164 = vtanh.pop %v3891
    %v4165 = vtanh.pop %v3896
    %v4166 = vtanh.pop %v3901
    %v4167 = vtanh.pop %v3906
    %v4168 = vtanh.pop %v3911
    %v4169 = vtanh.pop %v3916
    %v4170 = vtanh.pop %v3921
    %v4171 = vtanh.pop %v3926
    %v4172 = vtanh.pop %v3931
    %v4173 = vtanh.pop %v3936
    %v4174 = vtanh.pop %v3941
    %v4175 = vtanh.pop %v3946
    %v4176 = vtanh.pop %v3951
    %v4177 = vtanh.pop %v3956
    %v4178 = vtanh.pop %v3961
    %v4179 = vtanh.pop %v3966
    %v4180 = vtanh.pop %v3971
    %v4181 = vtanh.pop %v3976
    %v4182 = vtanh.pop %v3981
    %v4183 = vtanh.pop %v3986
    %v4184 = vtanh.pop %v3991
    %v4185 = vtanh.pop %v3996
    %v4186 = vtanh.pop %v4001
    %v4187 = vtanh.pop %v4006
    %v4188 = vtanh.pop %v4011
    %v4189 = vtanh.pop %v4016
    %v4190 = vtanh.pop %v4021
    %v4191 = vtanh.pop %v4026
    %v4192 = vtanh.pop %v4031
    %v4193 = vtanh.pop %v4036
    %v4194 = vtanh.pop %v4041
    %v4195 = vtanh.pop %v4046
    %v4196 = vtanh.pop %v4051
    %v4197 = vtanh.pop %v4056
    %v4198 = vtanh.pop %v4061
    %v4199 = vtanh.pop %v4066
    %v4200 = vtanh.pop %v4071
    %v4201 = vtanh.pop %v4076
    %v4202 = vld [vmem:[%s2] sm:$0xff]
    %v4203 = vld [vmem:[%s2 + $0x8] sm:$0xff]
    %v4204 = vld [vmem:[%s2 + $0x10] sm:$0xff]
    %v4205 = vld [vmem:[%s2 + $0x18] sm:$0xff]
    %v4206 = vld [vmem:[%s2 + $0x20] sm:$0xff]
    %v4207 = vld [vmem:[%s2 + $0x28] sm:$0xff]
    %v4208 = vld [vmem:[%s2 + $0x30] sm:$0xff]
    %v4209 = vld [vmem:[%s2 + $0x38] sm:$0xff]
    %v4210 = vld [vmem:[%s2 + $0x40] sm:$0x3]
    %v4211 = vld [vmem:[%s2 + $0x48] sm:$0x3]
    %v4212 = vld [vmem:[%s2 + $0x50] sm:$0x3]
    %v4213 = vld [vmem:[%s2 + $0x58] sm:$0x3]
    %v4214 = vld [vmem:[%s2 + $0x60] sm:$0x3]
    %v4215 = vld [vmem:[%s2 + $0x68] sm:$0x3]
    %v4216 = vld [vmem:[%s2 + $0x70] sm:$0x3]
    %v4217 = vld [vmem:[%s2 + $0x78] sm:$0x3]
    %vm4218 = vcmask 687104
    %v4220 = vsel %vm4218, %v4209, 0
    %v4223 = vsel %vm4218, %v4217, 0
    %vm4225 = vcmask 1043456
    %v4227 = vsel %vm4225, %v4201, 0
    %4229 = vmatprep.subr.mxu0 0.0
    %4230 = vmatpush1.msra.mxu0 %v4079
    %4231 = vmatprep.subr.mxu0 0.0
    %4232 = vmatpush1.msra.mxu0 %v4080
    %4233 = vmatprep.subr.mxu0 0.0
    %4234 = vmatpush1.msra.mxu0 %v4081
    %4235 = vmatprep.subr.mxu0 0.0
    %4236 = vmatpush1.msra.mxu0 %v4082
    %4237 = vmatprep.subr.mxu0 0.0
    %4238 = vmatpush1.msra.mxu0 %v4083
    %4239 = vmatprep.subr.mxu0 0.0
    %4240 = vmatpush1.msra.mxu0 %v4084
    %4241 = vmatprep.subr.mxu0 0.0
    %4242 = vmatpush1.msra.mxu0 %v4085
    %4243 = vmatprep.subr.mxu0 0.0
    %4244 = vmatpush1.msra.mxu0 %v4086
    %4245 = vmatprep.subr.mxu0 0.0
    %4246 = vmatpush1.msra.mxu0 %v4087
    %4247 = vmatprep.subr.mxu0 0.0
    %4248 = vmatpush1.msra.mxu0 %v4088
    %4249 = vmatprep.subr.mxu0 0.0
    %4250 = vmatpush1.msra.mxu0 %v4089
    %4251 = vmatprep.subr.mxu0 0.0
    %4252 = vmatpush1.msra.mxu0 %v4090
    %4253 = vmatprep.subr.mxu0 0.0
    %4254 = vmatpush1.msra.mxu0 %v4091
    %4255 = vmatprep.subr.mxu0 0.0
    %4256 = vmatpush1.msra.mxu0 %v4092
    %4257 = vmatprep.subr.mxu0 0.0
    %4258 = vmatpush1.msra.mxu0 %v4093
    %4259 = vmatprep.subr.mxu0 0.0
    %4260 = vmatpush1.msra.mxu0 %v4094
    %4261 = vmatprep.subr.mxu0 0.0
    %4262 = vmatpush1.msra.mxu0 %v4095
    %4263 = vmatprep.subr.mxu0 0.0
    %4264 = vmatpush1.msra.mxu0 %v4096
    %4265 = vmatprep.subr.mxu0 0.0
    %4266 = vmatpush1.msra.mxu0 %v4097
    %4267 = vmatprep.subr.mxu0 0.0
    %4268 = vmatpush1.msra.mxu0 %v4098
    %4269 = vmatprep.subr.mxu0 0.0
    %4270 = vmatpush1.msra.mxu0 %v4099
    %4271 = vmatprep.subr.mxu0 0.0
    %4272 = vmatpush1.msra.mxu0 %v4100
    %4273 = vmatprep.subr.mxu0 0.0
    %4274 = vmatpush1.msra.mxu0 %v4101
    %4275 = vmatprep.subr.mxu0 0.0
    %4276 = vmatpush1.msra.mxu0 %v4102
    %4277 = vmatprep.subr.mxu0 0.0
    %4278 = vmatpush1.msra.mxu0 %v4103
    %4279 = vmatprep.subr.mxu0 0.0
    %4280 = vmatpush1.msra.mxu0 %v4104
    %4281 = vmatprep.subr.mxu0 0.0
    %4282 = vmatpush1.msra.mxu0 %v4105
    %4283 = vmatprep.subr.mxu0 0.0
    %4284 = vmatpush1.msra.mxu0 %v4106
    %4285 = vmatprep.subr.mxu0 0.0
    %4286 = vmatpush1.msra.mxu0 %v4107
    %4287 = vmatprep.subr.mxu0 0.0
    %4288 = vmatpush1.msra.mxu0 %v4108
    %4289 = vmatprep.subr.mxu0 0.0
    %4290 = vmatpush1.msra.mxu0 %v4109
    %4291 = vmatprep.subr.mxu0 0.0
    %4292 = vmatpush1.msra.mxu0 %v4110
    %4293 = vmatprep.mubr.f32.mxu0 %v4203
    %4294 = vmatmul.mubr.f32.gmra.mrb[0].mxu0 %v4202
    %v4295 = vpop.f32.mrb[0].mxu0
    %v4296 = vadd.f32 0.0, %v4295
    %v4297 = vpop.f32.mrb[0].mxu0
    %4298 = vmatprep.mubr.f32.mxu0 %v4211
    %4299 = vmatmul.mubr.f32.gmra.mrb[0].mxu0 %v4210
    %v4300 = vpop.f32.mrb[0].mxu0
    %v4301 = vadd.f32 0.0, %v4300
    %v4302 = vpop.f32.mrb[0].mxu0
    %4303 = vdwg.mxu0
    %4304 = vmatprep.subr.mxu0 0.0
    %4305 = vmatpush1.msra.mxu0 %v4111
    %4306 = vmatprep.subr.mxu0 0.0
    %4307 = vmatpush1.msra.mxu0 %v4112
    %4308 = vmatprep.subr.mxu0 0.0
    %4309 = vmatpush1.msra.mxu0 %v4113
    %4310 = vmatprep.subr.mxu0 0.0
    %4311 = vmatpush1.msra.mxu0 %v4114
    %4312 = vmatprep.subr.mxu0 0.0
    %4313 = vmatpush1.msra.mxu0 %v4115
    %4314 = vmatprep.subr.mxu0 0.0
    %4315 = vmatpush1.msra.mxu0 %v4116
    %4316 = vmatprep.subr.mxu0 0.0
    %4317 = vmatpush1.msra.mxu0 %v4117
    %4318 = vmatprep.subr.mxu0 0.0
    %4319 = vmatpush1.msra.mxu0 %v4118
    %4320 = vmatprep.subr.mxu0 0.0
    %4321 = vmatpush1.msra.mxu0 %v4119
    %4322 = vmatprep.subr.mxu0 0.0
    %4323 = vmatpush1.msra.mxu0 %v4120
    %4324 = vmatprep.subr.mxu0 0.0
    %4325 = vmatpush1.msra.mxu0 %v4121
    %4326 = vmatprep.subr.mxu0 0.0
    %4327 = vmatpush1.msra.mxu0 %v4122
    %4328 = vmatprep.subr.mxu0 0.0
    %4329 = vmatpush1.msra.mxu0 %v4123
    %4330 = vmatprep.subr.mxu0 0.0
    %4331 = vmatpush1.msra.mxu0 %v4124
    %4332 = vmatprep.subr.mxu0 0.0
    %4333 = vmatpush1.msra.mxu0 %v4125
    %4334 = vmatprep.subr.mxu0 0.0
    %4335 = vmatpush1.msra.mxu0 %v4126
    %4336 = vmatprep.subr.mxu0 0.0
    %4337 = vmatpush1.msra.mxu0 %v4127
    %4338 = vmatprep.subr.mxu0 0.0
    %4339 = vmatpush1.msra.mxu0 %v4128
    %4340 = vmatprep.subr.mxu0 0.0
    %4341 = vmatpush1.msra.mxu0 %v4129
    %4342 = vmatprep.subr.mxu0 0.0
    %4343 = vmatpush1.msra.mxu0 %v4130
    %4344 = vmatprep.subr.mxu0 0.0
    %4345 = vmatpush1.msra.mxu0 %v4131
    %4346 = vmatprep.subr.mxu0 0.0
    %4347 = vmatpush1.msra.mxu0 %v4132
    %4348 = vmatprep.subr.mxu0 0.0
    %4349 = vmatpush1.msra.mxu0 %v4133
    %4350 = vmatprep.subr.mxu0 0.0
    %4351 = vmatpush1.msra.mxu0 %v4134
    %4352 = vmatprep.subr.mxu0 0.0
    %4353 = vmatpush1.msra.mxu0 %v4135
    %4354 = vmatprep.subr.mxu0 0.0
    %4355 = vmatpush1.msra.mxu0 %v4136
    %4356 = vmatprep.subr.mxu0 0.0
    %4357 = vmatpush1.msra.mxu0 %v4137
    %4358 = vmatprep.subr.mxu0 0.0
    %4359 = vmatpush1.msra.mxu0 %v4138
    %4360 = vmatprep.subr.mxu0 0.0
    %4361 = vmatpush1.msra.mxu0 %v4139
    %4362 = vmatprep.subr.mxu0 0.0
    %4363 = vmatpush1.msra.mxu0 %v4140
    %4364 = vmatprep.subr.mxu0 0.0
    %4365 = vmatpush1.msra.mxu0 %v4141
    %4366 = vmatprep.subr.mxu0 0.0
    %4367 = vmatpush1.msra.mxu0 %v4142
    %4368 = vmatprep.mubr.f32.mxu0 %v4205
    %4369 = vmatmul.mubr.f32.gmra.mrb[0].mxu0 %v4204
    %v4370 = vpop.f32.mrb[0].mxu0
    %v4371 = vadd.f32 %v4296, %v4370
    %v4372 = vpop.f32.mrb[0].mxu0
    %4373 = vmatprep.mubr.f32.mxu0 %v4213
    %4374 = vmatmul.mubr.f32.gmra.mrb[0].mxu0 %v4212
    %v4375 = vpop.f32.mrb[0].mxu0
    %v4376 = vadd.f32 %v4301, %v4375
    %v4377 = vpop.f32.mrb[0].mxu0
    %4378 = vdwg.mxu0
    %4379 = vmatprep.subr.mxu0 0.0
    %4380 = vmatpush1.msra.mxu0 %v4143
    %4381 = vmatprep.subr.mxu0 0.0
    %4382 = vmatpush1.msra.mxu0 %v4144
    %4383 = vmatprep.subr.mxu0 0.0
    %4384 = vmatpush1.msra.mxu0 %v4145
    %4385 = vmatprep.subr.mxu0 0.0
    %4386 = vmatpush1.msra.mxu0 %v4146
    %4387 = vmatprep.subr.mxu0 0.0
    %4388 = vmatpush1.msra.mxu0 %v4147
    %4389 = vmatprep.subr.mxu0 0.0
    %4390 = vmatpush1.msra.mxu0 %v4148
    %4391 = vmatprep.subr.mxu0 0.0
    %4392 = vmatpush1.msra.mxu0 %v4149
    %4393 = vmatprep.subr.mxu0 0.0
    %4394 = vmatpush1.msra.mxu0 %v4150
    %4395 = vmatprep.subr.mxu0 0.0
    %4396 = vmatpush1.msra.mxu0 %v4151
    %4397 = vmatprep.subr.mxu0 0.0
    %4398 = vmatpush1.msra.mxu0 %v4152
    %4399 = vmatprep.subr.mxu0 0.0
    %4400 = vmatpush1.msra.mxu0 %v4153
    %4401 = vmatprep.subr.mxu0 0.0
    %4402 = vmatpush1.msra.mxu0 %v4154
    %4403 = vmatprep.subr.mxu0 0.0
    %4404 = vmatpush1.msra.mxu0 %v4155
    %4405 = vmatprep.subr.mxu0 0.0
    %4406 = vmatpush1.msra.mxu0 %v4156
    %4407 = vmatprep.subr.mxu0 0.0
    %4408 = vmatpush1.msra.mxu0 %v4157
    %4409 = vmatprep.subr.mxu0 0.0
    %4410 = vmatpush1.msra.mxu0 %v4158
    %4411 = vmatprep.subr.mxu0 0.0
    %4412 = vmatpush1.msra.mxu0 %v4159
    %4413 = vmatprep.subr.mxu0 0.0
    %4414 = vmatpush1.msra.mxu0 %v4160
    %4415 = vmatprep.subr.mxu0 0.0
    %4416 = vmatpush1.msra.mxu0 %v4161
    %4417 = vmatprep.subr.mxu0 0.0
    %4418 = vmatpush1.msra.mxu0 %v4162
    %4419 = vmatprep.subr.mxu0 0.0
    %4420 = vmatpush1.msra.mxu0 %v4163
    %4421 = vmatprep.subr.mxu0 0.0
    %4422 = vmatpush1.msra.mxu0 %v4164
    %4423 = vmatprep.subr.mxu0 0.0
    %4424 = vmatpush1.msra.mxu0 %v4165
    %4425 = vmatprep.subr.mxu0 0.0
    %4426 = vmatpush1.msra.mxu0 %v4166
    %4427 = vmatprep.subr.mxu0 0.0
    %4428 = vmatpush1.msra.mxu0 %v4167
    %4429 = vmatprep.subr.mxu0 0.0
    %4430 = vmatpush1.msra.mxu0 %v4168
    %4431 = vmatprep.subr.mxu0 0.0
    %4432 = vmatpush1.msra.mxu0 %v4169
    %4433 = vmatprep.subr.mxu0 0.0
    %4434 = vmatpush1.msra.mxu0 %v4170
    %4435 = vmatprep.subr.mxu0 0.0
    %4436 = vmatpush1.msra.mxu0 %v4171
    %4437 = vmatprep.subr.mxu0 0.0
    %4438 = vmatpush1.msra.mxu0 %v4172
    %4439 = vmatprep.subr.mxu0 0.0
    %4440 = vmatpush1.msra.mxu0 %v4173
    %4441 = vmatprep.subr.mxu0 0.0
    %4442 = vmatpush1.msra.mxu0 %v4174
    %4443 = vmatprep.mubr.f32.mxu0 %v4207
    %4444 = vmatmul.mubr.f32.gmra.mrb[0].mxu0 %v4206
    %v4445 = vpop.f32.mrb[0].mxu0
    %v4446 = vadd.f32 %v4371, %v4445
    %v4447 = vpop.f32.mrb[0].mxu0
    %4448 = vmatprep.mubr.f32.mxu0 %v4215
    %4449 = vmatmul.mubr.f32.gmra.mrb[0].mxu0 %v4214
    %v4450 = vpop.f32.mrb[0].mxu0
    %v4451 = vadd.f32 %v4376, %v4450
    %v4452 = vpop.f32.mrb[0].mxu0
    %4453 = vdwg.mxu0
    %4454 = vmatprep.subr.mxu0 0.0
    %4455 = vmatpush1.msra.mxu0 %v4175
    %4456 = vmatprep.subr.mxu0 0.0
    %4457 = vmatpush1.msra.mxu0 %v4176
    %4458 = vmatprep.subr.mxu0 0.0
    %4459 = vmatpush1.msra.mxu0 %v4177
    %4460 = vmatprep.subr.mxu0 0.0
    %4461 = vmatpush1.msra.mxu0 %v4178
    %4462 = vmatprep.subr.mxu0 0.0
    %4463 = vmatpush1.msra.mxu0 %v4179
    %4464 = vmatprep.subr.mxu0 0.0
    %4465 = vmatpush1.msra.mxu0 %v4180
    %4466 = vmatprep.subr.mxu0 0.0
    %4467 = vmatpush1.msra.mxu0 %v4181
    %4468 = vmatprep.subr.mxu0 0.0
    %4469 = vmatpush1.msra.mxu0 %v4182
    %4470 = vmatprep.subr.mxu0 0.0
    %4471 = vmatpush1.msra.mxu0 %v4183
    %4472 = vmatprep.subr.mxu0 0.0
    %4473 = vmatpush1.msra.mxu0 %v4184
    %4474 = vmatprep.subr.mxu0 0.0
    %4475 = vmatpush1.msra.mxu0 %v4185
    %4476 = vmatprep.subr.mxu0 0.0
    %4477 = vmatpush1.msra.mxu0 %v4186
    %4478 = vmatprep.subr.mxu0 0.0
    %4479 = vmatpush1.msra.mxu0 %v4187
    %4480 = vmatprep.subr.mxu0 0.0
    %4481 = vmatpush1.msra.mxu0 %v4188
    %4482 = vmatprep.subr.mxu0 0.0
    %4483 = vmatpush1.msra.mxu0 %v4189
    %4484 = vmatprep.subr.mxu0 0.0
    %4485 = vmatpush1.msra.mxu0 %v4190
    %4486 = vmatprep.subr.mxu0 0.0
    %4487 = vmatpush1.msra.mxu0 %v4191
    %4488 = vmatprep.subr.mxu0 0.0
    %4489 = vmatpush1.msra.mxu0 %v4192
    %4490 = vmatprep.subr.mxu0 0.0
    %4491 = vmatpush1.msra.mxu0 %v4193
    %4492 = vmatprep.subr.mxu0 0.0
    %4493 = vmatpush1.msra.mxu0 %v4194
    %4494 = vmatprep.subr.mxu0 0.0
    %4495 = vmatpush1.msra.mxu0 %v4195
    %4496 = vmatprep.subr.mxu0 0.0
    %4497 = vmatpush1.msra.mxu0 %v4196
    %4498 = vmatprep.subr.mxu0 0.0
    %4499 = vmatpush1.msra.mxu0 %v4197
    %4500 = vmatprep.subr.mxu0 0.0
    %4501 = vmatpush1.msra.mxu0 %v4198
    %4502 = vmatprep.subr.mxu0 0.0
    %4503 = vmatpush1.msra.mxu0 %v4199
    %4504 = vmatprep.subr.mxu0 0.0
    %4505 = vmatpush1.msra.mxu0 %v4200
    %4506 = vmatprep.subr.mxu0 0.0
    %4507 = vmatpush1.msra.mxu0 %v4227
    %4508 = vmatprep.subr.mxu0 0.0
    %4509 = vmatpush1.msra.mxu0 0.0
    %4510 = vmatprep.subr.mxu0 0.0
    %4511 = vmatpush1.msra.mxu0 0.0
    %4512 = vmatprep.subr.mxu0 0.0
    %4513 = vmatpush1.msra.mxu0 0.0
    %4514 = vmatprep.subr.mxu0 0.0
    %4515 = vmatpush1.msra.mxu0 0.0
    %4516 = vmatprep.subr.mxu0 0.0
    %4517 = vmatpush1.msra.mxu0 0.0
    %4518 = vmatprep.mubr.f32.mxu0 %v4220
    %4519 = vmatmul.mubr.f32.gmra.mrb[0].mxu0 %v4208
    %v4520 = vpop.f32.mrb[0].mxu0
    %v4521 = vadd.f32 %v4446, %v4520
    %v4522 = vpop.f32.mrb[0].mxu0
    %4523 = vmatprep.mubr.f32.mxu0 %v4223
    %4524 = vmatmul.mubr.f32.gmra.mrb[0].mxu0 %v4216
    %v4525 = vpop.f32.mrb[0].mxu0
    %v4526 = vadd.f32 %v4451, %v4525
    %v4527 = vpop.f32.mrb[0].mxu0
    %4528 = vdwg.mxu0
    %v4529 = vld [vmem:[%s3] sm:$0xff]
    %v4530 = vld [vmem:[%s3 + $0x8] sm:$0xff]
    %v4531 = vld [vmem:[%s3 + $0x10] sm:$0xff]
    %v4532 = vld [vmem:[%s3 + $0x18] sm:$0xff]
    %v4533 = vld [vmem:[%s3 + $0x20] sm:$0xff]
    %v4534 = vld [vmem:[%s3 + $0x28] sm:$0xff]
    %v4535 = vld [vmem:[%s3 + $0x30] sm:$0xff]
    %v4536 = vld [vmem:[%s3 + $0x38] sm:$0xf]
    %vm4537 = vcmask 80896
    %v4539 = vsel %vm4537, %v4529, 0
    %v4542 = vsel %vm4537, %v4530, 0
    %v4545 = vsel %vm4537, %v4531, 0
    %v4548 = vsel %vm4537, %v4532, 0
    %v4551 = vsel %vm4537, %v4533, 0
    %v4554 = vsel %vm4537, %v4534, 0
    %v4557 = vsel %vm4537, %v4535, 0
    %v4560 = vsel %vm4537, %v4536, 0
    %vm4562 = vcmask 1041408
    %v4564 = vsel %vm4562, %v4526, 0
    %4566 = vmatprep.subr.mxu0 0.0
    %4567 = vmatpush1.msra.mxu0 %v4521
    %4568 = vmatprep.subr.mxu0 0.0
    %4569 = vmatpush1.msra.mxu0 %v4564
    %4570 = vmatprep.subr.mxu0 0.0
    %4571 = vmatpush1.msra.mxu0 0.0
    %4572 = vmatprep.subr.mxu0 0.0
    %4573 = vmatpush1.msra.mxu0 0.0
    %4574 = vmatprep.subr.mxu0 0.0
    %4575 = vmatpush1.msra.mxu0 0.0
    %4576 = vmatprep.subr.mxu0 0.0
    %4577 = vmatpush1.msra.mxu0 0.0
    %4578 = vmatprep.subr.mxu0 0.0
    %4579 = vmatpush1.msra.mxu0 0.0
    %4580 = vmatprep.subr.mxu0 0.0
    %4581 = vmatpush1.msra.mxu0 0.0
    %4582 = vmatprep.subr.mxu0 0.0
    %4583 = vmatpush1.msra.mxu0 0.0
    %4584 = vmatprep.subr.mxu0 0.0
    %4585 = vmatpush1.msra.mxu0 0.0
    %4586 = vmatprep.subr.mxu0 0.0
    %4587 = vmatpush1.msra.mxu0 0.0
    %4588 = vmatprep.subr.mxu0 0.0
    %4589 = vmatpush1.msra.mxu0 0.0
    %4590 = vmatprep.subr.mxu0 0.0
    %4591 = vmatpush1.msra.mxu0 0.0
    %4592 = vmatprep.subr.mxu0 0.0
    %4593 = vmatpush1.msra.mxu0 0.0
    %4594 = vmatprep.subr.mxu0 0.0
    %4595 = vmatpush1.msra.mxu0 0.0
    %4596 = vmatprep.subr.mxu0 0.0
    %4597 = vmatpush1.msra.mxu0 0.0
    %4598 = vmatprep.subr.mxu0 0.0
    %4599 = vmatpush1.msra.mxu0 0.0
    %4600 = vmatprep.subr.mxu0 0.0
    %4601 = vmatpush1.msra.mxu0 0.0
    %4602 = vmatprep.subr.mxu0 0.0
    %4603 = vmatpush1.msra.mxu0 0.0
    %4604 = vmatprep.subr.mxu0 0.0
    %4605 = vmatpush1.msra.mxu0 0.0
    %4606 = vmatprep.subr.mxu0 0.0
    %4607 = vmatpush1.msra.mxu0 0.0
    %4608 = vmatprep.subr.mxu0 0.0
    %4609 = vmatpush1.msra.mxu0 0.0
    %4610 = vmatprep.subr.mxu0 0.0
    %4611 = vmatpush1.msra.mxu0 0.0
    %4612 = vmatprep.subr.mxu0 0.0
    %4613 = vmatpush1.msra.mxu0 0.0
    %4614 = vmatprep.subr.mxu0 0.0
    %4615 = vmatpush1.msra.mxu0 0.0
    %4616 = vmatprep.subr.mxu0 0.0
    %4617 = vmatpush1.msra.mxu0 0.0
    %4618 = vmatprep.subr.mxu0 0.0
    %4619 = vmatpush1.msra.mxu0 0.0
    %4620 = vmatprep.subr.mxu0 0.0
    %4621 = vmatpush1.msra.mxu0 0.0
    %4622 = vmatprep.subr.mxu0 0.0
    %4623 = vmatpush1.msra.mxu0 0.0
    %4624 = vmatprep.subr.mxu0 0.0
    %4625 = vmatpush1.msra.mxu0 0.0
    %4626 = vmatprep.subr.mxu0 0.0
    %4627 = vmatpush1.msra.mxu0 0.0
    %4628 = vmatprep.subr.mxu0 0.0
    %4629 = vmatpush1.msra.mxu0 0.0
    %4630 = vmatprep.mubr.f32.mxu0 0.0
    %4631 = vmatmul.mubr.f32.gmra.mrb[0].mxu0 %v4539
    %v4632 = vpop.f32.mrb[0].mxu0
    %v4633 = vadd.f32 0.0, %v4632
    %v4634 = vpop.f32.mrb[0].mxu0
    %4635 = vmatprep.mubr.f32.mxu0 0.0
    %4636 = vmatmul.mubr.f32.gmra.mrb[0].mxu0 %v4542
    %v4637 = vpop.f32.mrb[0].mxu0
    %v4638 = vadd.f32 0.0, %v4637
    %v4639 = vpop.f32.mrb[0].mxu0
    %4640 = vmatprep.mubr.f32.mxu0 0.0
    %4641 = vmatmul.mubr.f32.gmra.mrb[0].mxu0 %v4545
    %v4642 = vpop.f32.mrb[0].mxu0
    %v4643 = vadd.f32 0.0, %v4642
    %v4644 = vpop.f32.mrb[0].mxu0
    %4645 = vmatprep.mubr.f32.mxu0 0.0
    %4646 = vmatmul.mubr.f32.gmra.mrb[0].mxu0 %v4548
    %v4647 = vpop.f32.mrb[0].mxu0
    %v4648 = vadd.f32 0.0, %v4647
    %v4649 = vpop.f32.mrb[0].mxu0
    %4650 = vmatprep.mubr.f32.mxu0 0.0
    %4651 = vmatmul.mubr.f32.gmra.mrb[0].mxu0 %v4551
    %v4652 = vpop.f32.mrb[0].mxu0
    %v4653 = vadd.f32 0.0, %v4652
    %v4654 = vpop.f32.mrb[0].mxu0
    %4655 = vmatprep.mubr.f32.mxu0 0.0
    %4656 = vmatmul.mubr.f32.gmra.mrb[0].mxu0 %v4554
    %v4657 = vpop.f32.mrb[0].mxu0
    %v4658 = vadd.f32 0.0, %v4657
    %v4659 = vpop.f32.mrb[0].mxu0
    %4660 = vmatprep.mubr.f32.mxu0 0.0
    %4661 = vmatmul.mubr.f32.gmra.mrb[0].mxu0 %v4557
    %v4662 = vpop.f32.mrb[0].mxu0
    %v4663 = vadd.f32 0.0, %v4662
    %v4664 = vpop.f32.mrb[0].mxu0
    %4665 = vmatprep.mubr.f32.mxu0 0.0
    %4666 = vmatmul.mubr.f32.gmra.mrb[0].mxu0 %v4560
    %v4667 = vpop.f32.mrb[0].mxu0
    %v4668 = vadd.f32 0.0, %v4667
    %v4669 = vpop.f32.mrb[0].mxu0
    %4670 = vdwg.mxu0
    %v4671 = vtanh.pop %v4633
    %v4672 = vtanh.pop %v4638
    %v4673 = vtanh.pop %v4643
    %v4674 = vtanh.pop %v4648
    %v4675 = vtanh.pop %v4653
    %v4676 = vtanh.pop %v4658
    %v4677 = vtanh.pop %v4663
    %v4678 = vtanh.pop %v4668
    %v4679 = vld [vmem:[%s4] sm:$0xff]
    %v4680 = vld [vmem:[%s4 + $0x8] sm:$0xff]
    %v4681 = vld [vmem:[%s4 + $0x10] sm:$0xff]
    %v4682 = vld [vmem:[%s4 + $0x18] sm:$0xff]
    %v4683 = vld [vmem:[%s4 + $0x20] sm:$0xff]
    %v4684 = vld [vmem:[%s4 + $0x28] sm:$0x1]
    %v4685 = vld [vmem:[%s5] sm:$0xff]
    %v4686 = vld [vmem:[%s5 + $0x8] sm:$0xff]
    %v4687 = vld [vmem:[%s5 + $0x10] sm:$0xff]
    %v4688 = vld [vmem:[%s5 + $0x18] sm:$0xff]
    %v4689 = vld [vmem:[%s5 + $0x20] sm:$0xff]
    %v4690 = vld [vmem:[%s5 + $0x28] sm:$0x1]
    %4692 = vset.pattern.permute.xlu0 0
    %4693 = vperm.xlu0 %4692, %v4685
    %v4694 = vpop.permute.xlu0 %4693
    %4697 = vset.pattern.permute.xlu0 0
    %4698 = vperm.xlu0 %4697, %v4686
    %v4699 = vpop.permute.xlu0 %4698
    %4702 = vset.pattern.permute.xlu0 0
    %4703 = vperm.xlu0 %4702, %v4687
    %v4704 = vpop.permute.xlu0 %4703
    %4707 = vset.pattern.permute.xlu0 0
    %4708 = vperm.xlu0 %4707, %v4688
    %v4709 = vpop.permute.xlu0 %4708
    %4712 = vset.pattern.permute.xlu0 0
    %4713 = vperm.xlu0 %4712, %v4689
    %v4714 = vpop.permute.xlu0 %4713
    %4717 = vset.pattern.permute.xlu0 0
    %4718 = vperm.xlu0 %4717, %v4690
    %v4719 = vpop.permute.xlu0 %4718
    %vm4721 = vcmask 490496
    %v4723 = vsel %vm4721, %v4679, 0
    %v4726 = vsel %vm4721, %v4680, 0
    %v4729 = vsel %vm4721, %v4681, 0
    %v4732 = vsel %vm4721, %v4682, 0
    %v4735 = vsel %vm4721, %v4683, 0
    %v4738 = vsel %vm4721, %v4684, 0
    %v4741 = vsel %vm4225, %v4678, 0
    %4743 = vmatprep.subr.mxu0 0.0
    %4744 = vmatpush1.msra.mxu0 %v4671
    %4745 = vmatprep.subr.mxu0 0.0
    %4746 = vmatpush1.msra.mxu0 %v4672
    %4747 = vmatprep.subr.mxu0 0.0
    %4748 = vmatpush1.msra.mxu0 %v4673
    %4749 = vmatprep.subr.mxu0 0.0
    %4750 = vmatpush1.msra.mxu0 %v4674
    %4751 = vmatprep.subr.mxu0 0.0
    %4752 = vmatpush1.msra.mxu0 %v4675
    %4753 = vmatprep.subr.mxu0 0.0
    %4754 = vmatpush1.msra.mxu0 %v4676
    %4755 = vmatprep.subr.mxu0 0.0
    %4756 = vmatpush1.msra.mxu0 %v4677
    %4757 = vmatprep.subr.mxu0 0.0
    %4758 = vmatpush1.msra.mxu0 %v4741
    %4759 = vmatprep.subr.mxu0 0.0
    %4760 = vmatpush1.msra.mxu0 0.0
    %4761 = vmatprep.subr.mxu0 0.0
    %4762 = vmatpush1.msra.mxu0 0.0
    %4763 = vmatprep.subr.mxu0 0.0
    %4764 = vmatpush1.msra.mxu0 0.0
    %4765 = vmatprep.subr.mxu0 0.0
    %4766 = vmatpush1.msra.mxu0 0.0
    %4767 = vmatprep.subr.mxu0 0.0
    %4768 = vmatpush1.msra.mxu0 0.0
    %4769 = vmatprep.subr.mxu0 0.0
    %4770 = vmatpush1.msra.mxu0 0.0
    %4771 = vmatprep.subr.mxu0 0.0
    %4772 = vmatpush1.msra.mxu0 0.0
    %4773 = vmatprep.subr.mxu0 0.0
    %4774 = vmatpush1.msra.mxu0 0.0
    %4775 = vmatprep.subr.mxu0 0.0
    %4776 = vmatpush1.msra.mxu0 0.0
    %4777 = vmatprep.subr.mxu0 0.0
    %4778 = vmatpush1.msra.mxu0 0.0
    %4779 = vmatprep.subr.mxu0 0.0
    %4780 = vmatpush1.msra.mxu0 0.0
    %4781 = vmatprep.subr.mxu0 0.0
    %4782 = vmatpush1.msra.mxu0 0.0
    %4783 = vmatprep.subr.mxu0 0.0
    %4784 = vmatpush1.msra.mxu0 0.0
    %4785 = vmatprep.subr.mxu0 0.0
    %4786 = vmatpush1.msra.mxu0 0.0
    %4787 = vmatprep.subr.mxu0 0.0
    %4788 = vmatpush1.msra.mxu0 0.0
    %4789 = vmatprep.subr.mxu0 0.0
    %4790 = vmatpush1.msra.mxu0 0.0
    %4791 = vmatprep.subr.mxu0 0.0
    %4792 = vmatpush1.msra.mxu0 0.0
    %4793 = vmatprep.subr.mxu0 0.0
    %4794 = vmatpush1.msra.mxu0 0.0
    %4795 = vmatprep.subr.mxu0 0.0
    %4796 = vmatpush1.msra.mxu0 0.0
    %4797 = vmatprep.subr.mxu0 0.0
    %4798 = vmatpush1.msra.mxu0 0.0
    %4799 = vmatprep.subr.mxu0 0.0
    %4800 = vmatpush1.msra.mxu0 0.0
    %4801 = vmatprep.subr.mxu0 0.0
    %4802 = vmatpush1.msra.mxu0 0.0
    %4803 = vmatprep.subr.mxu0 0.0
    %4804 = vmatpush1.msra.mxu0 0.0
    %4805 = vmatprep.subr.mxu0 0.0
    %4806 = vmatpush1.msra.mxu0 0.0
    %4807 = vmatprep.mubr.f32.mxu0 0.0
    %4808 = vmatmul.mubr.f32.gmra.mrb[0].mxu0 %v4723
    %v4809 = vpop.f32.mrb[0].mxu0
    %v4810 = vadd.f32 %v4694, %v4809
    %v4811 = vpop.f32.mrb[0].mxu0
    %4812 = vmatprep.mubr.f32.mxu0 0.0
    %4813 = vmatmul.mubr.f32.gmra.mrb[0].mxu0 %v4726
    %v4814 = vpop.f32.mrb[0].mxu0
    %v4815 = vadd.f32 %v4699, %v4814
    %v4816 = vpop.f32.mrb[0].mxu0
    %4817 = vmatprep.mubr.f32.mxu0 0.0
    %4818 = vmatmul.mubr.f32.gmra.mrb[0].mxu0 %v4729
    %v4819 = vpop.f32.mrb[0].mxu0
    %v4820 = vadd.f32 %v4704, %v4819
    %v4821 = vpop.f32.mrb[0].mxu0
    %4822 = vmatprep.mubr.f32.mxu0 0.0
    %4823 = vmatmul.mubr.f32.gmra.mrb[0].mxu0 %v4732
    %v4824 = vpop.f32.mrb[0].mxu0
    %v4825 = vadd.f32 %v4709, %v4824
    %v4826 = vpop.f32.mrb[0].mxu0
    %4827 = vmatprep.mubr.f32.mxu0 0.0
    %4828 = vmatmul.mubr.f32.gmra.mrb[0].mxu0 %v4735
    %v4829 = vpop.f32.mrb[0].mxu0
    %v4830 = vadd.f32 %v4714, %v4829
    %v4831 = vpop.f32.mrb[0].mxu0
    %4832 = vmatprep.mubr.f32.mxu0 0.0
    %4833 = vmatmul.mubr.f32.gmra.mrb[0].mxu0 %v4738
    %v4834 = vpop.f32.mrb[0].mxu0
    %v4835 = vadd.f32 %v4719, %v4834
    %v4836 = vpop.f32.mrb[0].mxu0
    %4837 = vdwg.mxu0
    %v4838 = vtanh.pop %v4810
    %v4839 = vtanh.pop %v4815
    %v4840 = vtanh.pop %v4820
    %v4841 = vtanh.pop %v4825
    %v4842 = vtanh.pop %v4830
    %v4843 = vtanh.pop %v4835
    %v4844 = vld [vmem:[%s6] sm:$0xff]
    %v4845 = vld [vmem:[%s6 + $0x8] sm:$0x3]
    %v4846 = vld [vmem:[%s7] sm:$0xff]
    %v4847 = vld [vmem:[%s7 + $0x8] sm:$0x3]
    %4849 = vset.pattern.permute.xlu0 0
    %4850 = vperm.xlu0 %4849, %v4846
    %v4851 = vpop.permute.xlu0 %4850
    %4854 = vset.pattern.permute.xlu0 0
    %4855 = vperm.xlu0 %4854, %v4847
    %v4856 = vpop.permute.xlu0 %4855
    %vm4858 = vcmask 334848
    %v4860 = vsel %vm4858, %v4844, 0
    %v4863 = vsel %vm4858, %v4845, 0
    %vm4865 = vcmask 1040384
    %v4867 = vsel %vm4865, %v4843, 0
    %4869 = vmatprep.subr.mxu0 0.0
    %4870 = vmatpush1.msra.mxu0 %v4838
    %4871 = vmatprep.subr.mxu0 0.0
    %4872 = vmatpush1.msra.mxu0 %v4839
    %4873 = vmatprep.subr.mxu0 0.0
    %4874 = vmatpush1.msra.mxu0 %v4840
    %4875 = vmatprep.subr.mxu0 0.0
    %4876 = vmatpush1.msra.mxu0 %v4841
    %4877 = vmatprep.subr.mxu0 0.0
    %4878 = vmatpush1.msra.mxu0 %v4842
    %4879 = vmatprep.subr.mxu0 0.0
    %4880 = vmatpush1.msra.mxu0 %v4867
    %4881 = vmatprep.subr.mxu0 0.0
    %4882 = vmatpush1.msra.mxu0 0.0
    %4883 = vmatprep.subr.mxu0 0.0
    %4884 = vmatpush1.msra.mxu0 0.0
    %4885 = vmatprep.subr.mxu0 0.0
    %4886 = vmatpush1.msra.mxu0 0.0
    %4887 = vmatprep.subr.mxu0 0.0
    %4888 = vmatpush1.msra.mxu0 0.0
    %4889 = vmatprep.subr.mxu0 0.0
    %4890 = vmatpush1.msra.mxu0 0.0
    %4891 = vmatprep.subr.mxu0 0.0
    %4892 = vmatpush1.msra.mxu0 0.0
    %4893 = vmatprep.subr.mxu0 0.0
    %4894 = vmatpush1.msra.mxu0 0.0
    %4895 = vmatprep.subr.mxu0 0.0
    %4896 = vmatpush1.msra.mxu0 0.0
    %4897 = vmatprep.subr.mxu0 0.0
    %4898 = vmatpush1.msra.mxu0 0.0
    %4899 = vmatprep.subr.mxu0 0.0
    %4900 = vmatpush1.msra.mxu0 0.0
    %4901 = vmatprep.subr.mxu0 0.0
    %4902 = vmatpush1.msra.mxu0 0.0
    %4903 = vmatprep.subr.mxu0 0.0
    %4904 = vmatpush1.msra.mxu0 0.0
    %4905 = vmatprep.subr.mxu0 0.0
    %4906 = vmatpush1.msra.mxu0 0.0
    %4907 = vmatprep.subr.mxu0 0.0
    %4908 = vmatpush1.msra.mxu0 0.0
    %4909 = vmatprep.subr.mxu0 0.0
    %4910 = vmatpush1.msra.mxu0 0.0
    %4911 = vmatprep.subr.mxu0 0.0
    %4912 = vmatpush1.msra.mxu0 0.0
    %4913 = vmatprep.subr.mxu0 0.0
    %4914 = vmatpush1.msra.mxu0 0.0
    %4915 = vmatprep.subr.mxu0 0.0
    %4916 = vmatpush1.msra.mxu0 0.0
    %4917 = vmatprep.subr.mxu0 0.0
    %4918 = vmatpush1.msra.mxu0 0.0
    %4919 = vmatprep.subr.mxu0 0.0
    %4920 = vmatpush1.msra.mxu0 0.0
    %4921 = vmatprep.subr.mxu0 0.0
    %4922 = vmatpush1.msra.mxu0 0.0
    %4923 = vmatprep.subr.mxu0 0.0
    %4924 = vmatpush1.msra.mxu0 0.0
    %4925 = vmatprep.subr.mxu0 0.0
    %4926 = vmatpush1.msra.mxu0 0.0
    %4927 = vmatprep.subr.mxu0 0.0
    %4928 = vmatpush1.msra.mxu0 0.0
    %4929 = vmatprep.subr.mxu0 0.0
    %4930 = vmatpush1.msra.mxu0 0.0
    %4931 = vmatprep.subr.mxu0 0.0
    %4932 = vmatpush1.msra.mxu0 0.0
    %4933 = vmatprep.mubr.f32.mxu0 0.0
    %4934 = vmatmul.mubr.f32.gmra.mrb[0].mxu0 %v4860
    %v4935 = vpop.f32.mrb[0].mxu0
    %v4936 = vadd.f32 %v4851, %v4935
    %v4937 = vpop.f32.mrb[0].mxu0
    %4938 = vmatprep.mubr.f32.mxu0 0.0
    %4939 = vmatmul.mubr.f32.gmra.mrb[0].mxu0 %v4863
    %v4940 = vpop.f32.mrb[0].mxu0
    %v4941 = vadd.f32 %v4856, %v4940
    %v4942 = vpop.f32.mrb[0].mxu0
    %4943 = vdwg.mxu0
    %v4944 = vsel %vm4562, %v4941, -inf
    %v4945 = vmax.f32 %v4936, %v4944
    %v4946 = vrot.slane %v4945, 4
    %v4947 = vmax.f32 %v4945, %v4946
    %v4948 = vrot.slane %v4947, 2
    %v4949 = vmax.f32 %v4947, %v4948
    %v4950 = vrot.slane %v4949, 1
    %v4951 = vmax.f32 %v4949, %v4950
    %v4952 = vsub.f32 %v4936, %v4951
    %v4953 = vsub.f32 %v4941, %v4951
    %v4954 = vmul.f32 %v4952, 1.442695
    %v4955 = vpow.pop %v4954
    %v4956 = vmul.f32 %v4953, 1.442695
    %v4957 = vpow.pop %v4956
    %v4958 = vsel %vm4562, %v4957, 0.0
    %v4959 = vadd.f32 %v4955, %v4958
    %v4960 = vrot.slane %v4959, 4
    %v4961 = vadd.f32 %v4959, %v4960
    %v4962 = vrot.slane %v4961, 2
    %v4963 = vadd.f32 %v4961, %v4962
    %v4964 = vrot.slane %v4963, 1
    %v4965 = vadd.f32 %v4963, %v4964
    %v4966 = vlog2.pop %v4965
    %v4967 = vmul.f32 %v4966, 0.6931472
    %v4968 = vsub.f32 %v4952, %v4967
    %v4969 = vsub.f32 %v4953, %v4967
    %4970 = vst [vmem:[#allocation2] sm:$0xff] %v4968
    %4971 = vst [vmem:[#allocation2 + $0x8] sm:$0x3] %v4969
    // Predicated region
    $region34: #{tpu_custom_call.1} parent=1 // pred_check
      _
    $region35: #{tpu_custom_call.1} parent=1 // pred_check_branch
      %4973 = sbr.rel (0) target = $region37
    $region36: #{tpu_custom_call.1} parent=1 // pred_region
      %s4975 = ssub.s32 256, 256
      %4976 = vsyncadd [#allocation3], %s4975
      %s4977 = sshll.u32 [#allocation2], 4
      %s4978 = int_to_ptr.vmem [resolvable:$true] %s4977
      %4983 = dma.vmem_to_hbm [thread:$0]  %s4978, 256, %s8, [#allocation3], 128, 128, 8
    $region37: #{tpu_custom_call.1} parent=1 // pred_fallthru
      _
    // Predicated region
    $region38: #{tpu_custom_call.1} parent=1 // pred_check
      _
    $region39: #{tpu_custom_call.1} parent=1 // pred_check_branch
      %4985 = sbr.rel (0) target = $region41
    $region40: #{tpu_custom_call.1} parent=1 // pred_region
      %4986 = dma.done [#allocation3], 256
    $region41: #{tpu_custom_call.1} parent=1 // pred_fallthru
      _
    %4987 = vsyncpa [#allocation3], 1

</llo_original>
